<compile_context>
chip_gen: v7x
topology: tpu7x:2x2x1
jax: 0.10.0
libtpu: 0.0.40
codegen_flags: <defaults>
</compile_context>

<pallas_src>
import functools
import math

import jax
import jax.numpy as jnp
from jax.experimental import pallas as pl
from jax.experimental.pallas import tpu as pltpu

_EPS = 1e-5


def _round_up(x, m):
    return (x + m - 1) // m * m


# ----------------------------- packing (hoisted out of forward) ----------------

def fold_bn(bn):
    scale = bn['gamma'] * jax.lax.rsqrt(bn['var'] + _EPS)
    bias = bn['beta'] - bn['mean'] * scale
    return jnp.stack([scale, bias], axis=0).astype(jnp.float32)      # (2, C)


def grouped_conv_to_blockdiag(w, groups):
    # (Cout=G*cog, cig, 3, 3) -> (9*G*cig, G*cog) block-diagonal; rows tap-major
    # then absolute input channel, cols = absolute output channel.
    cout, cig, kh, kw = w.shape
    G = groups
    cog = cout // G
    w5 = w.reshape(G, cog, cig, kh, kw)                              # (h,o,i,y,x)
    eye = jnp.eye(G, dtype=w.dtype)
    dense = jnp.einsum('gh,hoiyx->yxgiho', eye, w5)                  # (y,x,g,i,h,o)
    return dense.reshape(kh * kw * G * cig, G * cog)


def pack_bottleneck(params, H, W, out_dtype=jnp.bfloat16):
    s = params['stride']
    G = params['num_group']
    C1, Cin = params['conv1_w'].shape[0], params['conv1_w'].shape[1]
    C3 = params['conv3_w'].shape[0]
    has_ds = 'ds_conv_w' in params

    assert s in (1, 2), "only stride 1 or 2 supported"
    assert C1 % 128 == 0 and C3 % 128 == 0 and Cin % 128 == 0, \
        "channel counts must be multiples of 128 (TPU lane width)"
    if s == 1:
        Ho, Wo = H, W
        Hp, Wp = H + 2, W + 2
    else:
        assert H % 2 == 0 and W % 2 == 0, "stride-2 path needs even spatial dims"
        assert has_ds, "stride-2 Bottleneck always carries a downsample projection"
        Ho, Wo = H // 2, W // 2
        Hp, Wp = Ho + 1, Wo + 1
    Hs, Ws = Ho, Wo
    assert Ws % 8 == 0, \
        "post-stride width must be a multiple of 8 (larger/odd sizes need M-tiling)"
    # bf16 needs 16-aligned second-minor dims for clean value reshapes; fall back
    # to f32 staging (8-aligned) otherwise (e.g. the stride-2 parity planes here).
    io_dtype = jnp.bfloat16 if Ws % 16 == 0 else jnp.float32
    if not has_ds:
        assert s == 1 and Cin == C3, "identity residual needs stride=1 and Cin==C3"
    Wp_pad = _round_up(Wp, 16)

    cfg = dict(stride=s, H=H, W=W, Ho=Ho, Wo=Wo, Hs=Hs, Ws=Ws, Hp=Hp, Wp=Wp,
               Wp_pad=Wp_pad, Cin=Cin, C1=C1, C3=C3, has_ds=has_ds,
               io_dtype=io_dtype, out_dtype=out_dtype)

    w1 = jnp.transpose(params['conv1_w'][:, :, 0, 0], (1, 0))        # (Cin, C1)
    if has_ds:
        wd = jnp.transpose(params['ds_conv_w'][:, :, 0, 0], (1, 0))  # (Cin, C3)
        w1 = jnp.concatenate([w1, wd], axis=1)                       # (Cin, C1+C3)
    weights = {
        'w1': w1.astype(jnp.bfloat16),
        'sb1': fold_bn(params['bn1']),
        'w2': grouped_conv_to_blockdiag(params['conv2_w'], G).astype(jnp.bfloat16),
        'sb2': fold_bn(params['bn2']),
        'w3': jnp.transpose(params['conv3_w'][:, :, 0, 0], (1, 0)).astype(jnp.bfloat16),
        'sb3': fold_bn(params['bn3']),
    }
    if has_ds:
        weights['sbd'] = fold_bn(params['ds_bn'])
    return cfg, weights


# ----------------------------- fused Bottleneck kernel -------------------------

def make_bottleneck_kernel(cfg):
    s = cfg['stride']
    Ho, Wo, Hs, Ws = cfg['Ho'], cfg['Wo'], cfg['Hs'], cfg['Ws']
    Hp, Wp, Wpp = cfg['Hp'], cfg['Wp'], cfg['Wp_pad']
    Cin, C1, C3 = cfg['Cin'], cfg['C1'], cfg['C3']
    has_ds = cfg['has_ds']
    io_dtype = cfg['io_dtype']
    nplanes = 1 if s == 1 else 4
    Ms = Hs * Ws                      # rows per parity plane
    M = Ho * Wo                       # output pixels
    f32, bf16 = jnp.float32, jnp.bfloat16

    # conv1-scatter destinations: (plane_row_base, row_off, col_off) per plane p.
    if s == 1:
        plane_dst = [(0, 1, 1)]
    else:
        plane_dst = []
        for p in range(4):
            pa, pb = p // 2, p % 2
            plane_dst.append(((2 * (1 - pa) + (1 - pb)) * Hp, pa, pb))

    # im2col sources: (row_base, col_off) per 3x3 tap t = dy*3+dx.
    tap_src = []
    for dy in range(3):
        for dx in range(3):
            if s == 2:
                q, r0, c0 = (dy % 2) * 2 + (dx % 2), dy // 2, dx // 2
            else:
                q, r0, c0 = 0, dy, dx
            tap_src.append((q * Hp + r0, c0))

    def kernel(*refs):
        if has_ds:
            (x_ref, w1_ref, sb1_ref, w2_ref, sb2_ref, w3_ref, sb3_ref, sbd_ref,
             o_ref, x1p_ref, patch_ref, res_ref) = refs
        else:
            (x_ref, w1_ref, sb1_ref, w2_ref, sb2_ref, w3_ref, sb3_ref,
             o_ref, x1p_ref, patch_ref) = refs
            sbd_ref = res_ref = None

        # ---- zero ONLY the halo border of the padded conv1-output planes ----
        # (interior is fully rewritten below; never gated on program_id so every
        #  grid step / core under core-parallel sharding sees a valid border.)
        zrow = jnp.zeros((1, Wpp, C1), io_dtype)
        zcol = jnp.zeros((nplanes * Hp, 1, C1), io_dtype)
        if s == 1:
            x1p_ref[0:1, :, :] = zrow
            x1p_ref[Hp - 1:Hp, :, :] = zrow
            x1p_ref[:, 0:1, :] = zcol
            x1p_ref[:, Wp - 1:Wp, :] = zcol
        else:
            for q in range(4):
                x1p_ref[q * Hp:q * Hp + 1, :, :] = zrow
            x1p_ref[:, 0:1, :] = zcol

        # ---- conv1 (1x1) [+ fused 1x1 downsample] + BN1 + ReLU: ONE matmul ----
        if s == 1:
            xin = x_ref[...]                                         # (M, Cin)
        else:
            # parity planes sliced from the free (Hs, 2, Ws, 2*Cin) view; plane
            # (0,0) first so the downsample residual rows are y[:M].
            planes = [
                x_ref[:, p // 2, :, (p % 2) * Cin:(p % 2 + 1) * Cin]
                .reshape(Ms, Cin)
                for p in range(4)
            ]
            xin = jnp.concatenate(planes, axis=0)                    # (4*Ms, Cin)
        y = jnp.dot(xin.astype(bf16), w1_ref[...], preferred_element_type=f32)

        if has_ds:  # fused 1x1 downsample projection + folded BN (residual path)
            res_ref[...] = y[0:M, C1:] * sbd_ref[0:1, :] + sbd_ref[1:2, :]

        y1 = jnp.maximum(y[:, 0:C1] * sb1_ref[0:1, :] + sb1_ref[1:2, :], 0.0)
        y1 = y1.astype(io_dtype)

        # ---- scatter conv1 output into padded parity planes: ONE store/plane ----
        for p, (base, ro, co) in enumerate(plane_dst):
            x1p_ref[base + ro:base + ro + Hs, co:co + Ws, :] = (
                y1[p * Ms:(p + 1) * Ms, :].reshape(Hs, Ws, C1))

        # ---- in-VMEM im2col: ONE contiguous copy per 3x3 tap (9 total) ----
        for t, (base, c0) in enumerate(tap_src):
            patch_ref[:, t * C1:(t + 1) * C1] = (
                x1p_ref[base:base + Ho, c0:c0 + Wo, :]
                .reshape(M, C1).astype(bf16))

        # ---- grouped conv2 (3x3) as one block-diagonal matmul + BN2 + ReLU ----
        y2 = jnp.dot(patch_ref[...], w2_ref[...], preferred_element_type=f32)
        y2 = jnp.maximum(y2 * sb2_ref[0:1, :] + sb2_ref[1:2, :], 0.0).astype(bf16)

        # ---- conv3 (1x1) + BN3 + residual add + ReLU ----
        y3 = jnp.dot(y2, w3_ref[...], preferred_element_type=f32)
        y3 = y3 * sb3_ref[0:1, :] + sb3_ref[1:2, :]
        res = res_ref[...] if has_ds else x_ref[...].astype(f32)
        o_ref[...] = jnp.maximum(y3 + res, 0.0).astype(o_ref.dtype)

    return kernel


def bottleneck_forward_nhwc(x_nhwc, weights, cfg):
    """Fused Bottleneck: x (N, H, W, Cin) NHWC -> (N, Ho, Wo, C3) in out_dtype."""
    s = cfg['stride']
    H, W, Ho, Wo = cfg['H'], cfg['W'], cfg['Ho'], cfg['Wo']
    Hs, Ws, Hp, Wpp = cfg['Hs'], cfg['Ws'], cfg['Hp'], cfg['Wp_pad']
    Cin, C1, C3 = cfg['Cin'], cfg['C1'], cfg['C3']
    has_ds = cfg['has_ds']
    io_dtype = cfg['io_dtype']
    N = x_nhwc.shape[0]
    nplanes = 1 if s == 1 else 4
    M = Ho * Wo

    x = x_nhwc.astype(io_dtype)
    if s == 1:
        xs = x.reshape(N, H * W, Cin)
        x_spec = pl.BlockSpec((None, H * W, Cin), lambda n: (n, 0, 0))
    else:
        # free row-major metadata reshape; parity planes are sliced in-kernel.
        xs = x.reshape(N, Hs, 2, Ws, 2 * Cin)
        x_spec = pl.BlockSpec((None, Hs, 2, Ws, 2 * Cin),
                              lambda n: (n, 0, 0, 0, 0))

    def full_spec(a):
        nd = a.ndim
        return pl.BlockSpec(tuple(a.shape), lambda n: (0,) * nd)

    in_specs = [x_spec, full_spec(weights['w1']), full_spec(weights['sb1']),
                full_spec(weights['w2']), full_spec(weights['sb2']),
                full_spec(weights['w3']), full_spec(weights['sb3'])]
    args = [xs, weights['w1'], weights['sb1'], weights['w2'], weights['sb2'],
            weights['w3'], weights['sb3']]
    scratch = [pltpu.VMEM((nplanes * Hp, Wpp, C1), io_dtype),   # padded conv1 planes
               pltpu.VMEM((M, 9 * C1), jnp.bfloat16)]           # im2col patch buffer
    if has_ds:
        in_specs.append(full_spec(weights['sbd']))
        args.append(weights['sbd'])
        scratch.append(pltpu.VMEM((M, C3), jnp.float32))        # downsample residual

    out = pl.pallas_call(
        make_bottleneck_kernel(cfg),
        out_shape=jax.ShapeDtypeStruct((N, M, C3), cfg['out_dtype']),
        grid=(N,),
        in_specs=in_specs,
        out_specs=pl.BlockSpec((None, M, C3), lambda n: (n, 0, 0)),
        scratch_shapes=scratch,
        compiler_params=pltpu.CompilerParams(
            dimension_semantics=("parallel",)),
    )(*args)
    return out.reshape(N, Ho, Wo, C3)


def bottleneck_forward_nchw(x_nchw, weights, cfg):
    # Compatibility wrapper for NCHW callers.  When chaining blocks, call
    # bottleneck_forward_nhwc directly and keep activations NHWC bf16 end-to-end
    # to avoid the two HBM layout passes per block added here.
    x = jnp.transpose(x_nchw, (0, 2, 3, 1))
    out = bottleneck_forward_nhwc(x, weights, cfg)
    return jnp.transpose(out, (0, 3, 1, 2))


def make_bottleneck_fn(params, H, W, out_dtype=jnp.bfloat16):
    cfg, weights = pack_bottleneck(params, H, W, out_dtype=out_dtype)
    fwd = jax.jit(functools.partial(bottleneck_forward_nchw, cfg=cfg))
    return lambda x: fwd(x, weights)


# ----------------------------- init + pure-JAX reference -----------------------

def init_bottleneck(key, inplanes, planes, stride=1, num_group=32):
    C1, C3 = planes * 2, planes * 4
    keys = jax.random.split(key, 8)

    def conv_init(k, cout, cin, kh, kw):
        n = kh * kw * cout
        return jax.random.normal(k, (cout, cin, kh, kw), jnp.float32) * math.sqrt(2.0 / n)

    def bn_init(k, c):
        k1, k2, k3, k4 = jax.random.split(k, 4)
        return {'gamma': 1.0 + 0.1 * jax.random.normal(k1, (c,), jnp.float32),
                'beta': 0.1 * jax.random.normal(k2, (c,), jnp.float32),
                'mean': 0.1 * jax.random.normal(k3, (c,), jnp.float32),
                'var': jax.random.uniform(k4, (c,), jnp.float32, 0.5, 1.5)}

    params = {
        'stride': stride, 'num_group': num_group,
        'conv1_w': conv_init(keys[0], C1, inplanes, 1, 1), 'bn1': bn_init(keys[1], C1),
        'conv2_w': conv_init(keys[2], C1, C1 // num_group, 3, 3), 'bn2': bn_init(keys[3], C1),
        'conv3_w': conv_init(keys[4], C3, C1, 1, 1), 'bn3': bn_init(keys[5], C3),
    }
    if stride != 1 or inplanes != C3:
        params['ds_conv_w'] = conv_init(keys[6], C3, inplanes, 1, 1)
        params['ds_bn'] = bn_init(keys[7], C3)
    return params


def bottleneck_reference(params, x_nchw):
    s, G = params['stride'], params['num_group']

    def conv(x, w, stride, padding, groups=1):
        return jax.lax.conv_general_dilated(
            x, w, window_strides=(stride, stride),
            padding=((padding, padding), (padding, padding)),
            dimension_numbers=('NCHW', 'OIHW', 'NCHW'),
            feature_group_count=groups,
            precision=jax.lax.Precision.HIGHEST)

    def bn(x, p):
        sc = p['gamma'] * jax.lax.rsqrt(p['var'] + _EPS)
        bi = p['beta'] - p['mean'] * sc
        return x * sc[None, :, None, None] + bi[None, :, None, None]

    out = jax.nn.relu(bn(conv(x_nchw, params['conv1_w'], 1, 0), params['bn1']))
    out = jax.nn.relu(bn(conv(out, params['conv2_w'], s, 1, G), params['bn2']))
    out = bn(conv(out, params['conv3_w'], 1, 0), params['bn3'])
    if 'ds_conv_w' in params:
        res = bn(conv(x_nchw, params['ds_conv_w'], s, 0), params['ds_bn'])
    else:
        res = x_nchw
    return jax.nn.relu(out + res)


# ----------------------------- main -----------------------------

if __name__ == "__main__":
    key = jax.random.PRNGKey(0)
    kp1, kx1, kp2, kx2 = jax.random.split(key, 4)

    # Case A: stride=1, identity residual (inplanes == planes * expansion).
    paramsA = init_bottleneck(kp1, inplanes=256, planes=64, stride=1, num_group=32)
    xA = jax.random.normal(kx1, (2, 256, 16, 16), jnp.float32)
    fwdA = make_bottleneck_fn(paramsA, 16, 16)
    outA = jax.block_until_ready(fwdA(xA))

    # Case B: stride=2 with a fused 1x1 downsample projection on the residual.
    paramsB = init_bottleneck(kp2, inplanes=128, planes=64, stride=2, num_group=32)
    xB = jax.random.normal(kx2, (2, 128, 16, 16), jnp.float32)
    fwdB = make_bottleneck_fn(paramsB, 16, 16)
    outB = jax.block_until_ready(fwdB(xB))

    assert outA.shape == (2, 256, 16, 16), outA.shape
    assert outB.shape == (2, 256, 8, 8), outB.shape

    refA = bottleneck_reference(paramsA, xA)
    refB = bottleneck_reference(paramsB, xB)

    def rel_err(a, b):
        a = a.astype(jnp.float32)
        return float(jnp.linalg.norm(a - b) / (jnp.linalg.norm(b) + 1e-6))

    errA, errB = rel_err(outA, refA), rel_err(outB, refB)
    assert errA < 5e-2 and errB < 5e-2, (errA, errB)  # bf16 MXU/output vs f32 ref
    print("KERNEL_OK")
</pallas_src>

<mosaic_0001>
module attributes {stable_mosaic.version = 11 : i64} {
  func.func @kernel(%arg0: i32, %arg1: memref<1x256x256xbf16, #tpu.memory_space<vmem>>, %arg2: memref<256x128xbf16, #tpu.memory_space<vmem>>, %arg3: memref<2x128xf32, #tpu.memory_space<vmem>>, %arg4: memref<1152x128xbf16, #tpu.memory_space<vmem>>, %arg5: memref<2x128xf32, #tpu.memory_space<vmem>>, %arg6: memref<128x256xbf16, #tpu.memory_space<vmem>>, %arg7: memref<2x256xf32, #tpu.memory_space<vmem>>, %arg8: memref<1x256x256xbf16, #tpu.memory_space<vmem>>, %arg9: memref<18x32x128xbf16, #tpu.memory_space<vmem>>, %arg10: memref<256x1152xbf16, #tpu.memory_space<vmem>>) attributes {dimension_semantics = [#tpu.dimension_semantics<parallel>], iteration_bounds = array<i64: 2>, scalar_prefetch = 0 : i64, scratch_operands = 2 : i64, tpu.core_type = #tpu.core_type<tc>, window_params = [{transform_indices = @transform_0, window_bounds = array<i64: 1, 256, 256>}, {pipeline_mode = #tpu.pipeline_mode<synchronous>, transform_indices = @transform_1, window_bounds = array<i64: 256, 128>}, {pipeline_mode = #tpu.pipeline_mode<synchronous>, transform_indices = @transform_2, window_bounds = array<i64: 2, 128>}, {pipeline_mode = #tpu.pipeline_mode<synchronous>, transform_indices = @transform_3, window_bounds = array<i64: 1152, 128>}, {pipeline_mode = #tpu.pipeline_mode<synchronous>, transform_indices = @transform_4, window_bounds = array<i64: 2, 128>}, {pipeline_mode = #tpu.pipeline_mode<synchronous>, transform_indices = @transform_5, window_bounds = array<i64: 128, 256>}, {pipeline_mode = #tpu.pipeline_mode<synchronous>, transform_indices = @transform_6, window_bounds = array<i64: 2, 256>}, {transform_indices = @transform_7, window_bounds = array<i64: 1, 256, 256>}]} {
    %cst = arith.constant 0.000000e+00 : bf16
    %0 = vector.broadcast %cst : bf16 to vector<1x32x128xbf16>
    %cst_0 = arith.constant 0.000000e+00 : bf16
    %1 = vector.broadcast %cst_0 : bf16 to vector<18x1x128xbf16>
    %c0 = arith.constant 0 : index
    %c0_1 = arith.constant 0 : index
    %c0_2 = arith.constant 0 : index
    %2 = vector.load %arg9[%c0, %c0_1, %c0_2] : memref<18x32x128xbf16, #tpu.memory_space<vmem>>, vector<1x32x128xbf16>
    tpu.vector_store %arg9[%c0, %c0_1, %c0_2], %0 {strides = array<i32>} : memref<18x32x128xbf16, #tpu.memory_space<vmem>>, vector<1x32x128xbf16>,
    %c17 = arith.constant 17 : index
    %c0_3 = arith.constant 0 : index
    %c0_4 = arith.constant 0 : index
    %3 = vector.load %arg9[%c17, %c0_3, %c0_4] : memref<18x32x128xbf16, #tpu.memory_space<vmem>>, vector<1x32x128xbf16>
    tpu.vector_store %arg9[%c17, %c0_3, %c0_4], %0 {strides = array<i32>} : memref<18x32x128xbf16, #tpu.memory_space<vmem>>, vector<1x32x128xbf16>,
    %c0_5 = arith.constant 0 : index
    %c0_6 = arith.constant 0 : index
    %c0_7 = arith.constant 0 : index
    %4 = vector.load %arg9[%c0_5, %c0_6, %c0_7] : memref<18x32x128xbf16, #tpu.memory_space<vmem>>, vector<18x1x128xbf16>
    tpu.vector_store %arg9[%c0_5, %c0_6, %c0_7], %1 {strides = array<i32>} : memref<18x32x128xbf16, #tpu.memory_space<vmem>>, vector<18x1x128xbf16>,
    %c0_8 = arith.constant 0 : index
    %c17_9 = arith.constant 17 : index
    %c0_10 = arith.constant 0 : index
    %5 = vector.load %arg9[%c0_8, %c17_9, %c0_10] : memref<18x32x128xbf16, #tpu.memory_space<vmem>>, vector<18x1x128xbf16>
    tpu.vector_store %arg9[%c0_8, %c17_9, %c0_10], %1 {strides = array<i32>} : memref<18x32x128xbf16, #tpu.memory_space<vmem>>, vector<18x1x128xbf16>,
    %c0_11 = arith.constant 0 : index
    %c0_12 = arith.constant 0 : index
    %c0_13 = arith.constant 0 : index
    %6 = vector.load %arg1[%c0_11, %c0_12, %c0_13] : memref<1x256x256xbf16, #tpu.memory_space<vmem>>, vector<1x256x256xbf16>
    %7 = vector.shape_cast %6 : vector<1x256x256xbf16> to vector<256x256xbf16>
    %c0_14 = arith.constant 0 : index
    %c0_15 = arith.constant 0 : index
    %8 = vector.load %arg2[%c0_14, %c0_15] : memref<256x128xbf16, #tpu.memory_space<vmem>>, vector<256x128xbf16>
    %cst_16 = arith.constant dense<0.000000e+00> : vector<256x128xf32>
    %9 = tpu.matmul %7, %8, %cst_16 {dimension_numbers = #tpu.dot_dimension_numbers<[1], [0], [0], [1], [0, 0, 1, 1], [], []>} : vector<256x256xbf16>, vector<256x128xbf16>, vector<256x128xf32> -> vector<256x128xf32>
    %c0_17 = arith.constant 0 : index
    %c0_18 = arith.constant 0 : index
    %10 = vector.load %arg3[%c0_17, %c0_18] : memref<2x128xf32, #tpu.memory_space<vmem>>, vector<1x128xf32>
    %11 = vector.broadcast %10 : vector<1x128xf32> to vector<256x128xf32>
    %12 = arith.mulf %9, %11 : vector<256x128xf32>
    %c1 = arith.constant 1 : index
    %c0_19 = arith.constant 0 : index
    %13 = vector.load %arg3[%c1, %c0_19] : memref<2x128xf32, #tpu.memory_space<vmem>>, vector<1x128xf32>
    %14 = vector.broadcast %13 : vector<1x128xf32> to vector<256x128xf32>
    %15 = arith.addf %12, %14 : vector<256x128xf32>
    %cst_20 = arith.constant 0.000000e+00 : f32
    %16 = vector.broadcast %cst_20 : f32 to vector<256x128xf32>
    %17 = arith.maximumf %15, %16 : vector<256x128xf32>
    %18 = arith.truncf %17 : vector<256x128xf32> to vector<256x128xbf16>
    %19 = vector.shape_cast %18 : vector<256x128xbf16> to vector<16x16x128xbf16>
    %c1_21 = arith.constant 1 : index
    %c1_22 = arith.constant 1 : index
    %c0_23 = arith.constant 0 : index
    %20 = vector.load %arg9[%c1_21, %c1_22, %c0_23] : memref<18x32x128xbf16, #tpu.memory_space<vmem>>, vector<16x16x128xbf16>
    tpu.vector_store %arg9[%c1_21, %c1_22, %c0_23], %19 {strides = array<i32>} : memref<18x32x128xbf16, #tpu.memory_space<vmem>>, vector<16x16x128xbf16>,
    %c0_24 = arith.constant 0 : index
    %c0_25 = arith.constant 0 : index
    %c0_26 = arith.constant 0 : index
    %21 = vector.load %arg9[%c0_24, %c0_25, %c0_26] : memref<18x32x128xbf16, #tpu.memory_space<vmem>>, vector<16x16x128xbf16>
    %22 = vector.shape_cast %21 : vector<16x16x128xbf16> to vector<256x128xbf16>
    %c0_27 = arith.constant 0 : index
    %c0_28 = arith.constant 0 : index
    %23 = vector.load %arg10[%c0_27, %c0_28] : memref<256x1152xbf16, #tpu.memory_space<vmem>>, vector<256x128xbf16>
    tpu.vector_store %arg10[%c0_27, %c0_28], %22 {strides = array<i32>} : memref<256x1152xbf16, #tpu.memory_space<vmem>>, vector<256x128xbf16>,
    %c0_29 = arith.constant 0 : index
    %c1_30 = arith.constant 1 : index
    %c0_31 = arith.constant 0 : index
    %24 = vector.load %arg9[%c0_29, %c1_30, %c0_31] : memref<18x32x128xbf16, #tpu.memory_space<vmem>>, vector<16x16x128xbf16>
    %25 = vector.shape_cast %24 : vector<16x16x128xbf16> to vector<256x128xbf16>
    %c0_32 = arith.constant 0 : index
    %c128 = arith.constant 128 : index
    %26 = vector.load %arg10[%c0_32, %c128] : memref<256x1152xbf16, #tpu.memory_space<vmem>>, vector<256x128xbf16>
    tpu.vector_store %arg10[%c0_32, %c128], %25 {strides = array<i32>} : memref<256x1152xbf16, #tpu.memory_space<vmem>>, vector<256x128xbf16>,
    %c0_33 = arith.constant 0 : index
    %c2 = arith.constant 2 : index
    %c0_34 = arith.constant 0 : index
    %27 = vector.load %arg9[%c0_33, %c2, %c0_34] : memref<18x32x128xbf16, #tpu.memory_space<vmem>>, vector<16x16x128xbf16>
    %28 = vector.shape_cast %27 : vector<16x16x128xbf16> to vector<256x128xbf16>
    %c0_35 = arith.constant 0 : index
    %c256 = arith.constant 256 : index
    %29 = vector.load %arg10[%c0_35, %c256] : memref<256x1152xbf16, #tpu.memory_space<vmem>>, vector<256x128xbf16>
    tpu.vector_store %arg10[%c0_35, %c256], %28 {strides = array<i32>} : memref<256x1152xbf16, #tpu.memory_space<vmem>>, vector<256x128xbf16>,
    %c1_36 = arith.constant 1 : index
    %c0_37 = arith.constant 0 : index
    %c0_38 = arith.constant 0 : index
    %30 = vector.load %arg9[%c1_36, %c0_37, %c0_38] : memref<18x32x128xbf16, #tpu.memory_space<vmem>>, vector<16x16x128xbf16>
    %31 = vector.shape_cast %30 : vector<16x16x128xbf16> to vector<256x128xbf16>
    %c0_39 = arith.constant 0 : index
    %c384 = arith.constant 384 : index
    %32 = vector.load %arg10[%c0_39, %c384] : memref<256x1152xbf16, #tpu.memory_space<vmem>>, vector<256x128xbf16>
    tpu.vector_store %arg10[%c0_39, %c384], %31 {strides = array<i32>} : memref<256x1152xbf16, #tpu.memory_space<vmem>>, vector<256x128xbf16>,
    %c1_40 = arith.constant 1 : index
    %c1_41 = arith.constant 1 : index
    %c0_42 = arith.constant 0 : index
    %33 = vector.load %arg9[%c1_40, %c1_41, %c0_42] : memref<18x32x128xbf16, #tpu.memory_space<vmem>>, vector<16x16x128xbf16>
    %34 = vector.shape_cast %33 : vector<16x16x128xbf16> to vector<256x128xbf16>
    %c0_43 = arith.constant 0 : index
    %c512 = arith.constant 512 : index
    %35 = vector.load %arg10[%c0_43, %c512] : memref<256x1152xbf16, #tpu.memory_space<vmem>>, vector<256x128xbf16>
    tpu.vector_store %arg10[%c0_43, %c512], %34 {strides = array<i32>} : memref<256x1152xbf16, #tpu.memory_space<vmem>>, vector<256x128xbf16>,
    %c1_44 = arith.constant 1 : index
    %c2_45 = arith.constant 2 : index
    %c0_46 = arith.constant 0 : index
    %36 = vector.load %arg9[%c1_44, %c2_45, %c0_46] : memref<18x32x128xbf16, #tpu.memory_space<vmem>>, vector<16x16x128xbf16>
    %37 = vector.shape_cast %36 : vector<16x16x128xbf16> to vector<256x128xbf16>
    %c0_47 = arith.constant 0 : index
    %c640 = arith.constant 640 : index
    %38 = vector.load %arg10[%c0_47, %c640] : memref<256x1152xbf16, #tpu.memory_space<vmem>>, vector<256x128xbf16>
    tpu.vector_store %arg10[%c0_47, %c640], %37 {strides = array<i32>} : memref<256x1152xbf16, #tpu.memory_space<vmem>>, vector<256x128xbf16>,
    %c2_48 = arith.constant 2 : index
    %c0_49 = arith.constant 0 : index
    %c0_50 = arith.constant 0 : index
    %39 = vector.load %arg9[%c2_48, %c0_49, %c0_50] : memref<18x32x128xbf16, #tpu.memory_space<vmem>>, vector<16x16x128xbf16>
    %40 = vector.shape_cast %39 : vector<16x16x128xbf16> to vector<256x128xbf16>
    %c0_51 = arith.constant 0 : index
    %c768 = arith.constant 768 : index
    %41 = vector.load %arg10[%c0_51, %c768] : memref<256x1152xbf16, #tpu.memory_space<vmem>>, vector<256x128xbf16>
    tpu.vector_store %arg10[%c0_51, %c768], %40 {strides = array<i32>} : memref<256x1152xbf16, #tpu.memory_space<vmem>>, vector<256x128xbf16>,
    %c2_52 = arith.constant 2 : index
    %c1_53 = arith.constant 1 : index
    %c0_54 = arith.constant 0 : index
    %42 = vector.load %arg9[%c2_52, %c1_53, %c0_54] : memref<18x32x128xbf16, #tpu.memory_space<vmem>>, vector<16x16x128xbf16>
    %43 = vector.shape_cast %42 : vector<16x16x128xbf16> to vector<256x128xbf16>
    %c0_55 = arith.constant 0 : index
    %c896 = arith.constant 896 : index
    %44 = vector.load %arg10[%c0_55, %c896] : memref<256x1152xbf16, #tpu.memory_space<vmem>>, vector<256x128xbf16>
    tpu.vector_store %arg10[%c0_55, %c896], %43 {strides = array<i32>} : memref<256x1152xbf16, #tpu.memory_space<vmem>>, vector<256x128xbf16>,
    %c2_56 = arith.constant 2 : index
    %c2_57 = arith.constant 2 : index
    %c0_58 = arith.constant 0 : index
    %45 = vector.load %arg9[%c2_56, %c2_57, %c0_58] : memref<18x32x128xbf16, #tpu.memory_space<vmem>>, vector<16x16x128xbf16>
    %46 = vector.shape_cast %45 : vector<16x16x128xbf16> to vector<256x128xbf16>
    %c0_59 = arith.constant 0 : index
    %c1024 = arith.constant 1024 : index
    %47 = vector.load %arg10[%c0_59, %c1024] : memref<256x1152xbf16, #tpu.memory_space<vmem>>, vector<256x128xbf16>
    tpu.vector_store %arg10[%c0_59, %c1024], %46 {strides = array<i32>} : memref<256x1152xbf16, #tpu.memory_space<vmem>>, vector<256x128xbf16>,
    %c0_60 = arith.constant 0 : index
    %c0_61 = arith.constant 0 : index
    %48 = vector.load %arg10[%c0_60, %c0_61] : memref<256x1152xbf16, #tpu.memory_space<vmem>>, vector<256x1152xbf16>
    %c0_62 = arith.constant 0 : index
    %c0_63 = arith.constant 0 : index
    %49 = vector.load %arg4[%c0_62, %c0_63] : memref<1152x128xbf16, #tpu.memory_space<vmem>>, vector<1152x128xbf16>
    %cst_64 = arith.constant dense<0.000000e+00> : vector<256x128xf32>
    %50 = tpu.matmul %48, %49, %cst_64 {dimension_numbers = #tpu.dot_dimension_numbers<[1], [0], [0], [1], [0, 0, 1, 1], [], []>} : vector<256x1152xbf16>, vector<1152x128xbf16>, vector<256x128xf32> -> vector<256x128xf32>
    %c0_65 = arith.constant 0 : index
    %c0_66 = arith.constant 0 : index
    %51 = vector.load %arg5[%c0_65, %c0_66] : memref<2x128xf32, #tpu.memory_space<vmem>>, vector<1x128xf32>
    %52 = vector.broadcast %51 : vector<1x128xf32> to vector<256x128xf32>
    %53 = arith.mulf %50, %52 : vector<256x128xf32>
    %c1_67 = arith.constant 1 : index
    %c0_68 = arith.constant 0 : index
    %54 = vector.load %arg5[%c1_67, %c0_68] : memref<2x128xf32, #tpu.memory_space<vmem>>, vector<1x128xf32>
    %55 = vector.broadcast %54 : vector<1x128xf32> to vector<256x128xf32>
    %56 = arith.addf %53, %55 : vector<256x128xf32>
    %cst_69 = arith.constant 0.000000e+00 : f32
    %57 = vector.broadcast %cst_69 : f32 to vector<256x128xf32>
    %58 = arith.maximumf %56, %57 : vector<256x128xf32>
    %59 = arith.truncf %58 : vector<256x128xf32> to vector<256x128xbf16>
    %c0_70 = arith.constant 0 : index
    %c0_71 = arith.constant 0 : index
    %60 = vector.load %arg6[%c0_70, %c0_71] : memref<128x256xbf16, #tpu.memory_space<vmem>>, vector<128x256xbf16>
    %cst_72 = arith.constant dense<0.000000e+00> : vector<256x256xf32>
    %61 = tpu.matmul %59, %60, %cst_72 {dimension_numbers = #tpu.dot_dimension_numbers<[1], [0], [0], [1], [0, 0, 1, 1], [], []>} : vector<256x128xbf16>, vector<128x256xbf16>, vector<256x256xf32> -> vector<256x256xf32>
    %c0_73 = arith.constant 0 : index
    %c0_74 = arith.constant 0 : index
    %62 = vector.load %arg7[%c0_73, %c0_74] : memref<2x256xf32, #tpu.memory_space<vmem>>, vector<1x256xf32>
    %63 = vector.broadcast %62 : vector<1x256xf32> to vector<256x256xf32>
    %64 = arith.mulf %61, %63 : vector<256x256xf32>
    %c1_75 = arith.constant 1 : index
    %c0_76 = arith.constant 0 : index
    %65 = vector.load %arg7[%c1_75, %c0_76] : memref<2x256xf32, #tpu.memory_space<vmem>>, vector<1x256xf32>
    %66 = vector.broadcast %65 : vector<1x256xf32> to vector<256x256xf32>
    %67 = arith.addf %64, %66 : vector<256x256xf32>
    %c0_77 = arith.constant 0 : index
    %c0_78 = arith.constant 0 : index
    %c0_79 = arith.constant 0 : index
    %68 = vector.load %arg1[%c0_77, %c0_78, %c0_79] : memref<1x256x256xbf16, #tpu.memory_space<vmem>>, vector<1x256x256xbf16>
    %69 = vector.shape_cast %68 : vector<1x256x256xbf16> to vector<256x256xbf16>
    %70 = arith.extf %69 : vector<256x256xbf16> to vector<256x256xf32>
    %71 = arith.addf %67, %70 : vector<256x256xf32>
    %cst_80 = arith.constant 0.000000e+00 : f32
    %72 = vector.broadcast %cst_80 : f32 to vector<256x256xf32>
    %73 = arith.maximumf %71, %72 : vector<256x256xf32>
    %74 = arith.truncf %73 : vector<256x256xf32> to vector<256x256xbf16>
    %c0_81 = arith.constant 0 : index
    %c0_82 = arith.constant 0 : index
    %c0_83 = arith.constant 0 : index
    %75 = vector.load %arg8[%c0_81, %c0_82, %c0_83] : memref<1x256x256xbf16, #tpu.memory_space<vmem>>, vector<1x256x256xbf16>
    %76 = vector.shape_cast %75 : vector<1x256x256xbf16> to vector<256x256xbf16>
    %77 = vector.shape_cast %74 : vector<256x256xbf16> to vector<1x256x256xbf16>
    tpu.vector_store %arg8[%c0_81, %c0_82, %c0_83], %77 {strides = array<i32>} : memref<1x256x256xbf16, #tpu.memory_space<vmem>>, vector<1x256x256xbf16>,
    return
  }
  func.func @transform_0(%arg0: i32) -> (i32, i32, i32) {
    %c0_i32 = arith.constant 0 : i32
    %c0_i32_0 = arith.constant 0 : i32
    %c0_i32_1 = arith.constant 0 : i32
    return %arg0, %c0_i32, %c0_i32_0 : i32, i32, i32
  }
  func.func @transform_1(%arg0: i32) -> (i32, i32) {
    %c0_i32 = arith.constant 0 : i32
    %c0_i32_0 = arith.constant 0 : i32
    %c0_i32_1 = arith.constant 0 : i32
    return %c0_i32, %c0_i32_0 : i32, i32
  }
  func.func @transform_2(%arg0: i32) -> (i32, i32) {
    %c0_i32 = arith.constant 0 : i32
    %c0_i32_0 = arith.constant 0 : i32
    %c0_i32_1 = arith.constant 0 : i32
    return %c0_i32, %c0_i32_0 : i32, i32
  }
  func.func @transform_3(%arg0: i32) -> (i32, i32) {
    %c0_i32 = arith.constant 0 : i32
    %c0_i32_0 = arith.constant 0 : i32
    %c0_i32_1 = arith.constant 0 : i32
    return %c0_i32, %c0_i32_0 : i32, i32
  }
  func.func @transform_4(%arg0: i32) -> (i32, i32) {
    %c0_i32 = arith.constant 0 : i32
    %c0_i32_0 = arith.constant 0 : i32
    %c0_i32_1 = arith.constant 0 : i32
    return %c0_i32, %c0_i32_0 : i32, i32
  }
  func.func @transform_5(%arg0: i32) -> (i32, i32) {
    %c0_i32 = arith.constant 0 : i32
    %c0_i32_0 = arith.constant 0 : i32
    %c0_i32_1 = arith.constant 0 : i32
    return %c0_i32, %c0_i32_0 : i32, i32
  }
  func.func @transform_6(%arg0: i32) -> (i32, i32) {
    %c0_i32 = arith.constant 0 : i32
    %c0_i32_0 = arith.constant 0 : i32
    %c0_i32_1 = arith.constant 0 : i32
    return %c0_i32, %c0_i32_0 : i32, i32
  }
  func.func @transform_7(%arg0: i32) -> (i32, i32, i32) {
    %c0_i32 = arith.constant 0 : i32
    %c0_i32_0 = arith.constant 0 : i32
    %c0_i32_1 = arith.constant 0 : i32
    return %arg0, %c0_i32, %c0_i32_0 : i32, i32, i32
  }
}

</mosaic_0001>

<llo_original>
// kernel: bottleneck_forward_nchw.1
$region0: #{bottleneck_forward_nchw.1}
  #allocation0 [shape = 'u32[]', space=smem, size = 0x4, offset = 0x4, fixed_abs, tag = 'smem constant byte address 0x4 - core index']
  #allocation1 [shape = 'u32[144,128]{1,0:T(1,128)}', space=vmem, size = 0x12000, scoped, tag = 'internal scratch']
  #allocation2 [shape = 'bf16[18,32,128]{2,1,0:T(16,128)(2,1)}', space=vmem, size = 0x24000, scoped, tag = 'scratch operand']
  #allocation3 [shape = 'bf16[256,1152]{1,0:T(16,128)(2,1)}', space=vmem, size = 0x90000, scoped, tag = 'scratch operand']
  %s0 = inlined_call_operand.vmem [shape: bf16[2,256,256], index: 0, kind: input, shape index: {}]
  %s1 = inlined_call_operand.vmem [shape: bf16[256,128], index: 1, kind: input, shape index: {}]
  %s2 = inlined_call_operand.vmem [shape: f32[2,128], index: 2, kind: input, shape index: {}]
  %s3 = inlined_call_operand.vmem [shape: bf16[1152,128], index: 3, kind: input, shape index: {}]
  %s4 = inlined_call_operand.vmem [shape: f32[2,128], index: 4, kind: input, shape index: {}]
  %s5 = inlined_call_operand.vmem [shape: bf16[128,256], index: 5, kind: input, shape index: {}]
  %s6 = inlined_call_operand.vmem [shape: f32[2,256], index: 6, kind: input, shape index: {}]
  %s7 = inlined_call_operand.hbm [shape: bf16[2,256,256], index: 7, kind: output, shape index: {}]
  %s8 = sld [smem:[#allocation0]]
  $region61: #{bottleneck_forward_nchw.1} parent=0
    _
  %s10 = ssub.s32 1, %s8
  %s11 = scalar_select 0, %s10, %s8
  $region1: #{bottleneck_forward_nchw.1} parent=0
    #allocation4 [shape = 'u8[262144]{0}', space=vmem, size = 0x40000, scoped, tag = 'output window, operand 0']
    #allocation5 [shape = 's32[2]{0}', space=sflag, size = 0x8, scoped, tag = 'scoped memory for bottleneck_forward_nchw.1']
    %12 = vsyncpa [#allocation5], 0
    %s13 = scalar_lea.sflag [#allocation5], 1
    %14 = vsyncpa %s13, 0
    loop: start=0, step=1, limit=4
    $region2: #{bottleneck_forward_nchw.1} parent=1 // loop_pre_header
      _
    $region3: #{bottleneck_forward_nchw.1} parent=1 // loop_header
      %s16 = sphi 0, %s20
      %p17 = scmp.ge.s32.totalorder %s16, 4
      %s26 = sphi 0, %s28
      %s29 = sphi 0, %s26
      %s30 = sphi 0, %s29
      %s46 = sphi 0, %s30
      %s50 = sphi 0, %s50
      %s52 = sphi 0, %s50
      %s53 = sphi 0, %s52
      %s67 = sphi 0, %s53
      %s71 = sphi 0, %s71
      %s73 = sphi 0, %s71
      %s74 = sphi 0, %s73
      %s88 = sphi 0, %s74
      %s92 = sphi 0, %s92
      %s94 = sphi 0, %s92
      %s95 = sphi 0, %s94
      %s109 = sphi 0, %s95
      %s113 = sphi 0, %s113
      %s115 = sphi 0, %s113
      %s116 = sphi 0, %s115
      %s130 = sphi 0, %s116
      %s134 = sphi 0, %s134
      %s136 = sphi 0, %s134
      %s137 = sphi 0, %s136
      %s151 = sphi 0, %s137
      %s155 = sphi 0, %s155
      %s157 = sphi 0, %s155
      %s158 = sphi 0, %s157
      %s172 = sphi 0, %s158
      %s178 = sphi 0, %s180
      %s181 = sphi 0, %s178
      %s182 = sphi 0, %s181
      %s198 = sphi 0, %s182
    $region4: #{bottleneck_forward_nchw.1} parent=1 // loop_header_branch
      %19 = sbr.rel (%p17) target = $region8
    $region5: #{bottleneck_forward_nchw.1} parent=1 // loop_body
      %s21 = ssub.s32 %s16, 1
      %s22 = ssub.s32 %s16, 2
      %s23 = sadd.s32 %s16, 1
      %s24 = ssub.s32 %s16, %s23
      %p25 = scmp.eq.s32.totalorder %s24, 0
      %s27 = sadd.s32 %s26, 1
      %s28 = scalar_select %p25, %s26, %s27
      %p31 = pneg %p25
      %p32 = scmp.eq.s32.totalorder %s16, 1
      %p33 = por %p31, %p32
      %p34 = scmp.ne.s32.totalorder %s26, %s29
      %p35 = scmp.eq.s32.totalorder %s16, 0
      %p36 = por %p34, %p35
      %p37 = scmp.ne.s32.totalorder %s26, %s29
      %p38 = scmp.eq.s32.totalorder %s21, 1
      %p39 = por %p37, %p38
      %p40 = scmp.ne.s32.totalorder %s29, %s30
      %p41 = scmp.eq.s32.totalorder %s21, 0
      %p42 = por %p40, %p41
      %p43 = scmp.ne.s32.totalorder %s29, %s30
      %p44 = scmp.eq.s32.totalorder %s22, 1
      %p45 = por %p43, %p44
      %p47 = scmp.ne.s32.totalorder %s30, %s46
      %p48 = scmp.eq.s32.totalorder %s22, 0
      %p49 = por %p47, %p48
      %s51 = sadd.s32 %s50, 1
      %p54 = scmp.eq.s32.totalorder %s16, 1
      %p55 = scmp.ne.s32.totalorder %s50, %s52
      %p56 = scmp.eq.s32.totalorder %s16, 0
      %p57 = por %p55, %p56
      %p58 = scmp.ne.s32.totalorder %s50, %s52
      %p59 = scmp.eq.s32.totalorder %s21, 1
      %p60 = por %p58, %p59
      %p61 = scmp.ne.s32.totalorder %s52, %s53
      %p62 = scmp.eq.s32.totalorder %s21, 0
      %p63 = por %p61, %p62
      %p64 = scmp.ne.s32.totalorder %s52, %s53
      %p65 = scmp.eq.s32.totalorder %s22, 1
      %p66 = por %p64, %p65
      %p68 = scmp.ne.s32.totalorder %s53, %s67
      %p69 = scmp.eq.s32.totalorder %s22, 0
      %p70 = por %p68, %p69
      %s72 = sadd.s32 %s71, 1
      %p75 = scmp.eq.s32.totalorder %s16, 1
      %p76 = scmp.ne.s32.totalorder %s71, %s73
      %p77 = scmp.eq.s32.totalorder %s16, 0
      %p78 = por %p76, %p77
      %p79 = scmp.ne.s32.totalorder %s71, %s73
      %p80 = scmp.eq.s32.totalorder %s21, 1
      %p81 = por %p79, %p80
      %p82 = scmp.ne.s32.totalorder %s73, %s74
      %p83 = scmp.eq.s32.totalorder %s21, 0
      %p84 = por %p82, %p83
      %p85 = scmp.ne.s32.totalorder %s73, %s74
      %p86 = scmp.eq.s32.totalorder %s22, 1
      %p87 = por %p85, %p86
      %p89 = scmp.ne.s32.totalorder %s74, %s88
      %p90 = scmp.eq.s32.totalorder %s22, 0
      %p91 = por %p89, %p90
      %s93 = sadd.s32 %s92, 1
      %p96 = scmp.eq.s32.totalorder %s16, 1
      %p97 = scmp.ne.s32.totalorder %s92, %s94
      %p98 = scmp.eq.s32.totalorder %s16, 0
      %p99 = por %p97, %p98
      %p100 = scmp.ne.s32.totalorder %s92, %s94
      %p101 = scmp.eq.s32.totalorder %s21, 1
      %p102 = por %p100, %p101
      %p103 = scmp.ne.s32.totalorder %s94, %s95
      %p104 = scmp.eq.s32.totalorder %s21, 0
      %p105 = por %p103, %p104
      %p106 = scmp.ne.s32.totalorder %s94, %s95
      %p107 = scmp.eq.s32.totalorder %s22, 1
      %p108 = por %p106, %p107
      %p110 = scmp.ne.s32.totalorder %s95, %s109
      %p111 = scmp.eq.s32.totalorder %s22, 0
      %p112 = por %p110, %p111
      %s114 = sadd.s32 %s113, 1
      %p117 = scmp.eq.s32.totalorder %s16, 1
      %p118 = scmp.ne.s32.totalorder %s113, %s115
      %p119 = scmp.eq.s32.totalorder %s16, 0
      %p120 = por %p118, %p119
      %p121 = scmp.ne.s32.totalorder %s113, %s115
      %p122 = scmp.eq.s32.totalorder %s21, 1
      %p123 = por %p121, %p122
      %p124 = scmp.ne.s32.totalorder %s115, %s116
      %p125 = scmp.eq.s32.totalorder %s21, 0
      %p126 = por %p124, %p125
      %p127 = scmp.ne.s32.totalorder %s115, %s116
      %p128 = scmp.eq.s32.totalorder %s22, 1
      %p129 = por %p127, %p128
      %p131 = scmp.ne.s32.totalorder %s116, %s130
      %p132 = scmp.eq.s32.totalorder %s22, 0
      %p133 = por %p131, %p132
      %s135 = sadd.s32 %s134, 1
      %p138 = scmp.eq.s32.totalorder %s16, 1
      %p139 = scmp.ne.s32.totalorder %s134, %s136
      %p140 = scmp.eq.s32.totalorder %s16, 0
      %p141 = por %p139, %p140
      %p142 = scmp.ne.s32.totalorder %s134, %s136
      %p143 = scmp.eq.s32.totalorder %s21, 1
      %p144 = por %p142, %p143
      %p145 = scmp.ne.s32.totalorder %s136, %s137
      %p146 = scmp.eq.s32.totalorder %s21, 0
      %p147 = por %p145, %p146
      %p148 = scmp.ne.s32.totalorder %s136, %s137
      %p149 = scmp.eq.s32.totalorder %s22, 1
      %p150 = por %p148, %p149
      %p152 = scmp.ne.s32.totalorder %s137, %s151
      %p153 = scmp.eq.s32.totalorder %s22, 0
      %p154 = por %p152, %p153
      %s156 = sadd.s32 %s155, 1
      %p159 = scmp.eq.s32.totalorder %s16, 1
      %p160 = scmp.ne.s32.totalorder %s155, %s157
      %p161 = scmp.eq.s32.totalorder %s16, 0
      %p162 = por %p160, %p161
      %p163 = scmp.ne.s32.totalorder %s155, %s157
      %p164 = scmp.eq.s32.totalorder %s21, 1
      %p165 = por %p163, %p164
      %p166 = scmp.ne.s32.totalorder %s157, %s158
      %p167 = scmp.eq.s32.totalorder %s21, 0
      %p168 = por %p166, %p167
      %p169 = scmp.ne.s32.totalorder %s157, %s158
      %p170 = scmp.eq.s32.totalorder %s22, 1
      %p171 = por %p169, %p170
      %p173 = scmp.ne.s32.totalorder %s158, %s172
      %p174 = scmp.eq.s32.totalorder %s22, 0
      %p175 = por %p173, %p174
      %s176 = ssub.s32 %s16, %s23
      %p177 = scmp.eq.s32.totalorder %s176, 0
      %s179 = sadd.s32 %s178, 1
      %s180 = scalar_select %p177, %s178, %s179
      %p183 = pneg %p177
      %p184 = scmp.eq.s32.totalorder %s16, 1
      %p185 = por %p183, %p184
      %p186 = scmp.ne.s32.totalorder %s178, %s181
      %p187 = scmp.eq.s32.totalorder %s16, 0
      %p188 = por %p186, %p187
      %p189 = scmp.ne.s32.totalorder %s178, %s181
      %p190 = scmp.eq.s32.totalorder %s21, 1
      %p191 = por %p189, %p190
      %p192 = scmp.ne.s32.totalorder %s181, %s182
      %p193 = scmp.eq.s32.totalorder %s21, 0
      %p194 = por %p192, %p193
      %p195 = scmp.ne.s32.totalorder %s181, %s182
      %p196 = scmp.eq.s32.totalorder %s22, 1
      %p197 = por %p195, %p196
      %p199 = scmp.ne.s32.totalorder %s182, %s198
      %p200 = scmp.eq.s32.totalorder %s22, 0
      %p201 = por %p199, %p200
      %p202 = scmp.le.s32.totalorder 1, %s16
      %p203 = scmp.lt.s32.totalorder %s16, 3
      %p204 = pnand %p202, %p203
      %p205 = pneg %p204
      // Predicated region
      $region9: #{bottleneck_forward_nchw.1} parent=5 // pred_check
        _
      $region10: #{bottleneck_forward_nchw.1} parent=5 // pred_check_branch
        %207 = sbr.rel (%p204) target = $region12
      $region11: #{bottleneck_forward_nchw.1} parent=5 // pred_region
        %s208 = ssub.s32 %s16, 1
        // Predicated region
        $region13: #{bottleneck_forward_nchw.1} parent=11 // pred_check
          %p209 = pneg %p63
        $region14: #{bottleneck_forward_nchw.1} parent=11 // pred_check_branch
          %211 = sbr.rel (%p209) target = $region16
        $region15: #{bottleneck_forward_nchw.1} parent=11 // pred_region
          _
        $region16: #{bottleneck_forward_nchw.1} parent=11 // pred_fallthru
          _
        // Predicated region
        $region17: #{bottleneck_forward_nchw.1} parent=11 // pred_check
          %p212 = pneg %p84
        $region18: #{bottleneck_forward_nchw.1} parent=11 // pred_check_branch
          %214 = sbr.rel (%p212) target = $region20
        $region19: #{bottleneck_forward_nchw.1} parent=11 // pred_region
          _
        $region20: #{bottleneck_forward_nchw.1} parent=11 // pred_fallthru
          _
        // Predicated region
        $region21: #{bottleneck_forward_nchw.1} parent=11 // pred_check
          %p215 = pneg %p105
        $region22: #{bottleneck_forward_nchw.1} parent=11 // pred_check_branch
          %217 = sbr.rel (%p215) target = $region24
        $region23: #{bottleneck_forward_nchw.1} parent=11 // pred_region
          _
        $region24: #{bottleneck_forward_nchw.1} parent=11 // pred_fallthru
          _
        // Predicated region
        $region25: #{bottleneck_forward_nchw.1} parent=11 // pred_check
          %p218 = pneg %p126
        $region26: #{bottleneck_forward_nchw.1} parent=11 // pred_check_branch
          %220 = sbr.rel (%p218) target = $region28
        $region27: #{bottleneck_forward_nchw.1} parent=11 // pred_region
          _
        $region28: #{bottleneck_forward_nchw.1} parent=11 // pred_fallthru
          _
        // Predicated region
        $region29: #{bottleneck_forward_nchw.1} parent=11 // pred_check
          %p221 = pneg %p147
        $region30: #{bottleneck_forward_nchw.1} parent=11 // pred_check_branch
          %223 = sbr.rel (%p221) target = $region32
        $region31: #{bottleneck_forward_nchw.1} parent=11 // pred_region
          _
        $region32: #{bottleneck_forward_nchw.1} parent=11 // pred_fallthru
          _
        // Predicated region
        $region33: #{bottleneck_forward_nchw.1} parent=11 // pred_check
          %p224 = pneg %p168
        $region34: #{bottleneck_forward_nchw.1} parent=11 // pred_check_branch
          %226 = sbr.rel (%p224) target = $region36
        $region35: #{bottleneck_forward_nchw.1} parent=11 // pred_region
          _
        $region36: #{bottleneck_forward_nchw.1} parent=11 // pred_fallthru
          _
      $region12: #{bottleneck_forward_nchw.1} parent=5 // pred_fallthru
        _
      %p227 = scmp.lt.s32.totalorder %s16, 2
      // Predicated region
      $region37: #{bottleneck_forward_nchw.1} parent=5 // pred_check
        %p228 = pneg %p227
      $region38: #{bottleneck_forward_nchw.1} parent=5 // pred_check_branch
        %230 = sbr.rel (%p228) target = $region40
      $region39: #{bottleneck_forward_nchw.1} parent=5 // pred_region
        // Predicated region
        $region41: #{bottleneck_forward_nchw.1} parent=39 // pred_check
          %p231 = pneg %p36
        $region42: #{bottleneck_forward_nchw.1} parent=39 // pred_check_branch
          %233 = sbr.rel (%p231) target = $region44
        $region43: #{bottleneck_forward_nchw.1} parent=39 // pred_region
          %p234 = scmp.lt.s32.totalorder %s16, 1
          %s235 = scalar_select %p234, %s16, 1
          %s236 = smul.addr %s235, 64
          %s237 = smul.addr %s236, 4
          %s238 = scalar_lea.vmem %s0, %s237
        $region44: #{bottleneck_forward_nchw.1} parent=39 // pred_fallthru
          _
      $region40: #{bottleneck_forward_nchw.1} parent=5 // pred_fallthru
        _
      %p239 = scmp.le.s32.totalorder 1, %s16
      %p240 = scmp.lt.s32.totalorder %s16, 3
      %p241 = pnand %p239, %p240
      %p242 = pneg %p241
      // Predicated region
      $region45: #{bottleneck_forward_nchw.1} parent=5 // pred_check
        _
      $region46: #{bottleneck_forward_nchw.1} parent=5 // pred_check_branch
        %244 = sbr.rel (%p241) target = $region48
      $region47: #{bottleneck_forward_nchw.1} parent=5 // pred_region
        %s245 = ssub.s32 %s16, 1
        %p246 = scmp.lt.s32.totalorder %s21, 1
        %s247 = scalar_select %p246, %s21, 1
        %s248 = smul.addr %s247, 64
        %s249 = smul.addr %s248, 4
        %s250 = scalar_lea.vmem %s0, %s249
        %p251 = pneg %p42
        %p252 = pneg %p39
        %p253 = pneg %p63
        %p254 = pneg %p60
        %p255 = pneg %p84
        %p256 = pneg %p81
        %p257 = pneg %p105
        %p258 = pneg %p102
        %p259 = pneg %p126
        %p260 = pneg %p123
        %p261 = pneg %p147
        %p262 = pneg %p144
        %p263 = pneg %p168
        %p264 = pneg %p165
        %p265 = pneg %p194
        %p266 = pneg %p191
        %s267 = sand.u32 %s181, 1
        %s268 = scalar_lea.sflag [#allocation5], %s267
        %s269 = sand.u32 %s181, 1
        %s270 = smul.addr %s269, 256
        %s271 = scalar_lea.vmem [#allocation4], %s270
        %p272 = scmp.lt.s32.totalorder %s21, 1
        %s273 = scalar_select %p272, %s21, 1
        %s274 = smul.addr %s273, 64
        %s275 = smul.addr %s274, 4
        %s276 = scalar_lea.vmem %s0, %s275
        %278 = vst [vmem:[#allocation2] sm:$0xff] 0
        %279 = vst [vmem:[#allocation2 + $0x8] sm:$0xff] 0
        %s280 = scalar_lea.vmem [#allocation2], 272
        %281 = vst [vmem:[%s280] sm:$0xff] 0
        %282 = vst [vmem:[%s280 + $0x8] sm:$0xff] 0
        %vm283 = vcmask 1040384
        %vm284 = vsmask.f32 256
        %vm285 = vmand %vm283, %vm284
        %v286 = vld [vmem:[#allocation2] sm:$0x1]
        %v287 = vsel %vm285, 0, %v286
        %288 = vst [vmem:[#allocation2] sm:$0x1] %v287
        %v289 = vld [vmem:[#allocation2 + $0x10] sm:$0x1]
        %v290 = vsel %vm285, 0, %v289
        %291 = vst [vmem:[#allocation2 + $0x10] sm:$0x1] %v290
        %v292 = vld [vmem:[#allocation2 + $0x20] sm:$0x1]
        %v293 = vsel %vm285, 0, %v292
        %294 = vst [vmem:[#allocation2 + $0x20] sm:$0x1] %v293
        %v295 = vld [vmem:[#allocation2 + $0x30] sm:$0x1]
        %v296 = vsel %vm285, 0, %v295
        %297 = vst [vmem:[#allocation2 + $0x30] sm:$0x1] %v296
        %v298 = vld [vmem:[#allocation2 + $0x40] sm:$0x1]
        %v299 = vsel %vm285, 0, %v298
        %300 = vst [vmem:[#allocation2 + $0x40] sm:$0x1] %v299
        %v301 = vld [vmem:[#allocation2 + $0x50] sm:$0x1]
        %v302 = vsel %vm285, 0, %v301
        %303 = vst [vmem:[#allocation2 + $0x50] sm:$0x1] %v302
        %v304 = vld [vmem:[#allocation2 + $0x60] sm:$0x1]
        %v305 = vsel %vm285, 0, %v304
        %306 = vst [vmem:[#allocation2 + $0x60] sm:$0x1] %v305
        %v307 = vld [vmem:[#allocation2 + $0x70] sm:$0x1]
        %v308 = vsel %vm285, 0, %v307
        %309 = vst [vmem:[#allocation2 + $0x70] sm:$0x1] %v308
        %v310 = vld [vmem:[#allocation2 + $0x80] sm:$0x1]
        %v311 = vsel %vm285, 0, %v310
        %312 = vst [vmem:[#allocation2 + $0x80] sm:$0x1] %v311
        %v313 = vld [vmem:[#allocation2 + $0x90] sm:$0x1]
        %v314 = vsel %vm285, 0, %v313
        %315 = vst [vmem:[#allocation2 + $0x90] sm:$0x1] %v314
        %v316 = vld [vmem:[#allocation2 + $0xa0] sm:$0x1]
        %v317 = vsel %vm285, 0, %v316
        %318 = vst [vmem:[#allocation2 + $0xa0] sm:$0x1] %v317
        %v319 = vld [vmem:[#allocation2 + $0xb0] sm:$0x1]
        %v320 = vsel %vm285, 0, %v319
        %321 = vst [vmem:[#allocation2 + $0xb0] sm:$0x1] %v320
        %v322 = vld [vmem:[#allocation2 + $0xc0] sm:$0x1]
        %v323 = vsel %vm285, 0, %v322
        %324 = vst [vmem:[#allocation2 + $0xc0] sm:$0x1] %v323
        %v325 = vld [vmem:[#allocation2 + $0xd0] sm:$0x1]
        %v326 = vsel %vm285, 0, %v325
        %327 = vst [vmem:[#allocation2 + $0xd0] sm:$0x1] %v326
        %v328 = vld [vmem:[#allocation2 + $0xe0] sm:$0x1]
        %v329 = vsel %vm285, 0, %v328
        %330 = vst [vmem:[#allocation2 + $0xe0] sm:$0x1] %v329
        %v331 = vld [vmem:[#allocation2 + $0xf0] sm:$0x1]
        %v332 = vsel %vm285, 0, %v331
        %333 = vst [vmem:[#allocation2 + $0xf0] sm:$0x1] %v332
        %v334 = vld [vmem:[#allocation2 + $0x100] sm:$0x1]
        %v335 = vsel %vm285, 0, %v334
        %336 = vst [vmem:[#allocation2 + $0x100] sm:$0x1] %v335
        %v337 = vld [vmem:[#allocation2 + $0x110] sm:$0x1]
        %v338 = vsel %vm285, 0, %v337
        %339 = vst [vmem:[#allocation2 + $0x110] sm:$0x1] %v338
        %vm340 = vsmask.f32 7938
        %vm341 = vmand %vm283, %vm340
        %v342 = vld [vmem:[#allocation2 + $0x8] sm:$0x1]
        %v343 = vsel %vm341, 0, %v342
        %344 = vst [vmem:[#allocation2 + $0x8] sm:$0x1] %v343
        %v345 = vld [vmem:[#allocation2 + $0x18] sm:$0x1]
        %v346 = vsel %vm341, 0, %v345
        %347 = vst [vmem:[#allocation2 + $0x18] sm:$0x1] %v346
        %v348 = vld [vmem:[#allocation2 + $0x28] sm:$0x1]
        %v349 = vsel %vm341, 0, %v348
        %350 = vst [vmem:[#allocation2 + $0x28] sm:$0x1] %v349
        %v351 = vld [vmem:[#allocation2 + $0x38] sm:$0x1]
        %v352 = vsel %vm341, 0, %v351
        %353 = vst [vmem:[#allocation2 + $0x38] sm:$0x1] %v352
        %v354 = vld [vmem:[#allocation2 + $0x48] sm:$0x1]
        %v355 = vsel %vm341, 0, %v354
        %356 = vst [vmem:[#allocation2 + $0x48] sm:$0x1] %v355
        %v357 = vld [vmem:[#allocation2 + $0x58] sm:$0x1]
        %v358 = vsel %vm341, 0, %v357
        %359 = vst [vmem:[#allocation2 + $0x58] sm:$0x1] %v358
        %v360 = vld [vmem:[#allocation2 + $0x68] sm:$0x1]
        %v361 = vsel %vm341, 0, %v360
        %362 = vst [vmem:[#allocation2 + $0x68] sm:$0x1] %v361
        %v363 = vld [vmem:[#allocation2 + $0x78] sm:$0x1]
        %v364 = vsel %vm341, 0, %v363
        %365 = vst [vmem:[#allocation2 + $0x78] sm:$0x1] %v364
        %v366 = vld [vmem:[#allocation2 + $0x88] sm:$0x1]
        %v367 = vsel %vm341, 0, %v366
        %368 = vst [vmem:[#allocation2 + $0x88] sm:$0x1] %v367
        %v369 = vld [vmem:[#allocation2 + $0x98] sm:$0x1]
        %v370 = vsel %vm341, 0, %v369
        %371 = vst [vmem:[#allocation2 + $0x98] sm:$0x1] %v370
        %v372 = vld [vmem:[#allocation2 + $0xa8] sm:$0x1]
        %v373 = vsel %vm341, 0, %v372
        %374 = vst [vmem:[#allocation2 + $0xa8] sm:$0x1] %v373
        %v375 = vld [vmem:[#allocation2 + $0xb8] sm:$0x1]
        %v376 = vsel %vm341, 0, %v375
        %377 = vst [vmem:[#allocation2 + $0xb8] sm:$0x1] %v376
        %v378 = vld [vmem:[#allocation2 + $0xc8] sm:$0x1]
        %v379 = vsel %vm341, 0, %v378
        %380 = vst [vmem:[#allocation2 + $0xc8] sm:$0x1] %v379
        %v381 = vld [vmem:[#allocation2 + $0xd8] sm:$0x1]
        %v382 = vsel %vm341, 0, %v381
        %383 = vst [vmem:[#allocation2 + $0xd8] sm:$0x1] %v382
        %v384 = vld [vmem:[#allocation2 + $0xe8] sm:$0x1]
        %v385 = vsel %vm341, 0, %v384
        %386 = vst [vmem:[#allocation2 + $0xe8] sm:$0x1] %v385
        %v387 = vld [vmem:[#allocation2 + $0xf8] sm:$0x1]
        %v388 = vsel %vm341, 0, %v387
        %389 = vst [vmem:[#allocation2 + $0xf8] sm:$0x1] %v388
        %v390 = vld [vmem:[#allocation2 + $0x108] sm:$0x1]
        %v391 = vsel %vm341, 0, %v390
        %392 = vst [vmem:[#allocation2 + $0x108] sm:$0x1] %v391
        %v393 = vld [vmem:[#allocation2 + $0x118] sm:$0x1]
        %v394 = vsel %vm341, 0, %v393
        %395 = vst [vmem:[#allocation2 + $0x118] sm:$0x1] %v394
        %v396 = vld [vmem:[%s276] sm:$0xff]
        %v397 = vld [vmem:[%s276 + $0x8] sm:$0xff]
        %v398 = vld [vmem:[%s276 + $0x10] sm:$0xff]
        %v399 = vld [vmem:[%s276 + $0x18] sm:$0xff]
        %v400 = vld [vmem:[%s276 + $0x20] sm:$0xff]
        %v401 = vld [vmem:[%s276 + $0x28] sm:$0xff]
        %v402 = vld [vmem:[%s276 + $0x30] sm:$0xff]
        %v403 = vld [vmem:[%s276 + $0x38] sm:$0xff]
        %v404 = vld [vmem:[%s276 + $0x40] sm:$0xff]
        %v405 = vld [vmem:[%s276 + $0x48] sm:$0xff]
        %v406 = vld [vmem:[%s276 + $0x50] sm:$0xff]
        %v407 = vld [vmem:[%s276 + $0x58] sm:$0xff]
        %v408 = vld [vmem:[%s276 + $0x60] sm:$0xff]
        %v409 = vld [vmem:[%s276 + $0x68] sm:$0xff]
        %v410 = vld [vmem:[%s276 + $0x70] sm:$0xff]
        %v411 = vld [vmem:[%s276 + $0x78] sm:$0xff]
        %v412 = vld [vmem:[%s276 + $0x80] sm:$0xff]
        %v413 = vld [vmem:[%s276 + $0x88] sm:$0xff]
        %v414 = vld [vmem:[%s276 + $0x90] sm:$0xff]
        %v415 = vld [vmem:[%s276 + $0x98] sm:$0xff]
        %v416 = vld [vmem:[%s276 + $0xa0] sm:$0xff]
        %v417 = vld [vmem:[%s276 + $0xa8] sm:$0xff]
        %v418 = vld [vmem:[%s276 + $0xb0] sm:$0xff]
        %v419 = vld [vmem:[%s276 + $0xb8] sm:$0xff]
        %v420 = vld [vmem:[%s276 + $0xc0] sm:$0xff]
        %v421 = vld [vmem:[%s276 + $0xc8] sm:$0xff]
        %v422 = vld [vmem:[%s276 + $0xd0] sm:$0xff]
        %v423 = vld [vmem:[%s276 + $0xd8] sm:$0xff]
        %v424 = vld [vmem:[%s276 + $0xe0] sm:$0xff]
        %v425 = vld [vmem:[%s276 + $0xe8] sm:$0xff]
        %v426 = vld [vmem:[%s276 + $0xf0] sm:$0xff]
        %v427 = vld [vmem:[%s276 + $0xf8] sm:$0xff]
        %v428 = vld [vmem:[%s1] sm:$0xf]
        %v429 = vld [vmem:[%s1 + $0x4] sm:$0xf]
        %v430 = vld [vmem:[%s1 + $0x8] sm:$0xf]
        %v431 = vld [vmem:[%s1 + $0xc] sm:$0xf]
        %v432 = vld [vmem:[%s1 + $0x10] sm:$0xf]
        %v433 = vld [vmem:[%s1 + $0x14] sm:$0xf]
        %v434 = vld [vmem:[%s1 + $0x18] sm:$0xf]
        %v435 = vld [vmem:[%s1 + $0x1c] sm:$0xf]
        %v436 = vld [vmem:[%s1 + $0x20] sm:$0xf]
        %v437 = vld [vmem:[%s1 + $0x24] sm:$0xf]
        %v438 = vld [vmem:[%s1 + $0x28] sm:$0xf]
        %v439 = vld [vmem:[%s1 + $0x2c] sm:$0xf]
        %v440 = vld [vmem:[%s1 + $0x30] sm:$0xf]
        %v441 = vld [vmem:[%s1 + $0x34] sm:$0xf]
        %v442 = vld [vmem:[%s1 + $0x38] sm:$0xf]
        %v443 = vld [vmem:[%s1 + $0x3c] sm:$0xf]
        %v444 = vld [vmem:[%s1 + $0x40] sm:$0xf]
        %v445 = vld [vmem:[%s1 + $0x44] sm:$0xf]
        %v446 = vld [vmem:[%s1 + $0x48] sm:$0xf]
        %v447 = vld [vmem:[%s1 + $0x4c] sm:$0xf]
        %v448 = vld [vmem:[%s1 + $0x50] sm:$0xf]
        %v449 = vld [vmem:[%s1 + $0x54] sm:$0xf]
        %v450 = vld [vmem:[%s1 + $0x58] sm:$0xf]
        %v451 = vld [vmem:[%s1 + $0x5c] sm:$0xf]
        %v452 = vld [vmem:[%s1 + $0x60] sm:$0xf]
        %v453 = vld [vmem:[%s1 + $0x64] sm:$0xf]
        %v454 = vld [vmem:[%s1 + $0x68] sm:$0xf]
        %v455 = vld [vmem:[%s1 + $0x6c] sm:$0xf]
        %v456 = vld [vmem:[%s1 + $0x70] sm:$0xf]
        %v457 = vld [vmem:[%s1 + $0x74] sm:$0xf]
        %v458 = vld [vmem:[%s1 + $0x78] sm:$0xf]
        %v459 = vld [vmem:[%s1 + $0x7c] sm:$0xf]
        %v492 = vunpack.c.l.b16 %v396
        %v493 = vunpack.c.h.b16 %v396
        %v494 = vunpack.c.l.b16 %v397
        %v495 = vunpack.c.h.b16 %v397
        %v496 = vunpack.c.l.b16 %v398
        %v497 = vunpack.c.h.b16 %v398
        %v498 = vunpack.c.l.b16 %v399
        %v499 = vunpack.c.h.b16 %v399
        %v500 = vunpack.c.l.b16 %v400
        %v501 = vunpack.c.h.b16 %v400
        %v502 = vunpack.c.l.b16 %v401
        %v503 = vunpack.c.h.b16 %v401
        %v504 = vunpack.c.l.b16 %v402
        %v505 = vunpack.c.h.b16 %v402
        %v506 = vunpack.c.l.b16 %v403
        %v507 = vunpack.c.h.b16 %v403
        %v508 = vunpack.c.l.b16 %v404
        %v509 = vunpack.c.h.b16 %v404
        %v510 = vunpack.c.l.b16 %v405
        %v511 = vunpack.c.h.b16 %v405
        %v512 = vunpack.c.l.b16 %v406
        %v513 = vunpack.c.h.b16 %v406
        %v514 = vunpack.c.l.b16 %v407
        %v515 = vunpack.c.h.b16 %v407
        %v516 = vunpack.c.l.b16 %v408
        %v517 = vunpack.c.h.b16 %v408
        %v518 = vunpack.c.l.b16 %v409
        %v519 = vunpack.c.h.b16 %v409
        %v520 = vunpack.c.l.b16 %v410
        %v521 = vunpack.c.h.b16 %v410
        %v522 = vunpack.c.l.b16 %v411
        %v523 = vunpack.c.h.b16 %v411
        %v524 = vunpack.c.l.b16 %v412
        %v525 = vunpack.c.h.b16 %v412
        %v526 = vunpack.c.l.b16 %v413
        %v527 = vunpack.c.h.b16 %v413
        %v528 = vunpack.c.l.b16 %v414
        %v529 = vunpack.c.h.b16 %v414
        %v530 = vunpack.c.l.b16 %v415
        %v531 = vunpack.c.h.b16 %v415
        %v532 = vunpack.c.l.b16 %v416
        %v533 = vunpack.c.h.b16 %v416
        %v534 = vunpack.c.l.b16 %v417
        %v535 = vunpack.c.h.b16 %v417
        %v536 = vunpack.c.l.b16 %v418
        %v537 = vunpack.c.h.b16 %v418
        %v538 = vunpack.c.l.b16 %v419
        %v539 = vunpack.c.h.b16 %v419
        %v540 = vunpack.c.l.b16 %v420
        %v541 = vunpack.c.h.b16 %v420
        %v542 = vunpack.c.l.b16 %v421
        %v543 = vunpack.c.h.b16 %v421
        %v544 = vunpack.c.l.b16 %v422
        %v545 = vunpack.c.h.b16 %v422
        %v546 = vunpack.c.l.b16 %v423
        %v547 = vunpack.c.h.b16 %v423
        %v548 = vunpack.c.l.b16 %v424
        %v549 = vunpack.c.h.b16 %v424
        %v550 = vunpack.c.l.b16 %v425
        %v551 = vunpack.c.h.b16 %v425
        %v552 = vunpack.c.l.b16 %v426
        %v553 = vunpack.c.h.b16 %v426
        %v554 = vunpack.c.l.b16 %v427
        %v555 = vunpack.c.h.b16 %v427
        %v556 = vpack.c.b16 %v494, %v492
        %v557 = vpack.c.b16 %v495, %v493
        %v558 = vpack.c.b16 %v498, %v496
        %v559 = vpack.c.b16 %v499, %v497
        %v560 = vpack.c.b16 %v502, %v500
        %v561 = vpack.c.b16 %v503, %v501
        %v562 = vpack.c.b16 %v506, %v504
        %v563 = vpack.c.b16 %v507, %v505
        %v564 = vpack.c.b16 %v510, %v508
        %v565 = vpack.c.b16 %v511, %v509
        %v566 = vpack.c.b16 %v514, %v512
        %v567 = vpack.c.b16 %v515, %v513
        %v568 = vpack.c.b16 %v518, %v516
        %v569 = vpack.c.b16 %v519, %v517
        %v570 = vpack.c.b16 %v522, %v520
        %v571 = vpack.c.b16 %v523, %v521
        %v572 = vpack.c.b16 %v526, %v524
        %v573 = vpack.c.b16 %v527, %v525
        %v574 = vpack.c.b16 %v530, %v528
        %v575 = vpack.c.b16 %v531, %v529
        %v576 = vpack.c.b16 %v534, %v532
        %v577 = vpack.c.b16 %v535, %v533
        %v578 = vpack.c.b16 %v538, %v536
        %v579 = vpack.c.b16 %v539, %v537
        %v580 = vpack.c.b16 %v542, %v540
        %v581 = vpack.c.b16 %v543, %v541
        %v582 = vpack.c.b16 %v546, %v544
        %v583 = vpack.c.b16 %v547, %v545
        %v584 = vpack.c.b16 %v550, %v548
        %v585 = vpack.c.b16 %v551, %v549
        %v586 = vpack.c.b16 %v554, %v552
        %v587 = vpack.c.b16 %v555, %v553
        %v652 = vunpack.c.l.b16 %v428
        %v653 = vunpack.c.l.b16 %v429
        %v654 = vunpack.c.l.b16 %v430
        %v655 = vunpack.c.l.b16 %v431
        %v656 = vunpack.c.l.b16 %v432
        %v657 = vunpack.c.l.b16 %v433
        %v658 = vunpack.c.l.b16 %v434
        %v659 = vunpack.c.l.b16 %v435
        %v660 = vunpack.c.l.b16 %v436
        %v661 = vunpack.c.l.b16 %v437
        %v662 = vunpack.c.l.b16 %v438
        %v663 = vunpack.c.l.b16 %v439
        %v664 = vunpack.c.l.b16 %v440
        %v665 = vunpack.c.l.b16 %v441
        %v666 = vunpack.c.l.b16 %v442
        %v667 = vunpack.c.l.b16 %v443
        %v668 = vunpack.c.l.b16 %v444
        %v669 = vunpack.c.l.b16 %v445
        %v670 = vunpack.c.l.b16 %v446
        %v671 = vunpack.c.l.b16 %v447
        %v672 = vunpack.c.l.b16 %v448
        %v673 = vunpack.c.l.b16 %v449
        %v674 = vunpack.c.l.b16 %v450
        %v675 = vunpack.c.l.b16 %v451
        %v676 = vunpack.c.l.b16 %v452
        %v677 = vunpack.c.l.b16 %v453
        %v678 = vunpack.c.l.b16 %v454
        %v679 = vunpack.c.l.b16 %v455
        %v680 = vunpack.c.l.b16 %v456
        %v681 = vunpack.c.l.b16 %v457
        %v682 = vunpack.c.l.b16 %v458
        %v683 = vunpack.c.l.b16 %v459
        %v684 = vpack.c.b16 %v653, %v652
        %v685 = vpack.c.b16 %v655, %v654
        %v686 = vpack.c.b16 %v657, %v656
        %v687 = vpack.c.b16 %v659, %v658
        %v688 = vpack.c.b16 %v661, %v660
        %v689 = vpack.c.b16 %v663, %v662
        %v690 = vpack.c.b16 %v665, %v664
        %v691 = vpack.c.b16 %v667, %v666
        %v692 = vpack.c.b16 %v669, %v668
        %v693 = vpack.c.b16 %v671, %v670
        %v694 = vpack.c.b16 %v673, %v672
        %v695 = vpack.c.b16 %v675, %v674
        %v696 = vpack.c.b16 %v677, %v676
        %v697 = vpack.c.b16 %v679, %v678
        %v698 = vpack.c.b16 %v681, %v680
        %v699 = vpack.c.b16 %v683, %v682
        %716 = vmatprep.subr.bf16.mxu0 0
        %717 = vmatpush1.bf16.msra.mxu0 %v684
        %718 = vmatprep.subr.bf16.mxu0 0
        %719 = vmatpush1.bf16.msra.mxu0 %v685
        %720 = vmatprep.subr.bf16.mxu0 0
        %721 = vmatpush1.bf16.msra.mxu0 %v686
        %722 = vmatprep.subr.bf16.mxu0 0
        %723 = vmatpush1.bf16.msra.mxu0 %v687
        %724 = vmatprep.subr.bf16.mxu0 0
        %725 = vmatpush1.bf16.msra.mxu0 %v688
        %726 = vmatprep.subr.bf16.mxu0 0
        %727 = vmatpush1.bf16.msra.mxu0 %v689
        %728 = vmatprep.subr.bf16.mxu0 0
        %729 = vmatpush1.bf16.msra.mxu0 %v690
        %730 = vmatprep.subr.bf16.mxu0 0
        %731 = vmatpush1.bf16.msra.mxu0 %v691
        %732 = vmatprep.subr.bf16.mxu0 0
        %733 = vmatpush1.bf16.msra.mxu0 %v692
        %734 = vmatprep.subr.bf16.mxu0 0
        %735 = vmatpush1.bf16.msra.mxu0 %v693
        %736 = vmatprep.subr.bf16.mxu0 0
        %737 = vmatpush1.bf16.msra.mxu0 %v694
        %738 = vmatprep.subr.bf16.mxu0 0
        %739 = vmatpush1.bf16.msra.mxu0 %v695
        %740 = vmatprep.subr.bf16.mxu0 0
        %741 = vmatpush1.bf16.msra.mxu0 %v696
        %742 = vmatprep.subr.bf16.mxu0 0
        %743 = vmatpush1.bf16.msra.mxu0 %v697
        %744 = vmatprep.subr.bf16.mxu0 0
        %745 = vmatpush1.bf16.msra.mxu0 %v698
        %746 = vmatprep.subr.bf16.mxu0 0
        %747 = vmatpush1.bf16.msra.mxu0 %v699
        %748 = vmatprep.mubr.bf16.mxu0 %v557
        %749 = vmatmul.mubr.bf16.gmra.mrb[0].mxu0 %v556
        %v750 = vpop.f32.mrb[0].mxu0
        %v751 = vadd.f32 0.0, %v750
        %v752 = vpop.f32.mrb[0].mxu0
        %v753 = vpop.f32.mrb[0].mxu0
        %v754 = vadd.f32 0.0, %v753
        %v755 = vpop.f32.mrb[0].mxu0
        %756 = vmatprep.mubr.bf16.mxu0 %v559
        %757 = vmatmul.mubr.bf16.gmra.mrb[0].mxu0 %v558
        %v758 = vpop.f32.mrb[0].mxu0
        %v759 = vadd.f32 0.0, %v758
        %v760 = vpop.f32.mrb[0].mxu0
        %v761 = vpop.f32.mrb[0].mxu0
        %v762 = vadd.f32 0.0, %v761
        %v763 = vpop.f32.mrb[0].mxu0
        %764 = vmatprep.mubr.bf16.mxu0 %v561
        %765 = vmatmul.mubr.bf16.gmra.mrb[0].mxu0 %v560
        %v766 = vpop.f32.mrb[0].mxu0
        %v767 = vadd.f32 0.0, %v766
        %v768 = vpop.f32.mrb[0].mxu0
        %v769 = vpop.f32.mrb[0].mxu0
        %v770 = vadd.f32 0.0, %v769
        %v771 = vpop.f32.mrb[0].mxu0
        %772 = vmatprep.mubr.bf16.mxu0 %v563
        %773 = vmatmul.mubr.bf16.gmra.mrb[0].mxu0 %v562
        %v774 = vpop.f32.mrb[0].mxu0
        %v775 = vadd.f32 0.0, %v774
        %v776 = vpop.f32.mrb[0].mxu0
        %v777 = vpop.f32.mrb[0].mxu0
        %v778 = vadd.f32 0.0, %v777
        %v779 = vpop.f32.mrb[0].mxu0
        %780 = vmatprep.mubr.bf16.mxu0 %v565
        %781 = vmatmul.mubr.bf16.gmra.mrb[0].mxu0 %v564
        %v782 = vpop.f32.mrb[0].mxu0
        %v783 = vadd.f32 0.0, %v782
        %v784 = vpop.f32.mrb[0].mxu0
        %v785 = vpop.f32.mrb[0].mxu0
        %v786 = vadd.f32 0.0, %v785
        %v787 = vpop.f32.mrb[0].mxu0
        %788 = vmatprep.mubr.bf16.mxu0 %v567
        %789 = vmatmul.mubr.bf16.gmra.mrb[0].mxu0 %v566
        %v790 = vpop.f32.mrb[0].mxu0
        %v791 = vadd.f32 0.0, %v790
        %v792 = vpop.f32.mrb[0].mxu0
        %v793 = vpop.f32.mrb[0].mxu0
        %v794 = vadd.f32 0.0, %v793
        %v795 = vpop.f32.mrb[0].mxu0
        %796 = vmatprep.mubr.bf16.mxu0 %v569
        %797 = vmatmul.mubr.bf16.gmra.mrb[0].mxu0 %v568
        %v798 = vpop.f32.mrb[0].mxu0
        %v799 = vadd.f32 0.0, %v798
        %v800 = vpop.f32.mrb[0].mxu0
        %v801 = vpop.f32.mrb[0].mxu0
        %v802 = vadd.f32 0.0, %v801
        %v803 = vpop.f32.mrb[0].mxu0
        %804 = vmatprep.mubr.bf16.mxu0 %v571
        %805 = vmatmul.mubr.bf16.gmra.mrb[0].mxu0 %v570
        %v806 = vpop.f32.mrb[0].mxu0
        %v807 = vadd.f32 0.0, %v806
        %v808 = vpop.f32.mrb[0].mxu0
        %v809 = vpop.f32.mrb[0].mxu0
        %v810 = vadd.f32 0.0, %v809
        %v811 = vpop.f32.mrb[0].mxu0
        %812 = vmatprep.mubr.bf16.mxu0 %v573
        %813 = vmatmul.mubr.bf16.gmra.mrb[0].mxu0 %v572
        %v814 = vpop.f32.mrb[0].mxu0
        %v815 = vadd.f32 0.0, %v814
        %v816 = vpop.f32.mrb[0].mxu0
        %v817 = vpop.f32.mrb[0].mxu0
        %v818 = vadd.f32 0.0, %v817
        %v819 = vpop.f32.mrb[0].mxu0
        %820 = vmatprep.mubr.bf16.mxu0 %v575
        %821 = vmatmul.mubr.bf16.gmra.mrb[0].mxu0 %v574
        %v822 = vpop.f32.mrb[0].mxu0
        %v823 = vadd.f32 0.0, %v822
        %v824 = vpop.f32.mrb[0].mxu0
        %v825 = vpop.f32.mrb[0].mxu0
        %v826 = vadd.f32 0.0, %v825
        %v827 = vpop.f32.mrb[0].mxu0
        %828 = vmatprep.mubr.bf16.mxu0 %v577
        %829 = vmatmul.mubr.bf16.gmra.mrb[0].mxu0 %v576
        %v830 = vpop.f32.mrb[0].mxu0
        %v831 = vadd.f32 0.0, %v830
        %v832 = vpop.f32.mrb[0].mxu0
        %v833 = vpop.f32.mrb[0].mxu0
        %v834 = vadd.f32 0.0, %v833
        %v835 = vpop.f32.mrb[0].mxu0
        %836 = vmatprep.mubr.bf16.mxu0 %v579
        %837 = vmatmul.mubr.bf16.gmra.mrb[0].mxu0 %v578
        %v838 = vpop.f32.mrb[0].mxu0
        %v839 = vadd.f32 0.0, %v838
        %v840 = vpop.f32.mrb[0].mxu0
        %v841 = vpop.f32.mrb[0].mxu0
        %v842 = vadd.f32 0.0, %v841
        %v843 = vpop.f32.mrb[0].mxu0
        %844 = vmatprep.mubr.bf16.mxu0 %v581
        %845 = vmatmul.mubr.bf16.gmra.mrb[0].mxu0 %v580
        %v846 = vpop.f32.mrb[0].mxu0
        %v847 = vadd.f32 0.0, %v846
        %v848 = vpop.f32.mrb[0].mxu0
        %v849 = vpop.f32.mrb[0].mxu0
        %v850 = vadd.f32 0.0, %v849
        %v851 = vpop.f32.mrb[0].mxu0
        %852 = vmatprep.mubr.bf16.mxu0 %v583
        %853 = vmatmul.mubr.bf16.gmra.mrb[0].mxu0 %v582
        %v854 = vpop.f32.mrb[0].mxu0
        %v855 = vadd.f32 0.0, %v854
        %v856 = vpop.f32.mrb[0].mxu0
        %v857 = vpop.f32.mrb[0].mxu0
        %v858 = vadd.f32 0.0, %v857
        %v859 = vpop.f32.mrb[0].mxu0
        %860 = vmatprep.mubr.bf16.mxu0 %v585
        %861 = vmatmul.mubr.bf16.gmra.mrb[0].mxu0 %v584
        %v862 = vpop.f32.mrb[0].mxu0
        %v863 = vadd.f32 0.0, %v862
        %v864 = vpop.f32.mrb[0].mxu0
        %v865 = vpop.f32.mrb[0].mxu0
        %v866 = vadd.f32 0.0, %v865
        %v867 = vpop.f32.mrb[0].mxu0
        %868 = vmatprep.mubr.bf16.mxu0 %v587
        %869 = vmatmul.mubr.bf16.gmra.mrb[0].mxu0 %v586
        %v870 = vpop.f32.mrb[0].mxu0
        %v871 = vadd.f32 0.0, %v870
        %v872 = vpop.f32.mrb[0].mxu0
        %v873 = vpop.f32.mrb[0].mxu0
        %v874 = vadd.f32 0.0, %v873
        %v875 = vpop.f32.mrb[0].mxu0
        %876 = vdwg.mxu0
        %v877 = vld [vmem:[%s2] sm:$0x1]
        %v878 = vlaneseq
        %v879 = vshrl.u32 %v878, 7
        %v880 = vsub.s32 0, %v879
        %v881 = vrot.slane %v877, %v880
        %v882 = vmul.f32 %v751, %v881
        %v883 = vmul.f32 %v754, %v881
        %v884 = vmul.f32 %v759, %v881
        %v885 = vmul.f32 %v762, %v881
        %v886 = vmul.f32 %v767, %v881
        %v887 = vmul.f32 %v770, %v881
        %v888 = vmul.f32 %v775, %v881
        %v889 = vmul.f32 %v778, %v881
        %v890 = vmul.f32 %v783, %v881
        %v891 = vmul.f32 %v786, %v881
        %v892 = vmul.f32 %v791, %v881
        %v893 = vmul.f32 %v794, %v881
        %v894 = vmul.f32 %v799, %v881
        %v895 = vmul.f32 %v802, %v881
        %v896 = vmul.f32 %v807, %v881
        %v897 = vmul.f32 %v810, %v881
        %v898 = vmul.f32 %v815, %v881
        %v899 = vmul.f32 %v818, %v881
        %v900 = vmul.f32 %v823, %v881
        %v901 = vmul.f32 %v826, %v881
        %v902 = vmul.f32 %v831, %v881
        %v903 = vmul.f32 %v834, %v881
        %v904 = vmul.f32 %v839, %v881
        %v905 = vmul.f32 %v842, %v881
        %v906 = vmul.f32 %v847, %v881
        %v907 = vmul.f32 %v850, %v881
        %v908 = vmul.f32 %v855, %v881
        %v909 = vmul.f32 %v858, %v881
        %v910 = vmul.f32 %v863, %v881
        %v911 = vmul.f32 %v866, %v881
        %v912 = vmul.f32 %v871, %v881
        %v913 = vmul.f32 %v874, %v881
        %v914 = vld [vmem:[%s2 + $0x1] sm:$0x1]
        %v915 = vlaneseq
        %v916 = vshrl.u32 %v915, 7
        %v917 = vsub.s32 0, %v916
        %v918 = vrot.slane %v914, %v917
        %v919 = vadd.f32 %v882, %v918
        %v920 = vadd.f32 %v883, %v918
        %v921 = vadd.f32 %v884, %v918
        %v922 = vadd.f32 %v885, %v918
        %v923 = vadd.f32 %v886, %v918
        %v924 = vadd.f32 %v887, %v918
        %v925 = vadd.f32 %v888, %v918
        %v926 = vadd.f32 %v889, %v918
        %v927 = vadd.f32 %v890, %v918
        %v928 = vadd.f32 %v891, %v918
        %v929 = vadd.f32 %v892, %v918
        %v930 = vadd.f32 %v893, %v918
        %v931 = vadd.f32 %v894, %v918
        %v932 = vadd.f32 %v895, %v918
        %v933 = vadd.f32 %v896, %v918
        %v934 = vadd.f32 %v897, %v918
        %v935 = vadd.f32 %v898, %v918
        %v936 = vadd.f32 %v899, %v918
        %v937 = vadd.f32 %v900, %v918
        %v938 = vadd.f32 %v901, %v918
        %v939 = vadd.f32 %v902, %v918
        %v940 = vadd.f32 %v903, %v918
        %v941 = vadd.f32 %v904, %v918
        %v942 = vadd.f32 %v905, %v918
        %v943 = vadd.f32 %v906, %v918
        %v944 = vadd.f32 %v907, %v918
        %v945 = vadd.f32 %v908, %v918
        %v946 = vadd.f32 %v909, %v918
        %v947 = vadd.f32 %v910, %v918
        %v948 = vadd.f32 %v911, %v918
        %v949 = vadd.f32 %v912, %v918
        %v950 = vadd.f32 %v913, %v918
        %v951 = vmax.f32 %v919, 0.0
        %v952 = vmax.f32 %v920, 0.0
        %v953 = vmax.f32 %v921, 0.0
        %v954 = vmax.f32 %v922, 0.0
        %v955 = vmax.f32 %v923, 0.0
        %v956 = vmax.f32 %v924, 0.0
        %v957 = vmax.f32 %v925, 0.0
        %v958 = vmax.f32 %v926, 0.0
        %v959 = vmax.f32 %v927, 0.0
        %v960 = vmax.f32 %v928, 0.0
        %v961 = vmax.f32 %v929, 0.0
        %v962 = vmax.f32 %v930, 0.0
        %v963 = vmax.f32 %v931, 0.0
        %v964 = vmax.f32 %v932, 0.0
        %v965 = vmax.f32 %v933, 0.0
        %v966 = vmax.f32 %v934, 0.0
        %v967 = vmax.f32 %v935, 0.0
        %v968 = vmax.f32 %v936, 0.0
        %v969 = vmax.f32 %v937, 0.0
        %v970 = vmax.f32 %v938, 0.0
        %v971 = vmax.f32 %v939, 0.0
        %v972 = vmax.f32 %v940, 0.0
        %v973 = vmax.f32 %v941, 0.0
        %v974 = vmax.f32 %v942, 0.0
        %v975 = vmax.f32 %v943, 0.0
        %v976 = vmax.f32 %v944, 0.0
        %v977 = vmax.f32 %v945, 0.0
        %v978 = vmax.f32 %v946, 0.0
        %v979 = vmax.f32 %v947, 0.0
        %v980 = vmax.f32 %v948, 0.0
        %v981 = vmax.f32 %v949, 0.0
        %v982 = vmax.f32 %v950, 0.0
        %v983 = vpack.c.bf16 %v952, %v951
        %v984 = vpack.c.bf16 %v954, %v953
        %v985 = vpack.c.bf16 %v956, %v955
        %v986 = vpack.c.bf16 %v958, %v957
        %v987 = vpack.c.bf16 %v960, %v959
        %v988 = vpack.c.bf16 %v962, %v961
        %v989 = vpack.c.bf16 %v964, %v963
        %v990 = vpack.c.bf16 %v966, %v965
        %v991 = vpack.c.bf16 %v968, %v967
        %v992 = vpack.c.bf16 %v970, %v969
        %v993 = vpack.c.bf16 %v972, %v971
        %v994 = vpack.c.bf16 %v974, %v973
        %v995 = vpack.c.bf16 %v976, %v975
        %v996 = vpack.c.bf16 %v978, %v977
        %v997 = vpack.c.bf16 %v980, %v979
        %v998 = vpack.c.bf16 %v982, %v981
        %v1000 = vshrl.u32 %v983, 16
        %v1002 = vrot.slane %v1000, 7
        %v1003 = vshll.u32 %v983, 16
        %v1005 = vor.u32 %v1002, %v1003
        %v1007 = vshrl.u32 %v984, 16
        %v1009 = vrot.slane %v1007, 7
        %v1010 = vshll.u32 %v984, 16
        %v1012 = vor.u32 %v1009, %v1010
        %v1014 = vshrl.u32 %v985, 16
        %v1016 = vrot.slane %v1014, 7
        %v1017 = vshll.u32 %v985, 16
        %v1019 = vor.u32 %v1016, %v1017
        %v1021 = vshrl.u32 %v986, 16
        %v1023 = vrot.slane %v1021, 7
        %v1024 = vshll.u32 %v986, 16
        %v1026 = vor.u32 %v1023, %v1024
        %v1028 = vshrl.u32 %v987, 16
        %v1030 = vrot.slane %v1028, 7
        %v1031 = vshll.u32 %v987, 16
        %v1033 = vor.u32 %v1030, %v1031
        %v1035 = vshrl.u32 %v988, 16
        %v1037 = vrot.slane %v1035, 7
        %v1038 = vshll.u32 %v988, 16
        %v1040 = vor.u32 %v1037, %v1038
        %v1042 = vshrl.u32 %v989, 16
        %v1044 = vrot.slane %v1042, 7
        %v1045 = vshll.u32 %v989, 16
        %v1047 = vor.u32 %v1044, %v1045
        %v1049 = vshrl.u32 %v990, 16
        %v1051 = vrot.slane %v1049, 7
        %v1052 = vshll.u32 %v990, 16
        %v1054 = vor.u32 %v1051, %v1052
        %v1056 = vshrl.u32 %v991, 16
        %v1058 = vrot.slane %v1056, 7
        %v1059 = vshll.u32 %v991, 16
        %v1061 = vor.u32 %v1058, %v1059
        %v1063 = vshrl.u32 %v992, 16
        %v1065 = vrot.slane %v1063, 7
        %v1066 = vshll.u32 %v992, 16
        %v1068 = vor.u32 %v1065, %v1066
        %v1070 = vshrl.u32 %v993, 16
        %v1072 = vrot.slane %v1070, 7
        %v1073 = vshll.u32 %v993, 16
        %v1075 = vor.u32 %v1072, %v1073
        %v1077 = vshrl.u32 %v994, 16
        %v1079 = vrot.slane %v1077, 7
        %v1080 = vshll.u32 %v994, 16
        %v1082 = vor.u32 %v1079, %v1080
        %v1084 = vshrl.u32 %v995, 16
        %v1086 = vrot.slane %v1084, 7
        %v1087 = vshll.u32 %v995, 16
        %v1089 = vor.u32 %v1086, %v1087
        %v1091 = vshrl.u32 %v996, 16
        %v1093 = vrot.slane %v1091, 7
        %v1094 = vshll.u32 %v996, 16
        %v1096 = vor.u32 %v1093, %v1094
        %v1098 = vshrl.u32 %v997, 16
        %v1100 = vrot.slane %v1098, 7
        %v1101 = vshll.u32 %v997, 16
        %v1103 = vor.u32 %v1100, %v1101
        %v1105 = vshrl.u32 %v998, 16
        %v1107 = vrot.slane %v1105, 7
        %v1108 = vshll.u32 %v998, 16
        %v1110 = vor.u32 %v1107, %v1108
        %s1143 = scalar_lea.vmem [#allocation2], 16
        %vm1144 = vcmask 1047552
        %vm1145 = vmand %vm1144, %vm340
        %v1146 = vld [vmem:[%s1143] sm:$0xff]
        %v1147 = vsel %vm1145, %v1005, %v1146
        %1148 = vst [vmem:[%s1143] sm:$0xff] %v1147
        %v1149 = vld [vmem:[%s1143 + $0x8] sm:$0x1]
        %v1150 = vsel %vm285, %v1002, %v1149
        %1151 = vst [vmem:[%s1143 + $0x8] sm:$0x1] %v1150
        %v1152 = vld [vmem:[%s1143 + $0x10] sm:$0xff]
        %v1153 = vsel %vm1145, %v1012, %v1152
        %1154 = vst [vmem:[%s1143 + $0x10] sm:$0xff] %v1153
        %v1155 = vld [vmem:[%s1143 + $0x18] sm:$0x1]
        %v1156 = vsel %vm285, %v1009, %v1155
        %1157 = vst [vmem:[%s1143 + $0x18] sm:$0x1] %v1156
        %v1158 = vld [vmem:[%s1143 + $0x20] sm:$0xff]
        %v1159 = vsel %vm1145, %v1019, %v1158
        %1160 = vst [vmem:[%s1143 + $0x20] sm:$0xff] %v1159
        %v1161 = vld [vmem:[%s1143 + $0x28] sm:$0x1]
        %v1162 = vsel %vm285, %v1016, %v1161
        %1163 = vst [vmem:[%s1143 + $0x28] sm:$0x1] %v1162
        %v1164 = vld [vmem:[%s1143 + $0x30] sm:$0xff]
        %v1165 = vsel %vm1145, %v1026, %v1164
        %1166 = vst [vmem:[%s1143 + $0x30] sm:$0xff] %v1165
        %v1167 = vld [vmem:[%s1143 + $0x38] sm:$0x1]
        %v1168 = vsel %vm285, %v1023, %v1167
        %1169 = vst [vmem:[%s1143 + $0x38] sm:$0x1] %v1168
        %v1170 = vld [vmem:[%s1143 + $0x40] sm:$0xff]
        %v1171 = vsel %vm1145, %v1033, %v1170
        %1172 = vst [vmem:[%s1143 + $0x40] sm:$0xff] %v1171
        %v1173 = vld [vmem:[%s1143 + $0x48] sm:$0x1]
        %v1174 = vsel %vm285, %v1030, %v1173
        %1175 = vst [vmem:[%s1143 + $0x48] sm:$0x1] %v1174
        %v1176 = vld [vmem:[%s1143 + $0x50] sm:$0xff]
        %v1177 = vsel %vm1145, %v1040, %v1176
        %1178 = vst [vmem:[%s1143 + $0x50] sm:$0xff] %v1177
        %v1179 = vld [vmem:[%s1143 + $0x58] sm:$0x1]
        %v1180 = vsel %vm285, %v1037, %v1179
        %1181 = vst [vmem:[%s1143 + $0x58] sm:$0x1] %v1180
        %v1182 = vld [vmem:[%s1143 + $0x60] sm:$0xff]
        %v1183 = vsel %vm1145, %v1047, %v1182
        %1184 = vst [vmem:[%s1143 + $0x60] sm:$0xff] %v1183
        %v1185 = vld [vmem:[%s1143 + $0x68] sm:$0x1]
        %v1186 = vsel %vm285, %v1044, %v1185
        %1187 = vst [vmem:[%s1143 + $0x68] sm:$0x1] %v1186
        %v1188 = vld [vmem:[%s1143 + $0x70] sm:$0xff]
        %v1189 = vsel %vm1145, %v1054, %v1188
        %1190 = vst [vmem:[%s1143 + $0x70] sm:$0xff] %v1189
        %v1191 = vld [vmem:[%s1143 + $0x78] sm:$0x1]
        %v1192 = vsel %vm285, %v1051, %v1191
        %1193 = vst [vmem:[%s1143 + $0x78] sm:$0x1] %v1192
        %v1194 = vld [vmem:[%s1143 + $0x80] sm:$0xff]
        %v1195 = vsel %vm1145, %v1061, %v1194
        %1196 = vst [vmem:[%s1143 + $0x80] sm:$0xff] %v1195
        %v1197 = vld [vmem:[%s1143 + $0x88] sm:$0x1]
        %v1198 = vsel %vm285, %v1058, %v1197
        %1199 = vst [vmem:[%s1143 + $0x88] sm:$0x1] %v1198
        %v1200 = vld [vmem:[%s1143 + $0x90] sm:$0xff]
        %v1201 = vsel %vm1145, %v1068, %v1200
        %1202 = vst [vmem:[%s1143 + $0x90] sm:$0xff] %v1201
        %v1203 = vld [vmem:[%s1143 + $0x98] sm:$0x1]
        %v1204 = vsel %vm285, %v1065, %v1203
        %1205 = vst [vmem:[%s1143 + $0x98] sm:$0x1] %v1204
        %v1206 = vld [vmem:[%s1143 + $0xa0] sm:$0xff]
        %v1207 = vsel %vm1145, %v1075, %v1206
        %1208 = vst [vmem:[%s1143 + $0xa0] sm:$0xff] %v1207
        %v1209 = vld [vmem:[%s1143 + $0xa8] sm:$0x1]
        %v1210 = vsel %vm285, %v1072, %v1209
        %1211 = vst [vmem:[%s1143 + $0xa8] sm:$0x1] %v1210
        %v1212 = vld [vmem:[%s1143 + $0xb0] sm:$0xff]
        %v1213 = vsel %vm1145, %v1082, %v1212
        %1214 = vst [vmem:[%s1143 + $0xb0] sm:$0xff] %v1213
        %v1215 = vld [vmem:[%s1143 + $0xb8] sm:$0x1]
        %v1216 = vsel %vm285, %v1079, %v1215
        %1217 = vst [vmem:[%s1143 + $0xb8] sm:$0x1] %v1216
        %v1218 = vld [vmem:[%s1143 + $0xc0] sm:$0xff]
        %v1219 = vsel %vm1145, %v1089, %v1218
        %1220 = vst [vmem:[%s1143 + $0xc0] sm:$0xff] %v1219
        %v1221 = vld [vmem:[%s1143 + $0xc8] sm:$0x1]
        %v1222 = vsel %vm285, %v1086, %v1221
        %1223 = vst [vmem:[%s1143 + $0xc8] sm:$0x1] %v1222
        %v1224 = vld [vmem:[%s1143 + $0xd0] sm:$0xff]
        %v1225 = vsel %vm1145, %v1096, %v1224
        %1226 = vst [vmem:[%s1143 + $0xd0] sm:$0xff] %v1225
        %v1227 = vld [vmem:[%s1143 + $0xd8] sm:$0x1]
        %v1228 = vsel %vm285, %v1093, %v1227
        %1229 = vst [vmem:[%s1143 + $0xd8] sm:$0x1] %v1228
        %v1230 = vld [vmem:[%s1143 + $0xe0] sm:$0xff]
        %v1231 = vsel %vm1145, %v1103, %v1230
        %1232 = vst [vmem:[%s1143 + $0xe0] sm:$0xff] %v1231
        %v1233 = vld [vmem:[%s1143 + $0xe8] sm:$0x1]
        %v1234 = vsel %vm285, %v1100, %v1233
        %1235 = vst [vmem:[%s1143 + $0xe8] sm:$0x1] %v1234
        %v1236 = vld [vmem:[%s1143 + $0xf0] sm:$0xff]
        %v1237 = vsel %vm1145, %v1110, %v1236
        %1238 = vst [vmem:[%s1143 + $0xf0] sm:$0xff] %v1237
        %v1239 = vld [vmem:[%s1143 + $0xf8] sm:$0x1]
        %v1240 = vsel %vm285, %v1107, %v1239
        %1241 = vst [vmem:[%s1143 + $0xf8] sm:$0x1] %v1240
        %v1242 = vld [vmem:[#allocation2] sm:$0xff]
        %v1243 = vld [vmem:[#allocation2 + $0x10] sm:$0xff]
        %v1244 = vld [vmem:[#allocation2 + $0x20] sm:$0xff]
        %v1245 = vld [vmem:[#allocation2 + $0x30] sm:$0xff]
        %v1246 = vld [vmem:[#allocation2 + $0x40] sm:$0xff]
        %v1247 = vld [vmem:[#allocation2 + $0x50] sm:$0xff]
        %v1248 = vld [vmem:[#allocation2 + $0x60] sm:$0xff]
        %v1249 = vld [vmem:[#allocation2 + $0x70] sm:$0xff]
        %v1250 = vld [vmem:[#allocation2 + $0x80] sm:$0xff]
        %v1251 = vld [vmem:[#allocation2 + $0x90] sm:$0xff]
        %v1252 = vld [vmem:[#allocation2 + $0xa0] sm:$0xff]
        %v1253 = vld [vmem:[#allocation2 + $0xb0] sm:$0xff]
        %v1254 = vld [vmem:[#allocation2 + $0xc0] sm:$0xff]
        %v1255 = vld [vmem:[#allocation2 + $0xd0] sm:$0xff]
        %v1256 = vld [vmem:[#allocation2 + $0xe0] sm:$0xff]
        %v1257 = vld [vmem:[#allocation2 + $0xf0] sm:$0xff]
        %1258 = vst [vmem:[#allocation3] sm:$0xff] %v1242
        %1259 = vst [vmem:[#allocation3 + $0x48] sm:$0xff] %v1243
        %1260 = vst [vmem:[#allocation3 + $0x90] sm:$0xff] %v1244
        %1261 = vst [vmem:[#allocation3 + $0xd8] sm:$0xff] %v1245
        %1262 = vst [vmem:[#allocation3 + $0x120] sm:$0xff] %v1246
        %1263 = vst [vmem:[#allocation3 + $0x168] sm:$0xff] %v1247
        %1264 = vst [vmem:[#allocation3 + $0x1b0] sm:$0xff] %v1248
        %1265 = vst [vmem:[#allocation3 + $0x1f8] sm:$0xff] %v1249
        %1266 = vst [vmem:[#allocation3 + $0x240] sm:$0xff] %v1250
        %1267 = vst [vmem:[#allocation3 + $0x288] sm:$0xff] %v1251
        %1268 = vst [vmem:[#allocation3 + $0x2d0] sm:$0xff] %v1252
        %1269 = vst [vmem:[#allocation3 + $0x318] sm:$0xff] %v1253
        %1270 = vst [vmem:[#allocation3 + $0x360] sm:$0xff] %v1254
        %1271 = vst [vmem:[#allocation3 + $0x3a8] sm:$0xff] %v1255
        %1272 = vst [vmem:[#allocation3 + $0x3f0] sm:$0xff] %v1256
        %1273 = vst [vmem:[#allocation3 + $0x438] sm:$0xff] %v1257
        %v1274 = vld [vmem:[#allocation2] sm:$0xff]
        %v1275 = vld [vmem:[#allocation2 + $0x8] sm:$0x1]
        %v1276 = vld [vmem:[#allocation2 + $0x10] sm:$0xff]
        %v1277 = vld [vmem:[#allocation2 + $0x18] sm:$0x1]
        %v1278 = vld [vmem:[#allocation2 + $0x20] sm:$0xff]
        %v1279 = vld [vmem:[#allocation2 + $0x28] sm:$0x1]
        %v1280 = vld [vmem:[#allocation2 + $0x30] sm:$0xff]
        %v1281 = vld [vmem:[#allocation2 + $0x38] sm:$0x1]
        %v1282 = vld [vmem:[#allocation2 + $0x40] sm:$0xff]
        %v1283 = vld [vmem:[#allocation2 + $0x48] sm:$0x1]
        %v1284 = vld [vmem:[#allocation2 + $0x50] sm:$0xff]
        %v1285 = vld [vmem:[#allocation2 + $0x58] sm:$0x1]
        %v1286 = vld [vmem:[#allocation2 + $0x60] sm:$0xff]
        %v1287 = vld [vmem:[#allocation2 + $0x68] sm:$0x1]
        %v1288 = vld [vmem:[#allocation2 + $0x70] sm:$0xff]
        %v1289 = vld [vmem:[#allocation2 + $0x78] sm:$0x1]
        %v1290 = vld [vmem:[#allocation2 + $0x80] sm:$0xff]
        %v1291 = vld [vmem:[#allocation2 + $0x88] sm:$0x1]
        %v1292 = vld [vmem:[#allocation2 + $0x90] sm:$0xff]
        %v1293 = vld [vmem:[#allocation2 + $0x98] sm:$0x1]
        %v1294 = vld [vmem:[#allocation2 + $0xa0] sm:$0xff]
        %v1295 = vld [vmem:[#allocation2 + $0xa8] sm:$0x1]
        %v1296 = vld [vmem:[#allocation2 + $0xb0] sm:$0xff]
        %v1297 = vld [vmem:[#allocation2 + $0xb8] sm:$0x1]
        %v1298 = vld [vmem:[#allocation2 + $0xc0] sm:$0xff]
        %v1299 = vld [vmem:[#allocation2 + $0xc8] sm:$0x1]
        %v1300 = vld [vmem:[#allocation2 + $0xd0] sm:$0xff]
        %v1301 = vld [vmem:[#allocation2 + $0xd8] sm:$0x1]
        %v1302 = vld [vmem:[#allocation2 + $0xe0] sm:$0xff]
        %v1303 = vld [vmem:[#allocation2 + $0xe8] sm:$0x1]
        %v1304 = vld [vmem:[#allocation2 + $0xf0] sm:$0xff]
        %v1305 = vld [vmem:[#allocation2 + $0xf8] sm:$0x1]
        %vm1306 = vsmask.f32 7424
        %v1308 = vshrl.u32 %v1274, 16
        %v1310 = vshll.u32 %v1274, 16
        %v1312 = vrot.slane %v1310, 1
        %v1313 = vor.u32 %v1308, %v1312
        %v1315 = vshll.u32 %v1275, 16
        %v1317 = vrot.slane %v1315, 1
        %v1318 = vsel %vm1306, %v1313, %v1317
        %v1320 = vshrl.u32 %v1276, 16
        %v1322 = vshll.u32 %v1276, 16
        %v1324 = vrot.slane %v1322, 1
        %v1325 = vor.u32 %v1320, %v1324
        %v1327 = vshll.u32 %v1277, 16
        %v1329 = vrot.slane %v1327, 1
        %v1330 = vsel %vm1306, %v1325, %v1329
        %v1332 = vshrl.u32 %v1278, 16
        %v1334 = vshll.u32 %v1278, 16
        %v1336 = vrot.slane %v1334, 1
        %v1337 = vor.u32 %v1332, %v1336
        %v1339 = vshll.u32 %v1279, 16
        %v1341 = vrot.slane %v1339, 1
        %v1342 = vsel %vm1306, %v1337, %v1341
        %v1344 = vshrl.u32 %v1280, 16
        %v1346 = vshll.u32 %v1280, 16
        %v1348 = vrot.slane %v1346, 1
        %v1349 = vor.u32 %v1344, %v1348
        %v1351 = vshll.u32 %v1281, 16
        %v1353 = vrot.slane %v1351, 1
        %v1354 = vsel %vm1306, %v1349, %v1353
        %v1356 = vshrl.u32 %v1282, 16
        %v1358 = vshll.u32 %v1282, 16
        %v1360 = vrot.slane %v1358, 1
        %v1361 = vor.u32 %v1356, %v1360
        %v1363 = vshll.u32 %v1283, 16
        %v1365 = vrot.slane %v1363, 1
        %v1366 = vsel %vm1306, %v1361, %v1365
        %v1368 = vshrl.u32 %v1284, 16
        %v1370 = vshll.u32 %v1284, 16
        %v1372 = vrot.slane %v1370, 1
        %v1373 = vor.u32 %v1368, %v1372
        %v1375 = vshll.u32 %v1285, 16
        %v1377 = vrot.slane %v1375, 1
        %v1378 = vsel %vm1306, %v1373, %v1377
        %v1380 = vshrl.u32 %v1286, 16
        %v1382 = vshll.u32 %v1286, 16
        %v1384 = vrot.slane %v1382, 1
        %v1385 = vor.u32 %v1380, %v1384
        %v1387 = vshll.u32 %v1287, 16
        %v1389 = vrot.slane %v1387, 1
        %v1390 = vsel %vm1306, %v1385, %v1389
        %v1392 = vshrl.u32 %v1288, 16
        %v1394 = vshll.u32 %v1288, 16
        %v1396 = vrot.slane %v1394, 1
        %v1397 = vor.u32 %v1392, %v1396
        %v1399 = vshll.u32 %v1289, 16
        %v1401 = vrot.slane %v1399, 1
        %v1402 = vsel %vm1306, %v1397, %v1401
        %v1404 = vshrl.u32 %v1290, 16
        %v1406 = vshll.u32 %v1290, 16
        %v1408 = vrot.slane %v1406, 1
        %v1409 = vor.u32 %v1404, %v1408
        %v1411 = vshll.u32 %v1291, 16
        %v1413 = vrot.slane %v1411, 1
        %v1414 = vsel %vm1306, %v1409, %v1413
        %v1416 = vshrl.u32 %v1292, 16
        %v1418 = vshll.u32 %v1292, 16
        %v1420 = vrot.slane %v1418, 1
        %v1421 = vor.u32 %v1416, %v1420
        %v1423 = vshll.u32 %v1293, 16
        %v1425 = vrot.slane %v1423, 1
        %v1426 = vsel %vm1306, %v1421, %v1425
        %v1428 = vshrl.u32 %v1294, 16
        %v1430 = vshll.u32 %v1294, 16
        %v1432 = vrot.slane %v1430, 1
        %v1433 = vor.u32 %v1428, %v1432
        %v1435 = vshll.u32 %v1295, 16
        %v1437 = vrot.slane %v1435, 1
        %v1438 = vsel %vm1306, %v1433, %v1437
        %v1440 = vshrl.u32 %v1296, 16
        %v1442 = vshll.u32 %v1296, 16
        %v1444 = vrot.slane %v1442, 1
        %v1445 = vor.u32 %v1440, %v1444
        %v1447 = vshll.u32 %v1297, 16
        %v1449 = vrot.slane %v1447, 1
        %v1450 = vsel %vm1306, %v1445, %v1449
        %v1452 = vshrl.u32 %v1298, 16
        %v1454 = vshll.u32 %v1298, 16
        %v1456 = vrot.slane %v1454, 1
        %v1457 = vor.u32 %v1452, %v1456
        %v1459 = vshll.u32 %v1299, 16
        %v1461 = vrot.slane %v1459, 1
        %v1462 = vsel %vm1306, %v1457, %v1461
        %v1464 = vshrl.u32 %v1300, 16
        %v1466 = vshll.u32 %v1300, 16
        %v1468 = vrot.slane %v1466, 1
        %v1469 = vor.u32 %v1464, %v1468
        %v1471 = vshll.u32 %v1301, 16
        %v1473 = vrot.slane %v1471, 1
        %v1474 = vsel %vm1306, %v1469, %v1473
        %v1476 = vshrl.u32 %v1302, 16
        %v1478 = vshll.u32 %v1302, 16
        %v1480 = vrot.slane %v1478, 1
        %v1481 = vor.u32 %v1476, %v1480
        %v1483 = vshll.u32 %v1303, 16
        %v1485 = vrot.slane %v1483, 1
        %v1486 = vsel %vm1306, %v1481, %v1485
        %v1488 = vshrl.u32 %v1304, 16
        %v1490 = vshll.u32 %v1304, 16
        %v1492 = vrot.slane %v1490, 1
        %v1493 = vor.u32 %v1488, %v1492
        %v1495 = vshll.u32 %v1305, 16
        %v1497 = vrot.slane %v1495, 1
        %v1498 = vsel %vm1306, %v1493, %v1497
        %1515 = vst [vmem:[#allocation3 + $0x8] sm:$0xff] %v1318
        %1516 = vst [vmem:[#allocation3 + $0x50] sm:$0xff] %v1330
        %1517 = vst [vmem:[#allocation3 + $0x98] sm:$0xff] %v1342
        %1518 = vst [vmem:[#allocation3 + $0xe0] sm:$0xff] %v1354
        %1519 = vst [vmem:[#allocation3 + $0x128] sm:$0xff] %v1366
        %1520 = vst [vmem:[#allocation3 + $0x170] sm:$0xff] %v1378
        %1521 = vst [vmem:[#allocation3 + $0x1b8] sm:$0xff] %v1390
        %1522 = vst [vmem:[#allocation3 + $0x200] sm:$0xff] %v1402
        %1523 = vst [vmem:[#allocation3 + $0x248] sm:$0xff] %v1414
        %1524 = vst [vmem:[#allocation3 + $0x290] sm:$0xff] %v1426
        %1525 = vst [vmem:[#allocation3 + $0x2d8] sm:$0xff] %v1438
        %1526 = vst [vmem:[#allocation3 + $0x320] sm:$0xff] %v1450
        %1527 = vst [vmem:[#allocation3 + $0x368] sm:$0xff] %v1462
        %1528 = vst [vmem:[#allocation3 + $0x3b0] sm:$0xff] %v1474
        %1529 = vst [vmem:[#allocation3 + $0x3f8] sm:$0xff] %v1486
        %1530 = vst [vmem:[#allocation3 + $0x440] sm:$0xff] %v1498
        %v1531 = vld [vmem:[#allocation2] sm:$0xfe]
        %v1532 = vld [vmem:[#allocation2 + $0x8] sm:$0x1]
        %v1533 = vld [vmem:[#allocation2 + $0x10] sm:$0xfe]
        %v1534 = vld [vmem:[#allocation2 + $0x18] sm:$0x1]
        %v1535 = vld [vmem:[#allocation2 + $0x20] sm:$0xfe]
        %v1536 = vld [vmem:[#allocation2 + $0x28] sm:$0x1]
        %v1537 = vld [vmem:[#allocation2 + $0x30] sm:$0xfe]
        %v1538 = vld [vmem:[#allocation2 + $0x38] sm:$0x1]
        %v1539 = vld [vmem:[#allocation2 + $0x40] sm:$0xfe]
        %v1540 = vld [vmem:[#allocation2 + $0x48] sm:$0x1]
        %v1541 = vld [vmem:[#allocation2 + $0x50] sm:$0xfe]
        %v1542 = vld [vmem:[#allocation2 + $0x58] sm:$0x1]
        %v1543 = vld [vmem:[#allocation2 + $0x60] sm:$0xfe]
        %v1544 = vld [vmem:[#allocation2 + $0x68] sm:$0x1]
        %v1545 = vld [vmem:[#allocation2 + $0x70] sm:$0xfe]
        %v1546 = vld [vmem:[#allocation2 + $0x78] sm:$0x1]
        %v1547 = vld [vmem:[#allocation2 + $0x80] sm:$0xfe]
        %v1548 = vld [vmem:[#allocation2 + $0x88] sm:$0x1]
        %v1549 = vld [vmem:[#allocation2 + $0x90] sm:$0xfe]
        %v1550 = vld [vmem:[#allocation2 + $0x98] sm:$0x1]
        %v1551 = vld [vmem:[#allocation2 + $0xa0] sm:$0xfe]
        %v1552 = vld [vmem:[#allocation2 + $0xa8] sm:$0x1]
        %v1553 = vld [vmem:[#allocation2 + $0xb0] sm:$0xfe]
        %v1554 = vld [vmem:[#allocation2 + $0xb8] sm:$0x1]
        %v1555 = vld [vmem:[#allocation2 + $0xc0] sm:$0xfe]
        %v1556 = vld [vmem:[#allocation2 + $0xc8] sm:$0x1]
        %v1557 = vld [vmem:[#allocation2 + $0xd0] sm:$0xfe]
        %v1558 = vld [vmem:[#allocation2 + $0xd8] sm:$0x1]
        %v1559 = vld [vmem:[#allocation2 + $0xe0] sm:$0xfe]
        %v1560 = vld [vmem:[#allocation2 + $0xe8] sm:$0x1]
        %v1561 = vld [vmem:[#allocation2 + $0xf0] sm:$0xfe]
        %v1562 = vld [vmem:[#allocation2 + $0xf8] sm:$0x1]
        %vm1595 = vcmask 1046528
        %v1596 = vrot.slane %v1531, 1
        %v1597 = vrot.slane %v1532, 1
        %v1598 = vsel %vm1595, %v1596, %v1597
        %v1599 = vrot.slane %v1533, 1
        %v1600 = vrot.slane %v1534, 1
        %v1601 = vsel %vm1595, %v1599, %v1600
        %v1602 = vrot.slane %v1535, 1
        %v1603 = vrot.slane %v1536, 1
        %v1604 = vsel %vm1595, %v1602, %v1603
        %v1605 = vrot.slane %v1537, 1
        %v1606 = vrot.slane %v1538, 1
        %v1607 = vsel %vm1595, %v1605, %v1606
        %v1608 = vrot.slane %v1539, 1
        %v1609 = vrot.slane %v1540, 1
        %v1610 = vsel %vm1595, %v1608, %v1609
        %v1611 = vrot.slane %v1541, 1
        %v1612 = vrot.slane %v1542, 1
        %v1613 = vsel %vm1595, %v1611, %v1612
        %v1614 = vrot.slane %v1543, 1
        %v1615 = vrot.slane %v1544, 1
        %v1616 = vsel %vm1595, %v1614, %v1615
        %v1617 = vrot.slane %v1545, 1
        %v1618 = vrot.slane %v1546, 1
        %v1619 = vsel %vm1595, %v1617, %v1618
        %v1620 = vrot.slane %v1547, 1
        %v1621 = vrot.slane %v1548, 1
        %v1622 = vsel %vm1595, %v1620, %v1621
        %v1623 = vrot.slane %v1549, 1
        %v1624 = vrot.slane %v1550, 1
        %v1625 = vsel %vm1595, %v1623, %v1624
        %v1626 = vrot.slane %v1551, 1
        %v1627 = vrot.slane %v1552, 1
        %v1628 = vsel %vm1595, %v1626, %v1627
        %v1629 = vrot.slane %v1553, 1
        %v1630 = vrot.slane %v1554, 1
        %v1631 = vsel %vm1595, %v1629, %v1630
        %v1632 = vrot.slane %v1555, 1
        %v1633 = vrot.slane %v1556, 1
        %v1634 = vsel %vm1595, %v1632, %v1633
        %v1635 = vrot.slane %v1557, 1
        %v1636 = vrot.slane %v1558, 1
        %v1637 = vsel %vm1595, %v1635, %v1636
        %v1638 = vrot.slane %v1559, 1
        %v1639 = vrot.slane %v1560, 1
        %v1640 = vsel %vm1595, %v1638, %v1639
        %v1641 = vrot.slane %v1561, 1
        %v1642 = vrot.slane %v1562, 1
        %v1643 = vsel %vm1595, %v1641, %v1642
        %1660 = vst [vmem:[#allocation3 + $0x10] sm:$0xff] %v1598
        %1661 = vst [vmem:[#allocation3 + $0x58] sm:$0xff] %v1601
        %1662 = vst [vmem:[#allocation3 + $0xa0] sm:$0xff] %v1604
        %1663 = vst [vmem:[#allocation3 + $0xe8] sm:$0xff] %v1607
        %1664 = vst [vmem:[#allocation3 + $0x130] sm:$0xff] %v1610
        %1665 = vst [vmem:[#allocation3 + $0x178] sm:$0xff] %v1613
        %1666 = vst [vmem:[#allocation3 + $0x1c0] sm:$0xff] %v1616
        %1667 = vst [vmem:[#allocation3 + $0x208] sm:$0xff] %v1619
        %1668 = vst [vmem:[#allocation3 + $0x250] sm:$0xff] %v1622
        %1669 = vst [vmem:[#allocation3 + $0x298] sm:$0xff] %v1625
        %1670 = vst [vmem:[#allocation3 + $0x2e0] sm:$0xff] %v1628
        %1671 = vst [vmem:[#allocation3 + $0x328] sm:$0xff] %v1631
        %1672 = vst [vmem:[#allocation3 + $0x370] sm:$0xff] %v1634
        %1673 = vst [vmem:[#allocation3 + $0x3b8] sm:$0xff] %v1637
        %1674 = vst [vmem:[#allocation3 + $0x400] sm:$0xff] %v1640
        %1675 = vst [vmem:[#allocation3 + $0x448] sm:$0xff] %v1643
        %v1676 = vld [vmem:[%s1143] sm:$0xff]
        %v1677 = vld [vmem:[%s1143 + $0x10] sm:$0xff]
        %v1678 = vld [vmem:[%s1143 + $0x20] sm:$0xff]
        %v1679 = vld [vmem:[%s1143 + $0x30] sm:$0xff]
        %v1680 = vld [vmem:[%s1143 + $0x40] sm:$0xff]
        %v1681 = vld [vmem:[%s1143 + $0x50] sm:$0xff]
        %v1682 = vld [vmem:[%s1143 + $0x60] sm:$0xff]
        %v1683 = vld [vmem:[%s1143 + $0x70] sm:$0xff]
        %v1684 = vld [vmem:[%s1143 + $0x80] sm:$0xff]
        %v1685 = vld [vmem:[%s1143 + $0x90] sm:$0xff]
        %v1686 = vld [vmem:[%s1143 + $0xa0] sm:$0xff]
        %v1687 = vld [vmem:[%s1143 + $0xb0] sm:$0xff]
        %v1688 = vld [vmem:[%s1143 + $0xc0] sm:$0xff]
        %v1689 = vld [vmem:[%s1143 + $0xd0] sm:$0xff]
        %v1690 = vld [vmem:[%s1143 + $0xe0] sm:$0xff]
        %v1691 = vld [vmem:[%s1143 + $0xf0] sm:$0xff]
        %1692 = vst [vmem:[#allocation3 + $0x18] sm:$0xff] %v1676
        %1693 = vst [vmem:[#allocation3 + $0x60] sm:$0xff] %v1677
        %1694 = vst [vmem:[#allocation3 + $0xa8] sm:$0xff] %v1678
        %1695 = vst [vmem:[#allocation3 + $0xf0] sm:$0xff] %v1679
        %1696 = vst [vmem:[#allocation3 + $0x138] sm:$0xff] %v1680
        %1697 = vst [vmem:[#allocation3 + $0x180] sm:$0xff] %v1681
        %1698 = vst [vmem:[#allocation3 + $0x1c8] sm:$0xff] %v1682
        %1699 = vst [vmem:[#allocation3 + $0x210] sm:$0xff] %v1683
        %1700 = vst [vmem:[#allocation3 + $0x258] sm:$0xff] %v1684
        %1701 = vst [vmem:[#allocation3 + $0x2a0] sm:$0xff] %v1685
        %1702 = vst [vmem:[#allocation3 + $0x2e8] sm:$0xff] %v1686
        %1703 = vst [vmem:[#allocation3 + $0x330] sm:$0xff] %v1687
        %1704 = vst [vmem:[#allocation3 + $0x378] sm:$0xff] %v1688
        %1705 = vst [vmem:[#allocation3 + $0x3c0] sm:$0xff] %v1689
        %1706 = vst [vmem:[#allocation3 + $0x408] sm:$0xff] %v1690
        %1707 = vst [vmem:[#allocation3 + $0x450] sm:$0xff] %v1691
        %v1708 = vld [vmem:[%s1143] sm:$0xff]
        %v1709 = vld [vmem:[%s1143 + $0x8] sm:$0x1]
        %v1710 = vld [vmem:[%s1143 + $0x10] sm:$0xff]
        %v1711 = vld [vmem:[%s1143 + $0x18] sm:$0x1]
        %v1712 = vld [vmem:[%s1143 + $0x20] sm:$0xff]
        %v1713 = vld [vmem:[%s1143 + $0x28] sm:$0x1]
        %v1714 = vld [vmem:[%s1143 + $0x30] sm:$0xff]
        %v1715 = vld [vmem:[%s1143 + $0x38] sm:$0x1]
        %v1716 = vld [vmem:[%s1143 + $0x40] sm:$0xff]
        %v1717 = vld [vmem:[%s1143 + $0x48] sm:$0x1]
        %v1718 = vld [vmem:[%s1143 + $0x50] sm:$0xff]
        %v1719 = vld [vmem:[%s1143 + $0x58] sm:$0x1]
        %v1720 = vld [vmem:[%s1143 + $0x60] sm:$0xff]
        %v1721 = vld [vmem:[%s1143 + $0x68] sm:$0x1]
        %v1722 = vld [vmem:[%s1143 + $0x70] sm:$0xff]
        %v1723 = vld [vmem:[%s1143 + $0x78] sm:$0x1]
        %v1724 = vld [vmem:[%s1143 + $0x80] sm:$0xff]
        %v1725 = vld [vmem:[%s1143 + $0x88] sm:$0x1]
        %v1726 = vld [vmem:[%s1143 + $0x90] sm:$0xff]
        %v1727 = vld [vmem:[%s1143 + $0x98] sm:$0x1]
        %v1728 = vld [vmem:[%s1143 + $0xa0] sm:$0xff]
        %v1729 = vld [vmem:[%s1143 + $0xa8] sm:$0x1]
        %v1730 = vld [vmem:[%s1143 + $0xb0] sm:$0xff]
        %v1731 = vld [vmem:[%s1143 + $0xb8] sm:$0x1]
        %v1732 = vld [vmem:[%s1143 + $0xc0] sm:$0xff]
        %v1733 = vld [vmem:[%s1143 + $0xc8] sm:$0x1]
        %v1734 = vld [vmem:[%s1143 + $0xd0] sm:$0xff]
        %v1735 = vld [vmem:[%s1143 + $0xd8] sm:$0x1]
        %v1736 = vld [vmem:[%s1143 + $0xe0] sm:$0xff]
        %v1737 = vld [vmem:[%s1143 + $0xe8] sm:$0x1]
        %v1738 = vld [vmem:[%s1143 + $0xf0] sm:$0xff]
        %v1739 = vld [vmem:[%s1143 + $0xf8] sm:$0x1]
        %v1741 = vshrl.u32 %v1708, 16
        %v1743 = vshll.u32 %v1708, 16
        %v1745 = vrot.slane %v1743, 1
        %v1746 = vor.u32 %v1741, %v1745
        %v1748 = vshll.u32 %v1709, 16
        %v1750 = vrot.slane %v1748, 1
        %v1751 = vsel %vm1306, %v1746, %v1750
        %v1753 = vshrl.u32 %v1710, 16
        %v1755 = vshll.u32 %v1710, 16
        %v1757 = vrot.slane %v1755, 1
        %v1758 = vor.u32 %v1753, %v1757
        %v1760 = vshll.u32 %v1711, 16
        %v1762 = vrot.slane %v1760, 1
        %v1763 = vsel %vm1306, %v1758, %v1762
        %v1765 = vshrl.u32 %v1712, 16
        %v1767 = vshll.u32 %v1712, 16
        %v1769 = vrot.slane %v1767, 1
        %v1770 = vor.u32 %v1765, %v1769
        %v1772 = vshll.u32 %v1713, 16
        %v1774 = vrot.slane %v1772, 1
        %v1775 = vsel %vm1306, %v1770, %v1774
        %v1777 = vshrl.u32 %v1714, 16
        %v1779 = vshll.u32 %v1714, 16
        %v1781 = vrot.slane %v1779, 1
        %v1782 = vor.u32 %v1777, %v1781
        %v1784 = vshll.u32 %v1715, 16
        %v1786 = vrot.slane %v1784, 1
        %v1787 = vsel %vm1306, %v1782, %v1786
        %v1789 = vshrl.u32 %v1716, 16
        %v1791 = vshll.u32 %v1716, 16
        %v1793 = vrot.slane %v1791, 1
        %v1794 = vor.u32 %v1789, %v1793
        %v1796 = vshll.u32 %v1717, 16
        %v1798 = vrot.slane %v1796, 1
        %v1799 = vsel %vm1306, %v1794, %v1798
        %v1801 = vshrl.u32 %v1718, 16
        %v1803 = vshll.u32 %v1718, 16
        %v1805 = vrot.slane %v1803, 1
        %v1806 = vor.u32 %v1801, %v1805
        %v1808 = vshll.u32 %v1719, 16
        %v1810 = vrot.slane %v1808, 1
        %v1811 = vsel %vm1306, %v1806, %v1810
        %v1813 = vshrl.u32 %v1720, 16
        %v1815 = vshll.u32 %v1720, 16
        %v1817 = vrot.slane %v1815, 1
        %v1818 = vor.u32 %v1813, %v1817
        %v1820 = vshll.u32 %v1721, 16
        %v1822 = vrot.slane %v1820, 1
        %v1823 = vsel %vm1306, %v1818, %v1822
        %v1825 = vshrl.u32 %v1722, 16
        %v1827 = vshll.u32 %v1722, 16
        %v1829 = vrot.slane %v1827, 1
        %v1830 = vor.u32 %v1825, %v1829
        %v1832 = vshll.u32 %v1723, 16
        %v1834 = vrot.slane %v1832, 1
        %v1835 = vsel %vm1306, %v1830, %v1834
        %v1837 = vshrl.u32 %v1724, 16
        %v1839 = vshll.u32 %v1724, 16
        %v1841 = vrot.slane %v1839, 1
        %v1842 = vor.u32 %v1837, %v1841
        %v1844 = vshll.u32 %v1725, 16
        %v1846 = vrot.slane %v1844, 1
        %v1847 = vsel %vm1306, %v1842, %v1846
        %v1849 = vshrl.u32 %v1726, 16
        %v1851 = vshll.u32 %v1726, 16
        %v1853 = vrot.slane %v1851, 1
        %v1854 = vor.u32 %v1849, %v1853
        %v1856 = vshll.u32 %v1727, 16
        %v1858 = vrot.slane %v1856, 1
        %v1859 = vsel %vm1306, %v1854, %v1858
        %v1861 = vshrl.u32 %v1728, 16
        %v1863 = vshll.u32 %v1728, 16
        %v1865 = vrot.slane %v1863, 1
        %v1866 = vor.u32 %v1861, %v1865
        %v1868 = vshll.u32 %v1729, 16
        %v1870 = vrot.slane %v1868, 1
        %v1871 = vsel %vm1306, %v1866, %v1870
        %v1873 = vshrl.u32 %v1730, 16
        %v1875 = vshll.u32 %v1730, 16
        %v1877 = vrot.slane %v1875, 1
        %v1878 = vor.u32 %v1873, %v1877
        %v1880 = vshll.u32 %v1731, 16
        %v1882 = vrot.slane %v1880, 1
        %v1883 = vsel %vm1306, %v1878, %v1882
        %v1885 = vshrl.u32 %v1732, 16
        %v1887 = vshll.u32 %v1732, 16
        %v1889 = vrot.slane %v1887, 1
        %v1890 = vor.u32 %v1885, %v1889
        %v1892 = vshll.u32 %v1733, 16
        %v1894 = vrot.slane %v1892, 1
        %v1895 = vsel %vm1306, %v1890, %v1894
        %v1897 = vshrl.u32 %v1734, 16
        %v1899 = vshll.u32 %v1734, 16
        %v1901 = vrot.slane %v1899, 1
        %v1902 = vor.u32 %v1897, %v1901
        %v1904 = vshll.u32 %v1735, 16
        %v1906 = vrot.slane %v1904, 1
        %v1907 = vsel %vm1306, %v1902, %v1906
        %v1909 = vshrl.u32 %v1736, 16
        %v1911 = vshll.u32 %v1736, 16
        %v1913 = vrot.slane %v1911, 1
        %v1914 = vor.u32 %v1909, %v1913
        %v1916 = vshll.u32 %v1737, 16
        %v1918 = vrot.slane %v1916, 1
        %v1919 = vsel %vm1306, %v1914, %v1918
        %v1921 = vshrl.u32 %v1738, 16
        %v1923 = vshll.u32 %v1738, 16
        %v1925 = vrot.slane %v1923, 1
        %v1926 = vor.u32 %v1921, %v1925
        %v1928 = vshll.u32 %v1739, 16
        %v1930 = vrot.slane %v1928, 1
        %v1931 = vsel %vm1306, %v1926, %v1930
        %1948 = vst [vmem:[#allocation3 + $0x20] sm:$0xff] %v1751
        %1949 = vst [vmem:[#allocation3 + $0x68] sm:$0xff] %v1763
        %1950 = vst [vmem:[#allocation3 + $0xb0] sm:$0xff] %v1775
        %1951 = vst [vmem:[#allocation3 + $0xf8] sm:$0xff] %v1787
        %1952 = vst [vmem:[#allocation3 + $0x140] sm:$0xff] %v1799
        %1953 = vst [vmem:[#allocation3 + $0x188] sm:$0xff] %v1811
        %1954 = vst [vmem:[#allocation3 + $0x1d0] sm:$0xff] %v1823
        %1955 = vst [vmem:[#allocation3 + $0x218] sm:$0xff] %v1835
        %1956 = vst [vmem:[#allocation3 + $0x260] sm:$0xff] %v1847
        %1957 = vst [vmem:[#allocation3 + $0x2a8] sm:$0xff] %v1859
        %1958 = vst [vmem:[#allocation3 + $0x2f0] sm:$0xff] %v1871
        %1959 = vst [vmem:[#allocation3 + $0x338] sm:$0xff] %v1883
        %1960 = vst [vmem:[#allocation3 + $0x380] sm:$0xff] %v1895
        %1961 = vst [vmem:[#allocation3 + $0x3c8] sm:$0xff] %v1907
        %1962 = vst [vmem:[#allocation3 + $0x410] sm:$0xff] %v1919
        %1963 = vst [vmem:[#allocation3 + $0x458] sm:$0xff] %v1931
        %v1964 = vld [vmem:[%s1143] sm:$0xfe]
        %v1965 = vld [vmem:[%s1143 + $0x8] sm:$0x1]
        %v1966 = vld [vmem:[%s1143 + $0x10] sm:$0xfe]
        %v1967 = vld [vmem:[%s1143 + $0x18] sm:$0x1]
        %v1968 = vld [vmem:[%s1143 + $0x20] sm:$0xfe]
        %v1969 = vld [vmem:[%s1143 + $0x28] sm:$0x1]
        %v1970 = vld [vmem:[%s1143 + $0x30] sm:$0xfe]
        %v1971 = vld [vmem:[%s1143 + $0x38] sm:$0x1]
        %v1972 = vld [vmem:[%s1143 + $0x40] sm:$0xfe]
        %v1973 = vld [vmem:[%s1143 + $0x48] sm:$0x1]
        %v1974 = vld [vmem:[%s1143 + $0x50] sm:$0xfe]
        %v1975 = vld [vmem:[%s1143 + $0x58] sm:$0x1]
        %v1976 = vld [vmem:[%s1143 + $0x60] sm:$0xfe]
        %v1977 = vld [vmem:[%s1143 + $0x68] sm:$0x1]
        %v1978 = vld [vmem:[%s1143 + $0x70] sm:$0xfe]
        %v1979 = vld [vmem:[%s1143 + $0x78] sm:$0x1]
        %v1980 = vld [vmem:[%s1143 + $0x80] sm:$0xfe]
        %v1981 = vld [vmem:[%s1143 + $0x88] sm:$0x1]
        %v1982 = vld [vmem:[%s1143 + $0x90] sm:$0xfe]
        %v1983 = vld [vmem:[%s1143 + $0x98] sm:$0x1]
        %v1984 = vld [vmem:[%s1143 + $0xa0] sm:$0xfe]
        %v1985 = vld [vmem:[%s1143 + $0xa8] sm:$0x1]
        %v1986 = vld [vmem:[%s1143 + $0xb0] sm:$0xfe]
        %v1987 = vld [vmem:[%s1143 + $0xb8] sm:$0x1]
        %v1988 = vld [vmem:[%s1143 + $0xc0] sm:$0xfe]
        %v1989 = vld [vmem:[%s1143 + $0xc8] sm:$0x1]
        %v1990 = vld [vmem:[%s1143 + $0xd0] sm:$0xfe]
        %v1991 = vld [vmem:[%s1143 + $0xd8] sm:$0x1]
        %v1992 = vld [vmem:[%s1143 + $0xe0] sm:$0xfe]
        %v1993 = vld [vmem:[%s1143 + $0xe8] sm:$0x1]
        %v1994 = vld [vmem:[%s1143 + $0xf0] sm:$0xfe]
        %v1995 = vld [vmem:[%s1143 + $0xf8] sm:$0x1]
        %v2028 = vrot.slane %v1964, 1
        %v2029 = vrot.slane %v1965, 1
        %v2030 = vsel %vm1595, %v2028, %v2029
        %v2031 = vrot.slane %v1966, 1
        %v2032 = vrot.slane %v1967, 1
        %v2033 = vsel %vm1595, %v2031, %v2032
        %v2034 = vrot.slane %v1968, 1
        %v2035 = vrot.slane %v1969, 1
        %v2036 = vsel %vm1595, %v2034, %v2035
        %v2037 = vrot.slane %v1970, 1
        %v2038 = vrot.slane %v1971, 1
        %v2039 = vsel %vm1595, %v2037, %v2038
        %v2040 = vrot.slane %v1972, 1
        %v2041 = vrot.slane %v1973, 1
        %v2042 = vsel %vm1595, %v2040, %v2041
        %v2043 = vrot.slane %v1974, 1
        %v2044 = vrot.slane %v1975, 1
        %v2045 = vsel %vm1595, %v2043, %v2044
        %v2046 = vrot.slane %v1976, 1
        %v2047 = vrot.slane %v1977, 1
        %v2048 = vsel %vm1595, %v2046, %v2047
        %v2049 = vrot.slane %v1978, 1
        %v2050 = vrot.slane %v1979, 1
        %v2051 = vsel %vm1595, %v2049, %v2050
        %v2052 = vrot.slane %v1980, 1
        %v2053 = vrot.slane %v1981, 1
        %v2054 = vsel %vm1595, %v2052, %v2053
        %v2055 = vrot.slane %v1982, 1
        %v2056 = vrot.slane %v1983, 1
        %v2057 = vsel %vm1595, %v2055, %v2056
        %v2058 = vrot.slane %v1984, 1
        %v2059 = vrot.slane %v1985, 1
        %v2060 = vsel %vm1595, %v2058, %v2059
        %v2061 = vrot.slane %v1986, 1
        %v2062 = vrot.slane %v1987, 1
        %v2063 = vsel %vm1595, %v2061, %v2062
        %v2064 = vrot.slane %v1988, 1
        %v2065 = vrot.slane %v1989, 1
        %v2066 = vsel %vm1595, %v2064, %v2065
        %v2067 = vrot.slane %v1990, 1
        %v2068 = vrot.slane %v1991, 1
        %v2069 = vsel %vm1595, %v2067, %v2068
        %v2070 = vrot.slane %v1992, 1
        %v2071 = vrot.slane %v1993, 1
        %v2072 = vsel %vm1595, %v2070, %v2071
        %v2073 = vrot.slane %v1994, 1
        %v2074 = vrot.slane %v1995, 1
        %v2075 = vsel %vm1595, %v2073, %v2074
        %2092 = vst [vmem:[#allocation3 + $0x28] sm:$0xff] %v2030
        %2093 = vst [vmem:[#allocation3 + $0x70] sm:$0xff] %v2033
        %2094 = vst [vmem:[#allocation3 + $0xb8] sm:$0xff] %v2036
        %2095 = vst [vmem:[#allocation3 + $0x100] sm:$0xff] %v2039
        %2096 = vst [vmem:[#allocation3 + $0x148] sm:$0xff] %v2042
        %2097 = vst [vmem:[#allocation3 + $0x190] sm:$0xff] %v2045
        %2098 = vst [vmem:[#allocation3 + $0x1d8] sm:$0xff] %v2048
        %2099 = vst [vmem:[#allocation3 + $0x220] sm:$0xff] %v2051
        %2100 = vst [vmem:[#allocation3 + $0x268] sm:$0xff] %v2054
        %2101 = vst [vmem:[#allocation3 + $0x2b0] sm:$0xff] %v2057
        %2102 = vst [vmem:[#allocation3 + $0x2f8] sm:$0xff] %v2060
        %2103 = vst [vmem:[#allocation3 + $0x340] sm:$0xff] %v2063
        %2104 = vst [vmem:[#allocation3 + $0x388] sm:$0xff] %v2066
        %2105 = vst [vmem:[#allocation3 + $0x3d0] sm:$0xff] %v2069
        %2106 = vst [vmem:[#allocation3 + $0x418] sm:$0xff] %v2072
        %2107 = vst [vmem:[#allocation3 + $0x460] sm:$0xff] %v2075
        %s2108 = scalar_lea.vmem [#allocation2], 32
        %v2109 = vld [vmem:[%s2108] sm:$0xff]
        %v2110 = vld [vmem:[%s2108 + $0x10] sm:$0xff]
        %v2111 = vld [vmem:[%s2108 + $0x20] sm:$0xff]
        %v2112 = vld [vmem:[%s2108 + $0x30] sm:$0xff]
        %v2113 = vld [vmem:[%s2108 + $0x40] sm:$0xff]
        %v2114 = vld [vmem:[%s2108 + $0x50] sm:$0xff]
        %v2115 = vld [vmem:[%s2108 + $0x60] sm:$0xff]
        %v2116 = vld [vmem:[%s2108 + $0x70] sm:$0xff]
        %v2117 = vld [vmem:[%s2108 + $0x80] sm:$0xff]
        %v2118 = vld [vmem:[%s2108 + $0x90] sm:$0xff]
        %v2119 = vld [vmem:[%s2108 + $0xa0] sm:$0xff]
        %v2120 = vld [vmem:[%s2108 + $0xb0] sm:$0xff]
        %v2121 = vld [vmem:[%s2108 + $0xc0] sm:$0xff]
        %v2122 = vld [vmem:[%s2108 + $0xd0] sm:$0xff]
        %v2123 = vld [vmem:[%s2108 + $0xe0] sm:$0xff]
        %v2124 = vld [vmem:[%s2108 + $0xf0] sm:$0xff]
        %2125 = vst [vmem:[#allocation3 + $0x30] sm:$0xff] %v2109
        %2126 = vst [vmem:[#allocation3 + $0x78] sm:$0xff] %v2110
        %2127 = vst [vmem:[#allocation3 + $0xc0] sm:$0xff] %v2111
        %2128 = vst [vmem:[#allocation3 + $0x108] sm:$0xff] %v2112
        %2129 = vst [vmem:[#allocation3 + $0x150] sm:$0xff] %v2113
        %2130 = vst [vmem:[#allocation3 + $0x198] sm:$0xff] %v2114
        %2131 = vst [vmem:[#allocation3 + $0x1e0] sm:$0xff] %v2115
        %2132 = vst [vmem:[#allocation3 + $0x228] sm:$0xff] %v2116
        %2133 = vst [vmem:[#allocation3 + $0x270] sm:$0xff] %v2117
        %2134 = vst [vmem:[#allocation3 + $0x2b8] sm:$0xff] %v2118
        %2135 = vst [vmem:[#allocation3 + $0x300] sm:$0xff] %v2119
        %2136 = vst [vmem:[#allocation3 + $0x348] sm:$0xff] %v2120
        %2137 = vst [vmem:[#allocation3 + $0x390] sm:$0xff] %v2121
        %2138 = vst [vmem:[#allocation3 + $0x3d8] sm:$0xff] %v2122
        %2139 = vst [vmem:[#allocation3 + $0x420] sm:$0xff] %v2123
        %2140 = vst [vmem:[#allocation3 + $0x468] sm:$0xff] %v2124
        %v2141 = vld [vmem:[%s2108] sm:$0xff]
        %v2142 = vld [vmem:[%s2108 + $0x8] sm:$0x1]
        %v2143 = vld [vmem:[%s2108 + $0x10] sm:$0xff]
        %v2144 = vld [vmem:[%s2108 + $0x18] sm:$0x1]
        %v2145 = vld [vmem:[%s2108 + $0x20] sm:$0xff]
        %v2146 = vld [vmem:[%s2108 + $0x28] sm:$0x1]
        %v2147 = vld [vmem:[%s2108 + $0x30] sm:$0xff]
        %v2148 = vld [vmem:[%s2108 + $0x38] sm:$0x1]
        %v2149 = vld [vmem:[%s2108 + $0x40] sm:$0xff]
        %v2150 = vld [vmem:[%s2108 + $0x48] sm:$0x1]
        %v2151 = vld [vmem:[%s2108 + $0x50] sm:$0xff]
        %v2152 = vld [vmem:[%s2108 + $0x58] sm:$0x1]
        %v2153 = vld [vmem:[%s2108 + $0x60] sm:$0xff]
        %v2154 = vld [vmem:[%s2108 + $0x68] sm:$0x1]
        %v2155 = vld [vmem:[%s2108 + $0x70] sm:$0xff]
        %v2156 = vld [vmem:[%s2108 + $0x78] sm:$0x1]
        %v2157 = vld [vmem:[%s2108 + $0x80] sm:$0xff]
        %v2158 = vld [vmem:[%s2108 + $0x88] sm:$0x1]
        %v2159 = vld [vmem:[%s2108 + $0x90] sm:$0xff]
        %v2160 = vld [vmem:[%s2108 + $0x98] sm:$0x1]
        %v2161 = vld [vmem:[%s2108 + $0xa0] sm:$0xff]
        %v2162 = vld [vmem:[%s2108 + $0xa8] sm:$0x1]
        %v2163 = vld [vmem:[%s2108 + $0xb0] sm:$0xff]
        %v2164 = vld [vmem:[%s2108 + $0xb8] sm:$0x1]
        %v2165 = vld [vmem:[%s2108 + $0xc0] sm:$0xff]
        %v2166 = vld [vmem:[%s2108 + $0xc8] sm:$0x1]
        %v2167 = vld [vmem:[%s2108 + $0xd0] sm:$0xff]
        %v2168 = vld [vmem:[%s2108 + $0xd8] sm:$0x1]
        %v2169 = vld [vmem:[%s2108 + $0xe0] sm:$0xff]
        %v2170 = vld [vmem:[%s2108 + $0xe8] sm:$0x1]
        %v2171 = vld [vmem:[%s2108 + $0xf0] sm:$0xff]
        %v2172 = vld [vmem:[%s2108 + $0xf8] sm:$0x1]
        %v2174 = vshrl.u32 %v2141, 16
        %v2176 = vshll.u32 %v2141, 16
        %v2178 = vrot.slane %v2176, 1
        %v2179 = vor.u32 %v2174, %v2178
        %v2181 = vshll.u32 %v2142, 16
        %v2183 = vrot.slane %v2181, 1
        %v2184 = vsel %vm1306, %v2179, %v2183
        %v2186 = vshrl.u32 %v2143, 16
        %v2188 = vshll.u32 %v2143, 16
        %v2190 = vrot.slane %v2188, 1
        %v2191 = vor.u32 %v2186, %v2190
        %v2193 = vshll.u32 %v2144, 16
        %v2195 = vrot.slane %v2193, 1
        %v2196 = vsel %vm1306, %v2191, %v2195
        %v2198 = vshrl.u32 %v2145, 16
        %v2200 = vshll.u32 %v2145, 16
        %v2202 = vrot.slane %v2200, 1
        %v2203 = vor.u32 %v2198, %v2202
        %v2205 = vshll.u32 %v2146, 16
        %v2207 = vrot.slane %v2205, 1
        %v2208 = vsel %vm1306, %v2203, %v2207
        %v2210 = vshrl.u32 %v2147, 16
        %v2212 = vshll.u32 %v2147, 16
        %v2214 = vrot.slane %v2212, 1
        %v2215 = vor.u32 %v2210, %v2214
        %v2217 = vshll.u32 %v2148, 16
        %v2219 = vrot.slane %v2217, 1
        %v2220 = vsel %vm1306, %v2215, %v2219
        %v2222 = vshrl.u32 %v2149, 16
        %v2224 = vshll.u32 %v2149, 16
        %v2226 = vrot.slane %v2224, 1
        %v2227 = vor.u32 %v2222, %v2226
        %v2229 = vshll.u32 %v2150, 16
        %v2231 = vrot.slane %v2229, 1
        %v2232 = vsel %vm1306, %v2227, %v2231
        %v2234 = vshrl.u32 %v2151, 16
        %v2236 = vshll.u32 %v2151, 16
        %v2238 = vrot.slane %v2236, 1
        %v2239 = vor.u32 %v2234, %v2238
        %v2241 = vshll.u32 %v2152, 16
        %v2243 = vrot.slane %v2241, 1
        %v2244 = vsel %vm1306, %v2239, %v2243
        %v2246 = vshrl.u32 %v2153, 16
        %v2248 = vshll.u32 %v2153, 16
        %v2250 = vrot.slane %v2248, 1
        %v2251 = vor.u32 %v2246, %v2250
        %v2253 = vshll.u32 %v2154, 16
        %v2255 = vrot.slane %v2253, 1
        %v2256 = vsel %vm1306, %v2251, %v2255
        %v2258 = vshrl.u32 %v2155, 16
        %v2260 = vshll.u32 %v2155, 16
        %v2262 = vrot.slane %v2260, 1
        %v2263 = vor.u32 %v2258, %v2262
        %v2265 = vshll.u32 %v2156, 16
        %v2267 = vrot.slane %v2265, 1
        %v2268 = vsel %vm1306, %v2263, %v2267
        %v2270 = vshrl.u32 %v2157, 16
        %v2272 = vshll.u32 %v2157, 16
        %v2274 = vrot.slane %v2272, 1
        %v2275 = vor.u32 %v2270, %v2274
        %v2277 = vshll.u32 %v2158, 16
        %v2279 = vrot.slane %v2277, 1
        %v2280 = vsel %vm1306, %v2275, %v2279
        %v2282 = vshrl.u32 %v2159, 16
        %v2284 = vshll.u32 %v2159, 16
        %v2286 = vrot.slane %v2284, 1
        %v2287 = vor.u32 %v2282, %v2286
        %v2289 = vshll.u32 %v2160, 16
        %v2291 = vrot.slane %v2289, 1
        %v2292 = vsel %vm1306, %v2287, %v2291
        %v2294 = vshrl.u32 %v2161, 16
        %v2296 = vshll.u32 %v2161, 16
        %v2298 = vrot.slane %v2296, 1
        %v2299 = vor.u32 %v2294, %v2298
        %v2301 = vshll.u32 %v2162, 16
        %v2303 = vrot.slane %v2301, 1
        %v2304 = vsel %vm1306, %v2299, %v2303
        %v2306 = vshrl.u32 %v2163, 16
        %v2308 = vshll.u32 %v2163, 16
        %v2310 = vrot.slane %v2308, 1
        %v2311 = vor.u32 %v2306, %v2310
        %v2313 = vshll.u32 %v2164, 16
        %v2315 = vrot.slane %v2313, 1
        %v2316 = vsel %vm1306, %v2311, %v2315
        %v2318 = vshrl.u32 %v2165, 16
        %v2320 = vshll.u32 %v2165, 16
        %v2322 = vrot.slane %v2320, 1
        %v2323 = vor.u32 %v2318, %v2322
        %v2325 = vshll.u32 %v2166, 16
        %v2327 = vrot.slane %v2325, 1
        %v2328 = vsel %vm1306, %v2323, %v2327
        %v2330 = vshrl.u32 %v2167, 16
        %v2332 = vshll.u32 %v2167, 16
        %v2334 = vrot.slane %v2332, 1
        %v2335 = vor.u32 %v2330, %v2334
        %v2337 = vshll.u32 %v2168, 16
        %v2339 = vrot.slane %v2337, 1
        %v2340 = vsel %vm1306, %v2335, %v2339
        %v2342 = vshrl.u32 %v2169, 16
        %v2344 = vshll.u32 %v2169, 16
        %v2346 = vrot.slane %v2344, 1
        %v2347 = vor.u32 %v2342, %v2346
        %v2349 = vshll.u32 %v2170, 16
        %v2351 = vrot.slane %v2349, 1
        %v2352 = vsel %vm1306, %v2347, %v2351
        %v2354 = vshrl.u32 %v2171, 16
        %v2356 = vshll.u32 %v2171, 16
        %v2358 = vrot.slane %v2356, 1
        %v2359 = vor.u32 %v2354, %v2358
        %v2361 = vshll.u32 %v2172, 16
        %v2363 = vrot.slane %v2361, 1
        %v2364 = vsel %vm1306, %v2359, %v2363
        %2381 = vst [vmem:[#allocation3 + $0x38] sm:$0xff] %v2184
        %2382 = vst [vmem:[#allocation3 + $0x80] sm:$0xff] %v2196
        %2383 = vst [vmem:[#allocation3 + $0xc8] sm:$0xff] %v2208
        %2384 = vst [vmem:[#allocation3 + $0x110] sm:$0xff] %v2220
        %2385 = vst [vmem:[#allocation3 + $0x158] sm:$0xff] %v2232
        %2386 = vst [vmem:[#allocation3 + $0x1a0] sm:$0xff] %v2244
        %2387 = vst [vmem:[#allocation3 + $0x1e8] sm:$0xff] %v2256
        %2388 = vst [vmem:[#allocation3 + $0x230] sm:$0xff] %v2268
        %2389 = vst [vmem:[#allocation3 + $0x278] sm:$0xff] %v2280
        %2390 = vst [vmem:[#allocation3 + $0x2c0] sm:$0xff] %v2292
        %2391 = vst [vmem:[#allocation3 + $0x308] sm:$0xff] %v2304
        %2392 = vst [vmem:[#allocation3 + $0x350] sm:$0xff] %v2316
        %2393 = vst [vmem:[#allocation3 + $0x398] sm:$0xff] %v2328
        %2394 = vst [vmem:[#allocation3 + $0x3e0] sm:$0xff] %v2340
        %2395 = vst [vmem:[#allocation3 + $0x428] sm:$0xff] %v2352
        %2396 = vst [vmem:[#allocation3 + $0x470] sm:$0xff] %v2364
        %v2397 = vld [vmem:[%s2108] sm:$0xfe]
        %v2398 = vld [vmem:[%s2108 + $0x8] sm:$0x1]
        %v2399 = vld [vmem:[%s2108 + $0x10] sm:$0xfe]
        %v2400 = vld [vmem:[%s2108 + $0x18] sm:$0x1]
        %v2401 = vld [vmem:[%s2108 + $0x20] sm:$0xfe]
        %v2402 = vld [vmem:[%s2108 + $0x28] sm:$0x1]
        %v2403 = vld [vmem:[%s2108 + $0x30] sm:$0xfe]
        %v2404 = vld [vmem:[%s2108 + $0x38] sm:$0x1]
        %v2405 = vld [vmem:[%s2108 + $0x40] sm:$0xfe]
        %v2406 = vld [vmem:[%s2108 + $0x48] sm:$0x1]
        %v2407 = vld [vmem:[%s2108 + $0x50] sm:$0xfe]
        %v2408 = vld [vmem:[%s2108 + $0x58] sm:$0x1]
        %v2409 = vld [vmem:[%s2108 + $0x60] sm:$0xfe]
        %v2410 = vld [vmem:[%s2108 + $0x68] sm:$0x1]
        %v2411 = vld [vmem:[%s2108 + $0x70] sm:$0xfe]
        %v2412 = vld [vmem:[%s2108 + $0x78] sm:$0x1]
        %v2413 = vld [vmem:[%s2108 + $0x80] sm:$0xfe]
        %v2414 = vld [vmem:[%s2108 + $0x88] sm:$0x1]
        %v2415 = vld [vmem:[%s2108 + $0x90] sm:$0xfe]
        %v2416 = vld [vmem:[%s2108 + $0x98] sm:$0x1]
        %v2417 = vld [vmem:[%s2108 + $0xa0] sm:$0xfe]
        %v2418 = vld [vmem:[%s2108 + $0xa8] sm:$0x1]
        %v2419 = vld [vmem:[%s2108 + $0xb0] sm:$0xfe]
        %v2420 = vld [vmem:[%s2108 + $0xb8] sm:$0x1]
        %v2421 = vld [vmem:[%s2108 + $0xc0] sm:$0xfe]
        %v2422 = vld [vmem:[%s2108 + $0xc8] sm:$0x1]
        %v2423 = vld [vmem:[%s2108 + $0xd0] sm:$0xfe]
        %v2424 = vld [vmem:[%s2108 + $0xd8] sm:$0x1]
        %v2425 = vld [vmem:[%s2108 + $0xe0] sm:$0xfe]
        %v2426 = vld [vmem:[%s2108 + $0xe8] sm:$0x1]
        %v2427 = vld [vmem:[%s2108 + $0xf0] sm:$0xfe]
        %v2428 = vld [vmem:[%s2108 + $0xf8] sm:$0x1]
        %v2461 = vrot.slane %v2397, 1
        %v2462 = vrot.slane %v2398, 1
        %v2463 = vsel %vm1595, %v2461, %v2462
        %v2464 = vrot.slane %v2399, 1
        %v2465 = vrot.slane %v2400, 1
        %v2466 = vsel %vm1595, %v2464, %v2465
        %v2467 = vrot.slane %v2401, 1
        %v2468 = vrot.slane %v2402, 1
        %v2469 = vsel %vm1595, %v2467, %v2468
        %v2470 = vrot.slane %v2403, 1
        %v2471 = vrot.slane %v2404, 1
        %v2472 = vsel %vm1595, %v2470, %v2471
        %v2473 = vrot.slane %v2405, 1
        %v2474 = vrot.slane %v2406, 1
        %v2475 = vsel %vm1595, %v2473, %v2474
        %v2476 = vrot.slane %v2407, 1
        %v2477 = vrot.slane %v2408, 1
        %v2478 = vsel %vm1595, %v2476, %v2477
        %v2479 = vrot.slane %v2409, 1
        %v2480 = vrot.slane %v2410, 1
        %v2481 = vsel %vm1595, %v2479, %v2480
        %v2482 = vrot.slane %v2411, 1
        %v2483 = vrot.slane %v2412, 1
        %v2484 = vsel %vm1595, %v2482, %v2483
        %v2485 = vrot.slane %v2413, 1
        %v2486 = vrot.slane %v2414, 1
        %v2487 = vsel %vm1595, %v2485, %v2486
        %v2488 = vrot.slane %v2415, 1
        %v2489 = vrot.slane %v2416, 1
        %v2490 = vsel %vm1595, %v2488, %v2489
        %v2491 = vrot.slane %v2417, 1
        %v2492 = vrot.slane %v2418, 1
        %v2493 = vsel %vm1595, %v2491, %v2492
        %v2494 = vrot.slane %v2419, 1
        %v2495 = vrot.slane %v2420, 1
        %v2496 = vsel %vm1595, %v2494, %v2495
        %v2497 = vrot.slane %v2421, 1
        %v2498 = vrot.slane %v2422, 1
        %v2499 = vsel %vm1595, %v2497, %v2498
        %v2500 = vrot.slane %v2423, 1
        %v2501 = vrot.slane %v2424, 1
        %v2502 = vsel %vm1595, %v2500, %v2501
        %v2503 = vrot.slane %v2425, 1
        %v2504 = vrot.slane %v2426, 1
        %v2505 = vsel %vm1595, %v2503, %v2504
        %v2506 = vrot.slane %v2427, 1
        %v2507 = vrot.slane %v2428, 1
        %v2508 = vsel %vm1595, %v2506, %v2507
        %2525 = vst [vmem:[#allocation3 + $0x40] sm:$0xff] %v2463
        %2526 = vst [vmem:[#allocation3 + $0x88] sm:$0xff] %v2466
        %2527 = vst [vmem:[#allocation3 + $0xd0] sm:$0xff] %v2469
        %2528 = vst [vmem:[#allocation3 + $0x118] sm:$0xff] %v2472
        %2529 = vst [vmem:[#allocation3 + $0x160] sm:$0xff] %v2475
        %2530 = vst [vmem:[#allocation3 + $0x1a8] sm:$0xff] %v2478
        %2531 = vst [vmem:[#allocation3 + $0x1f0] sm:$0xff] %v2481
        %2532 = vst [vmem:[#allocation3 + $0x238] sm:$0xff] %v2484
        %2533 = vst [vmem:[#allocation3 + $0x280] sm:$0xff] %v2487
        %2534 = vst [vmem:[#allocation3 + $0x2c8] sm:$0xff] %v2490
        %2535 = vst [vmem:[#allocation3 + $0x310] sm:$0xff] %v2493
        %2536 = vst [vmem:[#allocation3 + $0x358] sm:$0xff] %v2496
        %2537 = vst [vmem:[#allocation3 + $0x3a0] sm:$0xff] %v2499
        %2538 = vst [vmem:[#allocation3 + $0x3e8] sm:$0xff] %v2502
        %2539 = vst [vmem:[#allocation3 + $0x430] sm:$0xff] %v2505
        %2540 = vst [vmem:[#allocation3 + $0x478] sm:$0xff] %v2508
        %v2541 = vld [vmem:[#allocation3] sm:$0xff]
        %v2542 = vld [vmem:[#allocation3 + $0x8] sm:$0xff]
        %v2543 = vld [vmem:[#allocation3 + $0x10] sm:$0xff]
        %v2544 = vld [vmem:[#allocation3 + $0x18] sm:$0xff]
        %v2545 = vld [vmem:[#allocation3 + $0x20] sm:$0xff]
        %v2546 = vld [vmem:[#allocation3 + $0x28] sm:$0xff]
        %v2547 = vld [vmem:[#allocation3 + $0x30] sm:$0xff]
        %v2548 = vld [vmem:[#allocation3 + $0x38] sm:$0xff]
        %v2549 = vld [vmem:[#allocation3 + $0x40] sm:$0xff]
        %v2550 = vld [vmem:[#allocation3 + $0x48] sm:$0xff]
        %v2551 = vld [vmem:[#allocation3 + $0x50] sm:$0xff]
        %v2552 = vld [vmem:[#allocation3 + $0x58] sm:$0xff]
        %v2553 = vld [vmem:[#allocation3 + $0x60] sm:$0xff]
        %v2554 = vld [vmem:[#allocation3 + $0x68] sm:$0xff]
        %v2555 = vld [vmem:[#allocation3 + $0x70] sm:$0xff]
        %v2556 = vld [vmem:[#allocation3 + $0x78] sm:$0xff]
        %v2557 = vld [vmem:[#allocation3 + $0x80] sm:$0xff]
        %v2558 = vld [vmem:[#allocation3 + $0x88] sm:$0xff]
        %v2559 = vld [vmem:[#allocation3 + $0x90] sm:$0xff]
        %v2560 = vld [vmem:[#allocation3 + $0x98] sm:$0xff]
        %v2561 = vld [vmem:[#allocation3 + $0xa0] sm:$0xff]
        %v2562 = vld [vmem:[#allocation3 + $0xa8] sm:$0xff]
        %v2563 = vld [vmem:[#allocation3 + $0xb0] sm:$0xff]
        %v2564 = vld [vmem:[#allocation3 + $0xb8] sm:$0xff]
        %v2565 = vld [vmem:[#allocation3 + $0xc0] sm:$0xff]
        %v2566 = vld [vmem:[#allocation3 + $0xc8] sm:$0xff]
        %v2567 = vld [vmem:[#allocation3 + $0xd0] sm:$0xff]
        %v2568 = vld [vmem:[#allocation3 + $0xd8] sm:$0xff]
        %v2569 = vld [vmem:[#allocation3 + $0xe0] sm:$0xff]
        %v2570 = vld [vmem:[#allocation3 + $0xe8] sm:$0xff]
        %v2571 = vld [vmem:[#allocation3 + $0xf0] sm:$0xff]
        %v2572 = vld [vmem:[#allocation3 + $0xf8] sm:$0xff]
        %v2573 = vld [vmem:[#allocation3 + $0x100] sm:$0xff]
        %v2574 = vld [vmem:[#allocation3 + $0x108] sm:$0xff]
        %v2575 = vld [vmem:[#allocation3 + $0x110] sm:$0xff]
        %v2576 = vld [vmem:[#allocation3 + $0x118] sm:$0xff]
        %v2577 = vld [vmem:[#allocation3 + $0x120] sm:$0xff]
        %v2578 = vld [vmem:[#allocation3 + $0x128] sm:$0xff]
        %v2579 = vld [vmem:[#allocation3 + $0x130] sm:$0xff]
        %v2580 = vld [vmem:[#allocation3 + $0x138] sm:$0xff]
        %v2581 = vld [vmem:[#allocation3 + $0x140] sm:$0xff]
        %v2582 = vld [vmem:[#allocation3 + $0x148] sm:$0xff]
        %v2583 = vld [vmem:[#allocation3 + $0x150] sm:$0xff]
        %v2584 = vld [vmem:[#allocation3 + $0x158] sm:$0xff]
        %v2585 = vld [vmem:[#allocation3 + $0x160] sm:$0xff]
        %v2586 = vld [vmem:[#allocation3 + $0x168] sm:$0xff]
        %v2587 = vld [vmem:[#allocation3 + $0x170] sm:$0xff]
        %v2588 = vld [vmem:[#allocation3 + $0x178] sm:$0xff]
        %v2589 = vld [vmem:[#allocation3 + $0x180] sm:$0xff]
        %v2590 = vld [vmem:[#allocation3 + $0x188] sm:$0xff]
        %v2591 = vld [vmem:[#allocation3 + $0x190] sm:$0xff]
        %v2592 = vld [vmem:[#allocation3 + $0x198] sm:$0xff]
        %v2593 = vld [vmem:[#allocation3 + $0x1a0] sm:$0xff]
        %v2594 = vld [vmem:[#allocation3 + $0x1a8] sm:$0xff]
        %v2595 = vld [vmem:[#allocation3 + $0x1b0] sm:$0xff]
        %v2596 = vld [vmem:[#allocation3 + $0x1b8] sm:$0xff]
        %v2597 = vld [vmem:[#allocation3 + $0x1c0] sm:$0xff]
        %v2598 = vld [vmem:[#allocation3 + $0x1c8] sm:$0xff]
        %v2599 = vld [vmem:[#allocation3 + $0x1d0] sm:$0xff]
        %v2600 = vld [vmem:[#allocation3 + $0x1d8] sm:$0xff]
        %v2601 = vld [vmem:[#allocation3 + $0x1e0] sm:$0xff]
        %v2602 = vld [vmem:[#allocation3 + $0x1e8] sm:$0xff]
        %v2603 = vld [vmem:[#allocation3 + $0x1f0] sm:$0xff]
        %v2604 = vld [vmem:[#allocation3 + $0x1f8] sm:$0xff]
        %v2605 = vld [vmem:[#allocation3 + $0x200] sm:$0xff]
        %v2606 = vld [vmem:[#allocation3 + $0x208] sm:$0xff]
        %v2607 = vld [vmem:[#allocation3 + $0x210] sm:$0xff]
        %v2608 = vld [vmem:[#allocation3 + $0x218] sm:$0xff]
        %v2609 = vld [vmem:[#allocation3 + $0x220] sm:$0xff]
        %v2610 = vld [vmem:[#allocation3 + $0x228] sm:$0xff]
        %v2611 = vld [vmem:[#allocation3 + $0x230] sm:$0xff]
        %v2612 = vld [vmem:[#allocation3 + $0x238] sm:$0xff]
        %v2613 = vld [vmem:[#allocation3 + $0x240] sm:$0xff]
        %v2614 = vld [vmem:[#allocation3 + $0x248] sm:$0xff]
        %v2615 = vld [vmem:[#allocation3 + $0x250] sm:$0xff]
        %v2616 = vld [vmem:[#allocation3 + $0x258] sm:$0xff]
        %v2617 = vld [vmem:[#allocation3 + $0x260] sm:$0xff]
        %v2618 = vld [vmem:[#allocation3 + $0x268] sm:$0xff]
        %v2619 = vld [vmem:[#allocation3 + $0x270] sm:$0xff]
        %v2620 = vld [vmem:[#allocation3 + $0x278] sm:$0xff]
        %v2621 = vld [vmem:[#allocation3 + $0x280] sm:$0xff]
        %v2622 = vld [vmem:[#allocation3 + $0x288] sm:$0xff]
        %v2623 = vld [vmem:[#allocation3 + $0x290] sm:$0xff]
        %v2624 = vld [vmem:[#allocation3 + $0x298] sm:$0xff]
        %v2625 = vld [vmem:[#allocation3 + $0x2a0] sm:$0xff]
        %v2626 = vld [vmem:[#allocation3 + $0x2a8] sm:$0xff]
        %v2627 = vld [vmem:[#allocation3 + $0x2b0] sm:$0xff]
        %v2628 = vld [vmem:[#allocation3 + $0x2b8] sm:$0xff]
        %v2629 = vld [vmem:[#allocation3 + $0x2c0] sm:$0xff]
        %v2630 = vld [vmem:[#allocation3 + $0x2c8] sm:$0xff]
        %v2631 = vld [vmem:[#allocation3 + $0x2d0] sm:$0xff]
        %v2632 = vld [vmem:[#allocation3 + $0x2d8] sm:$0xff]
        %v2633 = vld [vmem:[#allocation3 + $0x2e0] sm:$0xff]
        %v2634 = vld [vmem:[#allocation3 + $0x2e8] sm:$0xff]
        %v2635 = vld [vmem:[#allocation3 + $0x2f0] sm:$0xff]
        %v2636 = vld [vmem:[#allocation3 + $0x2f8] sm:$0xff]
        %v2637 = vld [vmem:[#allocation3 + $0x300] sm:$0xff]
        %v2638 = vld [vmem:[#allocation3 + $0x308] sm:$0xff]
        %v2639 = vld [vmem:[#allocation3 + $0x310] sm:$0xff]
        %v2640 = vld [vmem:[#allocation3 + $0x318] sm:$0xff]
        %v2641 = vld [vmem:[#allocation3 + $0x320] sm:$0xff]
        %v2642 = vld [vmem:[#allocation3 + $0x328] sm:$0xff]
        %v2643 = vld [vmem:[#allocation3 + $0x330] sm:$0xff]
        %v2644 = vld [vmem:[#allocation3 + $0x338] sm:$0xff]
        %v2645 = vld [vmem:[#allocation3 + $0x340] sm:$0xff]
        %v2646 = vld [vmem:[#allocation3 + $0x348] sm:$0xff]
        %v2647 = vld [vmem:[#allocation3 + $0x350] sm:$0xff]
        %v2648 = vld [vmem:[#allocation3 + $0x358] sm:$0xff]
        %v2649 = vld [vmem:[#allocation3 + $0x360] sm:$0xff]
        %v2650 = vld [vmem:[#allocation3 + $0x368] sm:$0xff]
        %v2651 = vld [vmem:[#allocation3 + $0x370] sm:$0xff]
        %v2652 = vld [vmem:[#allocation3 + $0x378] sm:$0xff]
        %v2653 = vld [vmem:[#allocation3 + $0x380] sm:$0xff]
        %v2654 = vld [vmem:[#allocation3 + $0x388] sm:$0xff]
        %v2655 = vld [vmem:[#allocation3 + $0x390] sm:$0xff]
        %v2656 = vld [vmem:[#allocation3 + $0x398] sm:$0xff]
        %v2657 = vld [vmem:[#allocation3 + $0x3a0] sm:$0xff]
        %v2658 = vld [vmem:[#allocation3 + $0x3a8] sm:$0xff]
        %v2659 = vld [vmem:[#allocation3 + $0x3b0] sm:$0xff]
        %v2660 = vld [vmem:[#allocation3 + $0x3b8] sm:$0xff]
        %v2661 = vld [vmem:[#allocation3 + $0x3c0] sm:$0xff]
        %v2662 = vld [vmem:[#allocation3 + $0x3c8] sm:$0xff]
        %v2663 = vld [vmem:[#allocation3 + $0x3d0] sm:$0xff]
        %v2664 = vld [vmem:[#allocation3 + $0x3d8] sm:$0xff]
        %v2665 = vld [vmem:[#allocation3 + $0x3e0] sm:$0xff]
        %v2666 = vld [vmem:[#allocation3 + $0x3e8] sm:$0xff]
        %v2667 = vld [vmem:[#allocation3 + $0x3f0] sm:$0xff]
        %v2668 = vld [vmem:[#allocation3 + $0x3f8] sm:$0xff]
        %v2669 = vld [vmem:[#allocation3 + $0x400] sm:$0xff]
        %v2670 = vld [vmem:[#allocation3 + $0x408] sm:$0xff]
        %v2671 = vld [vmem:[#allocation3 + $0x410] sm:$0xff]
        %v2672 = vld [vmem:[#allocation3 + $0x418] sm:$0xff]
        %v2673 = vld [vmem:[#allocation3 + $0x420] sm:$0xff]
        %v2674 = vld [vmem:[#allocation3 + $0x428] sm:$0xff]
        %v2675 = vld [vmem:[#allocation3 + $0x430] sm:$0xff]
        %v2676 = vld [vmem:[#allocation3 + $0x438] sm:$0xff]
        %v2677 = vld [vmem:[#allocation3 + $0x440] sm:$0xff]
        %v2678 = vld [vmem:[#allocation3 + $0x448] sm:$0xff]
        %v2679 = vld [vmem:[#allocation3 + $0x450] sm:$0xff]
        %v2680 = vld [vmem:[#allocation3 + $0x458] sm:$0xff]
        %v2681 = vld [vmem:[#allocation3 + $0x460] sm:$0xff]
        %v2682 = vld [vmem:[#allocation3 + $0x468] sm:$0xff]
        %v2683 = vld [vmem:[#allocation3 + $0x470] sm:$0xff]
        %v2684 = vld [vmem:[#allocation3 + $0x478] sm:$0xff]
        %v2685 = vld [vmem:[%s3] sm:$0xf]
        %v2686 = vld [vmem:[%s3 + $0x4] sm:$0xf]
        %v2687 = vld [vmem:[%s3 + $0x8] sm:$0xf]
        %v2688 = vld [vmem:[%s3 + $0xc] sm:$0xf]
        %v2689 = vld [vmem:[%s3 + $0x10] sm:$0xf]
        %v2690 = vld [vmem:[%s3 + $0x14] sm:$0xf]
        %v2691 = vld [vmem:[%s3 + $0x18] sm:$0xf]
        %v2692 = vld [vmem:[%s3 + $0x1c] sm:$0xf]
        %v2693 = vld [vmem:[%s3 + $0x20] sm:$0xf]
        %v2694 = vld [vmem:[%s3 + $0x24] sm:$0xf]
        %v2695 = vld [vmem:[%s3 + $0x28] sm:$0xf]
        %v2696 = vld [vmem:[%s3 + $0x2c] sm:$0xf]
        %v2697 = vld [vmem:[%s3 + $0x30] sm:$0xf]
        %v2698 = vld [vmem:[%s3 + $0x34] sm:$0xf]
        %v2699 = vld [vmem:[%s3 + $0x38] sm:$0xf]
        %v2700 = vld [vmem:[%s3 + $0x3c] sm:$0xf]
        %v2701 = vld [vmem:[%s3 + $0x40] sm:$0xf]
        %v2702 = vld [vmem:[%s3 + $0x44] sm:$0xf]
        %v2703 = vld [vmem:[%s3 + $0x48] sm:$0xf]
        %v2704 = vld [vmem:[%s3 + $0x4c] sm:$0xf]
        %v2705 = vld [vmem:[%s3 + $0x50] sm:$0xf]
        %v2706 = vld [vmem:[%s3 + $0x54] sm:$0xf]
        %v2707 = vld [vmem:[%s3 + $0x58] sm:$0xf]
        %v2708 = vld [vmem:[%s3 + $0x5c] sm:$0xf]
        %v2709 = vld [vmem:[%s3 + $0x60] sm:$0xf]
        %v2710 = vld [vmem:[%s3 + $0x64] sm:$0xf]
        %v2711 = vld [vmem:[%s3 + $0x68] sm:$0xf]
        %v2712 = vld [vmem:[%s3 + $0x6c] sm:$0xf]
        %v2713 = vld [vmem:[%s3 + $0x70] sm:$0xf]
        %v2714 = vld [vmem:[%s3 + $0x74] sm:$0xf]
        %v2715 = vld [vmem:[%s3 + $0x78] sm:$0xf]
        %v2716 = vld [vmem:[%s3 + $0x7c] sm:$0xf]
        %v2717 = vld [vmem:[%s3 + $0x80] sm:$0xf]
        %v2718 = vld [vmem:[%s3 + $0x84] sm:$0xf]
        %v2719 = vld [vmem:[%s3 + $0x88] sm:$0xf]
        %v2720 = vld [vmem:[%s3 + $0x8c] sm:$0xf]
        %v2721 = vld [vmem:[%s3 + $0x90] sm:$0xf]
        %v2722 = vld [vmem:[%s3 + $0x94] sm:$0xf]
        %v2723 = vld [vmem:[%s3 + $0x98] sm:$0xf]
        %v2724 = vld [vmem:[%s3 + $0x9c] sm:$0xf]
        %v2725 = vld [vmem:[%s3 + $0xa0] sm:$0xf]
        %v2726 = vld [vmem:[%s3 + $0xa4] sm:$0xf]
        %v2727 = vld [vmem:[%s3 + $0xa8] sm:$0xf]
        %v2728 = vld [vmem:[%s3 + $0xac] sm:$0xf]
        %v2729 = vld [vmem:[%s3 + $0xb0] sm:$0xf]
        %v2730 = vld [vmem:[%s3 + $0xb4] sm:$0xf]
        %v2731 = vld [vmem:[%s3 + $0xb8] sm:$0xf]
        %v2732 = vld [vmem:[%s3 + $0xbc] sm:$0xf]
        %v2733 = vld [vmem:[%s3 + $0xc0] sm:$0xf]
        %v2734 = vld [vmem:[%s3 + $0xc4] sm:$0xf]
        %v2735 = vld [vmem:[%s3 + $0xc8] sm:$0xf]
        %v2736 = vld [vmem:[%s3 + $0xcc] sm:$0xf]
        %v2737 = vld [vmem:[%s3 + $0xd0] sm:$0xf]
        %v2738 = vld [vmem:[%s3 + $0xd4] sm:$0xf]
        %v2739 = vld [vmem:[%s3 + $0xd8] sm:$0xf]
        %v2740 = vld [vmem:[%s3 + $0xdc] sm:$0xf]
        %v2741 = vld [vmem:[%s3 + $0xe0] sm:$0xf]
        %v2742 = vld [vmem:[%s3 + $0xe4] sm:$0xf]
        %v2743 = vld [vmem:[%s3 + $0xe8] sm:$0xf]
        %v2744 = vld [vmem:[%s3 + $0xec] sm:$0xf]
        %v2745 = vld [vmem:[%s3 + $0xf0] sm:$0xf]
        %v2746 = vld [vmem:[%s3 + $0xf4] sm:$0xf]
        %v2747 = vld [vmem:[%s3 + $0xf8] sm:$0xf]
        %v2748 = vld [vmem:[%s3 + $0xfc] sm:$0xf]
        %v2749 = vld [vmem:[%s3 + $0x100] sm:$0xf]
        %v2750 = vld [vmem:[%s3 + $0x104] sm:$0xf]
        %v2751 = vld [vmem:[%s3 + $0x108] sm:$0xf]
        %v2752 = vld [vmem:[%s3 + $0x10c] sm:$0xf]
        %v2753 = vld [vmem:[%s3 + $0x110] sm:$0xf]
        %v2754 = vld [vmem:[%s3 + $0x114] sm:$0xf]
        %v2755 = vld [vmem:[%s3 + $0x118] sm:$0xf]
        %v2756 = vld [vmem:[%s3 + $0x11c] sm:$0xf]
        %v2757 = vld [vmem:[%s3 + $0x120] sm:$0xf]
        %v2758 = vld [vmem:[%s3 + $0x124] sm:$0xf]
        %v2759 = vld [vmem:[%s3 + $0x128] sm:$0xf]
        %v2760 = vld [vmem:[%s3 + $0x12c] sm:$0xf]
        %v2761 = vld [vmem:[%s3 + $0x130] sm:$0xf]
        %v2762 = vld [vmem:[%s3 + $0x134] sm:$0xf]
        %v2763 = vld [vmem:[%s3 + $0x138] sm:$0xf]
        %v2764 = vld [vmem:[%s3 + $0x13c] sm:$0xf]
        %v2765 = vld [vmem:[%s3 + $0x140] sm:$0xf]
        %v2766 = vld [vmem:[%s3 + $0x144] sm:$0xf]
        %v2767 = vld [vmem:[%s3 + $0x148] sm:$0xf]
        %v2768 = vld [vmem:[%s3 + $0x14c] sm:$0xf]
        %v2769 = vld [vmem:[%s3 + $0x150] sm:$0xf]
        %v2770 = vld [vmem:[%s3 + $0x154] sm:$0xf]
        %v2771 = vld [vmem:[%s3 + $0x158] sm:$0xf]
        %v2772 = vld [vmem:[%s3 + $0x15c] sm:$0xf]
        %v2773 = vld [vmem:[%s3 + $0x160] sm:$0xf]
        %v2774 = vld [vmem:[%s3 + $0x164] sm:$0xf]
        %v2775 = vld [vmem:[%s3 + $0x168] sm:$0xf]
        %v2776 = vld [vmem:[%s3 + $0x16c] sm:$0xf]
        %v2777 = vld [vmem:[%s3 + $0x170] sm:$0xf]
        %v2778 = vld [vmem:[%s3 + $0x174] sm:$0xf]
        %v2779 = vld [vmem:[%s3 + $0x178] sm:$0xf]
        %v2780 = vld [vmem:[%s3 + $0x17c] sm:$0xf]
        %v2781 = vld [vmem:[%s3 + $0x180] sm:$0xf]
        %v2782 = vld [vmem:[%s3 + $0x184] sm:$0xf]
        %v2783 = vld [vmem:[%s3 + $0x188] sm:$0xf]
        %v2784 = vld [vmem:[%s3 + $0x18c] sm:$0xf]
        %v2785 = vld [vmem:[%s3 + $0x190] sm:$0xf]
        %v2786 = vld [vmem:[%s3 + $0x194] sm:$0xf]
        %v2787 = vld [vmem:[%s3 + $0x198] sm:$0xf]
        %v2788 = vld [vmem:[%s3 + $0x19c] sm:$0xf]
        %v2789 = vld [vmem:[%s3 + $0x1a0] sm:$0xf]
        %v2790 = vld [vmem:[%s3 + $0x1a4] sm:$0xf]
        %v2791 = vld [vmem:[%s3 + $0x1a8] sm:$0xf]
        %v2792 = vld [vmem:[%s3 + $0x1ac] sm:$0xf]
        %v2793 = vld [vmem:[%s3 + $0x1b0] sm:$0xf]
        %v2794 = vld [vmem:[%s3 + $0x1b4] sm:$0xf]
        %v2795 = vld [vmem:[%s3 + $0x1b8] sm:$0xf]
        %v2796 = vld [vmem:[%s3 + $0x1bc] sm:$0xf]
        %v2797 = vld [vmem:[%s3 + $0x1c0] sm:$0xf]
        %v2798 = vld [vmem:[%s3 + $0x1c4] sm:$0xf]
        %v2799 = vld [vmem:[%s3 + $0x1c8] sm:$0xf]
        %v2800 = vld [vmem:[%s3 + $0x1cc] sm:$0xf]
        %v2801 = vld [vmem:[%s3 + $0x1d0] sm:$0xf]
        %v2802 = vld [vmem:[%s3 + $0x1d4] sm:$0xf]
        %v2803 = vld [vmem:[%s3 + $0x1d8] sm:$0xf]
        %v2804 = vld [vmem:[%s3 + $0x1dc] sm:$0xf]
        %v2805 = vld [vmem:[%s3 + $0x1e0] sm:$0xf]
        %v2806 = vld [vmem:[%s3 + $0x1e4] sm:$0xf]
        %v2807 = vld [vmem:[%s3 + $0x1e8] sm:$0xf]
        %v2808 = vld [vmem:[%s3 + $0x1ec] sm:$0xf]
        %v2809 = vld [vmem:[%s3 + $0x1f0] sm:$0xf]
        %v2810 = vld [vmem:[%s3 + $0x1f4] sm:$0xf]
        %v2811 = vld [vmem:[%s3 + $0x1f8] sm:$0xf]
        %v2812 = vld [vmem:[%s3 + $0x1fc] sm:$0xf]
        %v2813 = vld [vmem:[%s3 + $0x200] sm:$0xf]
        %v2814 = vld [vmem:[%s3 + $0x204] sm:$0xf]
        %v2815 = vld [vmem:[%s3 + $0x208] sm:$0xf]
        %v2816 = vld [vmem:[%s3 + $0x20c] sm:$0xf]
        %v2817 = vld [vmem:[%s3 + $0x210] sm:$0xf]
        %v2818 = vld [vmem:[%s3 + $0x214] sm:$0xf]
        %v2819 = vld [vmem:[%s3 + $0x218] sm:$0xf]
        %v2820 = vld [vmem:[%s3 + $0x21c] sm:$0xf]
        %v2821 = vld [vmem:[%s3 + $0x220] sm:$0xf]
        %v2822 = vld [vmem:[%s3 + $0x224] sm:$0xf]
        %v2823 = vld [vmem:[%s3 + $0x228] sm:$0xf]
        %v2824 = vld [vmem:[%s3 + $0x22c] sm:$0xf]
        %v2825 = vld [vmem:[%s3 + $0x230] sm:$0xf]
        %v2826 = vld [vmem:[%s3 + $0x234] sm:$0xf]
        %v2827 = vld [vmem:[%s3 + $0x238] sm:$0xf]
        %v2828 = vld [vmem:[%s3 + $0x23c] sm:$0xf]
        %v2973 = vunpack.c.l.b16 %v2685
        %v2974 = vunpack.c.l.b16 %v2686
        %v2975 = vunpack.c.l.b16 %v2687
        %v2976 = vunpack.c.l.b16 %v2688
        %v2977 = vunpack.c.l.b16 %v2689
        %v2978 = vunpack.c.l.b16 %v2690
        %v2979 = vunpack.c.l.b16 %v2691
        %v2980 = vunpack.c.l.b16 %v2692
        %v2981 = vunpack.c.l.b16 %v2693
        %v2982 = vunpack.c.l.b16 %v2694
        %v2983 = vunpack.c.l.b16 %v2695
        %v2984 = vunpack.c.l.b16 %v2696
        %v2985 = vunpack.c.l.b16 %v2697
        %v2986 = vunpack.c.l.b16 %v2698
        %v2987 = vunpack.c.l.b16 %v2699
        %v2988 = vunpack.c.l.b16 %v2700
        %v2989 = vunpack.c.l.b16 %v2701
        %v2990 = vunpack.c.l.b16 %v2702
        %v2991 = vunpack.c.l.b16 %v2703
        %v2992 = vunpack.c.l.b16 %v2704
        %v2993 = vunpack.c.l.b16 %v2705
        %v2994 = vunpack.c.l.b16 %v2706
        %v2995 = vunpack.c.l.b16 %v2707
        %v2996 = vunpack.c.l.b16 %v2708
        %v2997 = vunpack.c.l.b16 %v2709
        %v2998 = vunpack.c.l.b16 %v2710
        %v2999 = vunpack.c.l.b16 %v2711
        %v3000 = vunpack.c.l.b16 %v2712
        %v3001 = vunpack.c.l.b16 %v2713
        %v3002 = vunpack.c.l.b16 %v2714
        %v3003 = vunpack.c.l.b16 %v2715
        %v3004 = vunpack.c.l.b16 %v2716
        %v3005 = vunpack.c.l.b16 %v2717
        %v3006 = vunpack.c.l.b16 %v2718
        %v3007 = vunpack.c.l.b16 %v2719
        %v3008 = vunpack.c.l.b16 %v2720
        %v3009 = vunpack.c.l.b16 %v2721
        %v3010 = vunpack.c.l.b16 %v2722
        %v3011 = vunpack.c.l.b16 %v2723
        %v3012 = vunpack.c.l.b16 %v2724
        %v3013 = vunpack.c.l.b16 %v2725
        %v3014 = vunpack.c.l.b16 %v2726
        %v3015 = vunpack.c.l.b16 %v2727
        %v3016 = vunpack.c.l.b16 %v2728
        %v3017 = vunpack.c.l.b16 %v2729
        %v3018 = vunpack.c.l.b16 %v2730
        %v3019 = vunpack.c.l.b16 %v2731
        %v3020 = vunpack.c.l.b16 %v2732
        %v3021 = vunpack.c.l.b16 %v2733
        %v3022 = vunpack.c.l.b16 %v2734
        %v3023 = vunpack.c.l.b16 %v2735
        %v3024 = vunpack.c.l.b16 %v2736
        %v3025 = vunpack.c.l.b16 %v2737
        %v3026 = vunpack.c.l.b16 %v2738
        %v3027 = vunpack.c.l.b16 %v2739
        %v3028 = vunpack.c.l.b16 %v2740
        %v3029 = vunpack.c.l.b16 %v2741
        %v3030 = vunpack.c.l.b16 %v2742
        %v3031 = vunpack.c.l.b16 %v2743
        %v3032 = vunpack.c.l.b16 %v2744
        %v3033 = vunpack.c.l.b16 %v2745
        %v3034 = vunpack.c.l.b16 %v2746
        %v3035 = vunpack.c.l.b16 %v2747
        %v3036 = vunpack.c.l.b16 %v2748
        %v3037 = vunpack.c.l.b16 %v2749
        %v3038 = vunpack.c.l.b16 %v2750
        %v3039 = vunpack.c.l.b16 %v2751
        %v3040 = vunpack.c.l.b16 %v2752
        %v3041 = vunpack.c.l.b16 %v2753
        %v3042 = vunpack.c.l.b16 %v2754
        %v3043 = vunpack.c.l.b16 %v2755
        %v3044 = vunpack.c.l.b16 %v2756
        %v3045 = vunpack.c.l.b16 %v2757
        %v3046 = vunpack.c.l.b16 %v2758
        %v3047 = vunpack.c.l.b16 %v2759
        %v3048 = vunpack.c.l.b16 %v2760
        %v3049 = vunpack.c.l.b16 %v2761
        %v3050 = vunpack.c.l.b16 %v2762
        %v3051 = vunpack.c.l.b16 %v2763
        %v3052 = vunpack.c.l.b16 %v2764
        %v3053 = vunpack.c.l.b16 %v2765
        %v3054 = vunpack.c.l.b16 %v2766
        %v3055 = vunpack.c.l.b16 %v2767
        %v3056 = vunpack.c.l.b16 %v2768
        %v3057 = vunpack.c.l.b16 %v2769
        %v3058 = vunpack.c.l.b16 %v2770
        %v3059 = vunpack.c.l.b16 %v2771
        %v3060 = vunpack.c.l.b16 %v2772
        %v3061 = vunpack.c.l.b16 %v2773
        %v3062 = vunpack.c.l.b16 %v2774
        %v3063 = vunpack.c.l.b16 %v2775
        %v3064 = vunpack.c.l.b16 %v2776
        %v3065 = vunpack.c.l.b16 %v2777
        %v3066 = vunpack.c.l.b16 %v2778
        %v3067 = vunpack.c.l.b16 %v2779
        %v3068 = vunpack.c.l.b16 %v2780
        %v3069 = vunpack.c.l.b16 %v2781
        %v3070 = vunpack.c.l.b16 %v2782
        %v3071 = vunpack.c.l.b16 %v2783
        %v3072 = vunpack.c.l.b16 %v2784
        %v3073 = vunpack.c.l.b16 %v2785
        %v3074 = vunpack.c.l.b16 %v2786
        %v3075 = vunpack.c.l.b16 %v2787
        %v3076 = vunpack.c.l.b16 %v2788
        %v3077 = vunpack.c.l.b16 %v2789
        %v3078 = vunpack.c.l.b16 %v2790
        %v3079 = vunpack.c.l.b16 %v2791
        %v3080 = vunpack.c.l.b16 %v2792
        %v3081 = vunpack.c.l.b16 %v2793
        %v3082 = vunpack.c.l.b16 %v2794
        %v3083 = vunpack.c.l.b16 %v2795
        %v3084 = vunpack.c.l.b16 %v2796
        %v3085 = vunpack.c.l.b16 %v2797
        %v3086 = vunpack.c.l.b16 %v2798
        %v3087 = vunpack.c.l.b16 %v2799
        %v3088 = vunpack.c.l.b16 %v2800
        %v3089 = vunpack.c.l.b16 %v2801
        %v3090 = vunpack.c.l.b16 %v2802
        %v3091 = vunpack.c.l.b16 %v2803
        %v3092 = vunpack.c.l.b16 %v2804
        %v3093 = vunpack.c.l.b16 %v2805
        %v3094 = vunpack.c.l.b16 %v2806
        %v3095 = vunpack.c.l.b16 %v2807
        %v3096 = vunpack.c.l.b16 %v2808
        %v3097 = vunpack.c.l.b16 %v2809
        %v3098 = vunpack.c.l.b16 %v2810
        %v3099 = vunpack.c.l.b16 %v2811
        %v3100 = vunpack.c.l.b16 %v2812
        %v3101 = vunpack.c.l.b16 %v2813
        %v3102 = vunpack.c.l.b16 %v2814
        %v3103 = vunpack.c.l.b16 %v2815
        %v3104 = vunpack.c.l.b16 %v2816
        %v3105 = vunpack.c.l.b16 %v2817
        %v3106 = vunpack.c.l.b16 %v2818
        %v3107 = vunpack.c.l.b16 %v2819
        %v3108 = vunpack.c.l.b16 %v2820
        %v3109 = vunpack.c.l.b16 %v2821
        %v3110 = vunpack.c.l.b16 %v2822
        %v3111 = vunpack.c.l.b16 %v2823
        %v3112 = vunpack.c.l.b16 %v2824
        %v3113 = vunpack.c.l.b16 %v2825
        %v3114 = vunpack.c.l.b16 %v2826
        %v3115 = vunpack.c.l.b16 %v2827
        %v3116 = vunpack.c.l.b16 %v2828
        %v3117 = vpack.c.b16 %v2974, %v2973
        %v3118 = vpack.c.b16 %v2976, %v2975
        %v3119 = vpack.c.b16 %v2978, %v2977
        %v3120 = vpack.c.b16 %v2980, %v2979
        %v3121 = vpack.c.b16 %v2982, %v2981
        %v3122 = vpack.c.b16 %v2984, %v2983
        %v3123 = vpack.c.b16 %v2986, %v2985
        %v3124 = vpack.c.b16 %v2988, %v2987
        %v3125 = vpack.c.b16 %v2990, %v2989
        %v3126 = vpack.c.b16 %v2992, %v2991
        %v3127 = vpack.c.b16 %v2994, %v2993
        %v3128 = vpack.c.b16 %v2996, %v2995
        %v3129 = vpack.c.b16 %v2998, %v2997
        %v3130 = vpack.c.b16 %v3000, %v2999
        %v3131 = vpack.c.b16 %v3002, %v3001
        %v3132 = vpack.c.b16 %v3004, %v3003
        %v3133 = vpack.c.b16 %v3006, %v3005
        %v3134 = vpack.c.b16 %v3008, %v3007
        %v3135 = vpack.c.b16 %v3010, %v3009
        %v3136 = vpack.c.b16 %v3012, %v3011
        %v3137 = vpack.c.b16 %v3014, %v3013
        %v3138 = vpack.c.b16 %v3016, %v3015
        %v3139 = vpack.c.b16 %v3018, %v3017
        %v3140 = vpack.c.b16 %v3020, %v3019
        %v3141 = vpack.c.b16 %v3022, %v3021
        %v3142 = vpack.c.b16 %v3024, %v3023
        %v3143 = vpack.c.b16 %v3026, %v3025
        %v3144 = vpack.c.b16 %v3028, %v3027
        %v3145 = vpack.c.b16 %v3030, %v3029
        %v3146 = vpack.c.b16 %v3032, %v3031
        %v3147 = vpack.c.b16 %v3034, %v3033
        %v3148 = vpack.c.b16 %v3036, %v3035
        %v3149 = vpack.c.b16 %v3038, %v3037
        %v3150 = vpack.c.b16 %v3040, %v3039
        %v3151 = vpack.c.b16 %v3042, %v3041
        %v3152 = vpack.c.b16 %v3044, %v3043
        %v3153 = vpack.c.b16 %v3046, %v3045
        %v3154 = vpack.c.b16 %v3048, %v3047
        %v3155 = vpack.c.b16 %v3050, %v3049
        %v3156 = vpack.c.b16 %v3052, %v3051
        %v3157 = vpack.c.b16 %v3054, %v3053
        %v3158 = vpack.c.b16 %v3056, %v3055
        %v3159 = vpack.c.b16 %v3058, %v3057
        %v3160 = vpack.c.b16 %v3060, %v3059
        %v3161 = vpack.c.b16 %v3062, %v3061
        %v3162 = vpack.c.b16 %v3064, %v3063
        %v3163 = vpack.c.b16 %v3066, %v3065
        %v3164 = vpack.c.b16 %v3068, %v3067
        %v3165 = vpack.c.b16 %v3070, %v3069
        %v3166 = vpack.c.b16 %v3072, %v3071
        %v3167 = vpack.c.b16 %v3074, %v3073
        %v3168 = vpack.c.b16 %v3076, %v3075
        %v3169 = vpack.c.b16 %v3078, %v3077
        %v3170 = vpack.c.b16 %v3080, %v3079
        %v3171 = vpack.c.b16 %v3082, %v3081
        %v3172 = vpack.c.b16 %v3084, %v3083
        %v3173 = vpack.c.b16 %v3086, %v3085
        %v3174 = vpack.c.b16 %v3088, %v3087
        %v3175 = vpack.c.b16 %v3090, %v3089
        %v3176 = vpack.c.b16 %v3092, %v3091
        %v3177 = vpack.c.b16 %v3094, %v3093
        %v3178 = vpack.c.b16 %v3096, %v3095
        %v3179 = vpack.c.b16 %v3098, %v3097
        %v3180 = vpack.c.b16 %v3100, %v3099
        %v3181 = vpack.c.b16 %v3102, %v3101
        %v3182 = vpack.c.b16 %v3104, %v3103
        %v3183 = vpack.c.b16 %v3106, %v3105
        %v3184 = vpack.c.b16 %v3108, %v3107
        %v3185 = vpack.c.b16 %v3110, %v3109
        %v3186 = vpack.c.b16 %v3112, %v3111
        %v3187 = vpack.c.b16 %v3114, %v3113
        %v3188 = vpack.c.b16 %v3116, %v3115
        %3261 = vmatprep.subr.bf16.mxu0 0
        %3262 = vmatpush1.bf16.msra.mxu0 %v3117
        %3263 = vmatprep.subr.bf16.mxu0 0
        %3264 = vmatpush1.bf16.msra.mxu0 %v3118
        %3265 = vmatprep.subr.bf16.mxu0 0
        %3266 = vmatpush1.bf16.msra.mxu0 %v3119
        %3267 = vmatprep.subr.bf16.mxu0 0
        %3268 = vmatpush1.bf16.msra.mxu0 %v3120
        %3269 = vmatprep.subr.bf16.mxu0 0
        %3270 = vmatpush1.bf16.msra.mxu0 %v3121
        %3271 = vmatprep.subr.bf16.mxu0 0
        %3272 = vmatpush1.bf16.msra.mxu0 %v3122
        %3273 = vmatprep.subr.bf16.mxu0 0
        %3274 = vmatpush1.bf16.msra.mxu0 %v3123
        %3275 = vmatprep.subr.bf16.mxu0 0
        %3276 = vmatpush1.bf16.msra.mxu0 %v3124
        %3277 = vmatprep.subr.bf16.mxu0 0
        %3278 = vmatpush1.bf16.msra.mxu0 %v3125
        %3279 = vmatprep.subr.bf16.mxu0 0
        %3280 = vmatpush1.bf16.msra.mxu0 %v3126
        %3281 = vmatprep.subr.bf16.mxu0 0
        %3282 = vmatpush1.bf16.msra.mxu0 %v3127
        %3283 = vmatprep.subr.bf16.mxu0 0
        %3284 = vmatpush1.bf16.msra.mxu0 %v3128
        %3285 = vmatprep.subr.bf16.mxu0 0
        %3286 = vmatpush1.bf16.msra.mxu0 %v3129
        %3287 = vmatprep.subr.bf16.mxu0 0
        %3288 = vmatpush1.bf16.msra.mxu0 %v3130
        %3289 = vmatprep.subr.bf16.mxu0 0
        %3290 = vmatpush1.bf16.msra.mxu0 %v3131
        %3291 = vmatprep.subr.bf16.mxu0 0
        %3292 = vmatpush1.bf16.msra.mxu0 %v3132
        %3293 = vmatprep.mubr.bf16.mxu0 %v2542
        %3294 = vmatmul.mubr.bf16.gmra.mrb[0].mxu0 %v2541
        %v3295 = vpop.f32.mrb[0].mxu0
        %v3296 = vadd.f32 0.0, %v3295
        %v3297 = vpop.f32.mrb[0].mxu0
        %v3298 = vpop.f32.mrb[0].mxu0
        %v3299 = vadd.f32 0.0, %v3298
        %v3300 = vpop.f32.mrb[0].mxu0
        %3301 = vmatprep.mubr.bf16.mxu0 %v2551
        %3302 = vmatmul.mubr.bf16.gmra.mrb[0].mxu0 %v2550
        %v3303 = vpop.f32.mrb[0].mxu0
        %v3304 = vadd.f32 0.0, %v3303
        %v3305 = vpop.f32.mrb[0].mxu0
        %v3306 = vpop.f32.mrb[0].mxu0
        %v3307 = vadd.f32 0.0, %v3306
        %v3308 = vpop.f32.mrb[0].mxu0
        %3309 = vmatprep.mubr.bf16.mxu0 %v2560
        %3310 = vmatmul.mubr.bf16.gmra.mrb[0].mxu0 %v2559
        %v3311 = vpop.f32.mrb[0].mxu0
        %v3312 = vadd.f32 0.0, %v3311
        %v3313 = vpop.f32.mrb[0].mxu0
        %v3314 = vpop.f32.mrb[0].mxu0
        %v3315 = vadd.f32 0.0, %v3314
        %v3316 = vpop.f32.mrb[0].mxu0
        %3317 = vmatprep.mubr.bf16.mxu0 %v2569
        %3318 = vmatmul.mubr.bf16.gmra.mrb[0].mxu0 %v2568
        %v3319 = vpop.f32.mrb[0].mxu0
        %v3320 = vadd.f32 0.0, %v3319
        %v3321 = vpop.f32.mrb[0].mxu0
        %v3322 = vpop.f32.mrb[0].mxu0
        %v3323 = vadd.f32 0.0, %v3322
        %v3324 = vpop.f32.mrb[0].mxu0
        %3325 = vmatprep.mubr.bf16.mxu0 %v2578
        %3326 = vmatmul.mubr.bf16.gmra.mrb[0].mxu0 %v2577
        %v3327 = vpop.f32.mrb[0].mxu0
        %v3328 = vadd.f32 0.0, %v3327
        %v3329 = vpop.f32.mrb[0].mxu0
        %v3330 = vpop.f32.mrb[0].mxu0
        %v3331 = vadd.f32 0.0, %v3330
        %v3332 = vpop.f32.mrb[0].mxu0
        %3333 = vmatprep.mubr.bf16.mxu0 %v2587
        %3334 = vmatmul.mubr.bf16.gmra.mrb[0].mxu0 %v2586
        %v3335 = vpop.f32.mrb[0].mxu0
        %v3336 = vadd.f32 0.0, %v3335
        %v3337 = vpop.f32.mrb[0].mxu0
        %v3338 = vpop.f32.mrb[0].mxu0
        %v3339 = vadd.f32 0.0, %v3338
        %v3340 = vpop.f32.mrb[0].mxu0
        %3341 = vmatprep.mubr.bf16.mxu0 %v2596
        %3342 = vmatmul.mubr.bf16.gmra.mrb[0].mxu0 %v2595
        %v3343 = vpop.f32.mrb[0].mxu0
        %v3344 = vadd.f32 0.0, %v3343
        %v3345 = vpop.f32.mrb[0].mxu0
        %v3346 = vpop.f32.mrb[0].mxu0
        %v3347 = vadd.f32 0.0, %v3346
        %v3348 = vpop.f32.mrb[0].mxu0
        %3349 = vmatprep.mubr.bf16.mxu0 %v2605
        %3350 = vmatmul.mubr.bf16.gmra.mrb[0].mxu0 %v2604
        %v3351 = vpop.f32.mrb[0].mxu0
        %v3352 = vadd.f32 0.0, %v3351
        %v3353 = vpop.f32.mrb[0].mxu0
        %v3354 = vpop.f32.mrb[0].mxu0
        %v3355 = vadd.f32 0.0, %v3354
        %v3356 = vpop.f32.mrb[0].mxu0
        %3357 = vmatprep.mubr.bf16.mxu0 %v2614
        %3358 = vmatmul.mubr.bf16.gmra.mrb[0].mxu0 %v2613
        %v3359 = vpop.f32.mrb[0].mxu0
        %v3360 = vadd.f32 0.0, %v3359
        %v3361 = vpop.f32.mrb[0].mxu0
        %v3362 = vpop.f32.mrb[0].mxu0
        %v3363 = vadd.f32 0.0, %v3362
        %v3364 = vpop.f32.mrb[0].mxu0
        %3365 = vmatprep.mubr.bf16.mxu0 %v2623
        %3366 = vmatmul.mubr.bf16.gmra.mrb[0].mxu0 %v2622
        %v3367 = vpop.f32.mrb[0].mxu0
        %v3368 = vadd.f32 0.0, %v3367
        %v3369 = vpop.f32.mrb[0].mxu0
        %v3370 = vpop.f32.mrb[0].mxu0
        %v3371 = vadd.f32 0.0, %v3370
        %v3372 = vpop.f32.mrb[0].mxu0
        %3373 = vmatprep.mubr.bf16.mxu0 %v2632
        %3374 = vmatmul.mubr.bf16.gmra.mrb[0].mxu0 %v2631
        %v3375 = vpop.f32.mrb[0].mxu0
        %v3376 = vadd.f32 0.0, %v3375
        %v3377 = vpop.f32.mrb[0].mxu0
        %v3378 = vpop.f32.mrb[0].mxu0
        %v3379 = vadd.f32 0.0, %v3378
        %v3380 = vpop.f32.mrb[0].mxu0
        %3381 = vmatprep.mubr.bf16.mxu0 %v2641
        %3382 = vmatmul.mubr.bf16.gmra.mrb[0].mxu0 %v2640
        %v3383 = vpop.f32.mrb[0].mxu0
        %v3384 = vadd.f32 0.0, %v3383
        %v3385 = vpop.f32.mrb[0].mxu0
        %v3386 = vpop.f32.mrb[0].mxu0
        %v3387 = vadd.f32 0.0, %v3386
        %v3388 = vpop.f32.mrb[0].mxu0
        %3389 = vmatprep.mubr.bf16.mxu0 %v2650
        %3390 = vmatmul.mubr.bf16.gmra.mrb[0].mxu0 %v2649
        %v3391 = vpop.f32.mrb[0].mxu0
        %v3392 = vadd.f32 0.0, %v3391
        %v3393 = vpop.f32.mrb[0].mxu0
        %v3394 = vpop.f32.mrb[0].mxu0
        %v3395 = vadd.f32 0.0, %v3394
        %v3396 = vpop.f32.mrb[0].mxu0
        %3397 = vmatprep.mubr.bf16.mxu0 %v2659
        %3398 = vmatmul.mubr.bf16.gmra.mrb[0].mxu0 %v2658
        %v3399 = vpop.f32.mrb[0].mxu0
        %v3400 = vadd.f32 0.0, %v3399
        %v3401 = vpop.f32.mrb[0].mxu0
        %v3402 = vpop.f32.mrb[0].mxu0
        %v3403 = vadd.f32 0.0, %v3402
        %v3404 = vpop.f32.mrb[0].mxu0
        %3405 = vmatprep.mubr.bf16.mxu0 %v2668
        %3406 = vmatmul.mubr.bf16.gmra.mrb[0].mxu0 %v2667
        %v3407 = vpop.f32.mrb[0].mxu0
        %v3408 = vadd.f32 0.0, %v3407
        %v3409 = vpop.f32.mrb[0].mxu0
        %v3410 = vpop.f32.mrb[0].mxu0
        %v3411 = vadd.f32 0.0, %v3410
        %v3412 = vpop.f32.mrb[0].mxu0
        %3413 = vmatprep.mubr.bf16.mxu0 %v2677
        %3414 = vmatmul.mubr.bf16.gmra.mrb[0].mxu0 %v2676
        %v3415 = vpop.f32.mrb[0].mxu0
        %v3416 = vadd.f32 0.0, %v3415
        %v3417 = vpop.f32.mrb[0].mxu0
        %v3418 = vpop.f32.mrb[0].mxu0
        %v3419 = vadd.f32 0.0, %v3418
        %v3420 = vpop.f32.mrb[0].mxu0
        %3421 = vdwg.mxu0
        %3422 = vmatprep.subr.bf16.mxu0 0
        %3423 = vmatpush1.bf16.msra.mxu0 %v3133
        %3424 = vmatprep.subr.bf16.mxu0 0
        %3425 = vmatpush1.bf16.msra.mxu0 %v3134
        %3426 = vmatprep.subr.bf16.mxu0 0
        %3427 = vmatpush1.bf16.msra.mxu0 %v3135
        %3428 = vmatprep.subr.bf16.mxu0 0
        %3429 = vmatpush1.bf16.msra.mxu0 %v3136
        %3430 = vmatprep.subr.bf16.mxu0 0
        %3431 = vmatpush1.bf16.msra.mxu0 %v3137
        %3432 = vmatprep.subr.bf16.mxu0 0
        %3433 = vmatpush1.bf16.msra.mxu0 %v3138
        %3434 = vmatprep.subr.bf16.mxu0 0
        %3435 = vmatpush1.bf16.msra.mxu0 %v3139
        %3436 = vmatprep.subr.bf16.mxu0 0
        %3437 = vmatpush1.bf16.msra.mxu0 %v3140
        %3438 = vmatprep.subr.bf16.mxu0 0
        %3439 = vmatpush1.bf16.msra.mxu0 %v3141
        %3440 = vmatprep.subr.bf16.mxu0 0
        %3441 = vmatpush1.bf16.msra.mxu0 %v3142
        %3442 = vmatprep.subr.bf16.mxu0 0
        %3443 = vmatpush1.bf16.msra.mxu0 %v3143
        %3444 = vmatprep.subr.bf16.mxu0 0
        %3445 = vmatpush1.bf16.msra.mxu0 %v3144
        %3446 = vmatprep.subr.bf16.mxu0 0
        %3447 = vmatpush1.bf16.msra.mxu0 %v3145
        %3448 = vmatprep.subr.bf16.mxu0 0
        %3449 = vmatpush1.bf16.msra.mxu0 %v3146
        %3450 = vmatprep.subr.bf16.mxu0 0
        %3451 = vmatpush1.bf16.msra.mxu0 %v3147
        %3452 = vmatprep.subr.bf16.mxu0 0
        %3453 = vmatpush1.bf16.msra.mxu0 %v3148
        %3454 = vmatprep.mubr.bf16.mxu0 %v2544
        %3455 = vmatmul.mubr.bf16.gmra.mrb[0].mxu0 %v2543
        %v3456 = vpop.f32.mrb[0].mxu0
        %v3457 = vadd.f32 %v3296, %v3456
        %v3458 = vpop.f32.mrb[0].mxu0
        %v3459 = vpop.f32.mrb[0].mxu0
        %v3460 = vadd.f32 %v3299, %v3459
        %v3461 = vpop.f32.mrb[0].mxu0
        %3462 = vmatprep.mubr.bf16.mxu0 %v2553
        %3463 = vmatmul.mubr.bf16.gmra.mrb[0].mxu0 %v2552
        %v3464 = vpop.f32.mrb[0].mxu0
        %v3465 = vadd.f32 %v3304, %v3464
        %v3466 = vpop.f32.mrb[0].mxu0
        %v3467 = vpop.f32.mrb[0].mxu0
        %v3468 = vadd.f32 %v3307, %v3467
        %v3469 = vpop.f32.mrb[0].mxu0
        %3470 = vmatprep.mubr.bf16.mxu0 %v2562
        %3471 = vmatmul.mubr.bf16.gmra.mrb[0].mxu0 %v2561
        %v3472 = vpop.f32.mrb[0].mxu0
        %v3473 = vadd.f32 %v3312, %v3472
        %v3474 = vpop.f32.mrb[0].mxu0
        %v3475 = vpop.f32.mrb[0].mxu0
        %v3476 = vadd.f32 %v3315, %v3475
        %v3477 = vpop.f32.mrb[0].mxu0
        %3478 = vmatprep.mubr.bf16.mxu0 %v2571
        %3479 = vmatmul.mubr.bf16.gmra.mrb[0].mxu0 %v2570
        %v3480 = vpop.f32.mrb[0].mxu0
        %v3481 = vadd.f32 %v3320, %v3480
        %v3482 = vpop.f32.mrb[0].mxu0
        %v3483 = vpop.f32.mrb[0].mxu0
        %v3484 = vadd.f32 %v3323, %v3483
        %v3485 = vpop.f32.mrb[0].mxu0
        %3486 = vmatprep.mubr.bf16.mxu0 %v2580
        %3487 = vmatmul.mubr.bf16.gmra.mrb[0].mxu0 %v2579
        %v3488 = vpop.f32.mrb[0].mxu0
        %v3489 = vadd.f32 %v3328, %v3488
        %v3490 = vpop.f32.mrb[0].mxu0
        %v3491 = vpop.f32.mrb[0].mxu0
        %v3492 = vadd.f32 %v3331, %v3491
        %v3493 = vpop.f32.mrb[0].mxu0
        %3494 = vmatprep.mubr.bf16.mxu0 %v2589
        %3495 = vmatmul.mubr.bf16.gmra.mrb[0].mxu0 %v2588
        %v3496 = vpop.f32.mrb[0].mxu0
        %v3497 = vadd.f32 %v3336, %v3496
        %v3498 = vpop.f32.mrb[0].mxu0
        %v3499 = vpop.f32.mrb[0].mxu0
        %v3500 = vadd.f32 %v3339, %v3499
        %v3501 = vpop.f32.mrb[0].mxu0
        %3502 = vmatprep.mubr.bf16.mxu0 %v2598
        %3503 = vmatmul.mubr.bf16.gmra.mrb[0].mxu0 %v2597
        %v3504 = vpop.f32.mrb[0].mxu0
        %v3505 = vadd.f32 %v3344, %v3504
        %v3506 = vpop.f32.mrb[0].mxu0
        %v3507 = vpop.f32.mrb[0].mxu0
        %v3508 = vadd.f32 %v3347, %v3507
        %v3509 = vpop.f32.mrb[0].mxu0
        %3510 = vmatprep.mubr.bf16.mxu0 %v2607
        %3511 = vmatmul.mubr.bf16.gmra.mrb[0].mxu0 %v2606
        %v3512 = vpop.f32.mrb[0].mxu0
        %v3513 = vadd.f32 %v3352, %v3512
        %v3514 = vpop.f32.mrb[0].mxu0
        %v3515 = vpop.f32.mrb[0].mxu0
        %v3516 = vadd.f32 %v3355, %v3515
        %v3517 = vpop.f32.mrb[0].mxu0
        %3518 = vmatprep.mubr.bf16.mxu0 %v2616
        %3519 = vmatmul.mubr.bf16.gmra.mrb[0].mxu0 %v2615
        %v3520 = vpop.f32.mrb[0].mxu0
        %v3521 = vadd.f32 %v3360, %v3520
        %v3522 = vpop.f32.mrb[0].mxu0
        %v3523 = vpop.f32.mrb[0].mxu0
        %v3524 = vadd.f32 %v3363, %v3523
        %v3525 = vpop.f32.mrb[0].mxu0
        %3526 = vmatprep.mubr.bf16.mxu0 %v2625
        %3527 = vmatmul.mubr.bf16.gmra.mrb[0].mxu0 %v2624
        %v3528 = vpop.f32.mrb[0].mxu0
        %v3529 = vadd.f32 %v3368, %v3528
        %v3530 = vpop.f32.mrb[0].mxu0
        %v3531 = vpop.f32.mrb[0].mxu0
        %v3532 = vadd.f32 %v3371, %v3531
        %v3533 = vpop.f32.mrb[0].mxu0
        %3534 = vmatprep.mubr.bf16.mxu0 %v2634
        %3535 = vmatmul.mubr.bf16.gmra.mrb[0].mxu0 %v2633
        %v3536 = vpop.f32.mrb[0].mxu0
        %v3537 = vadd.f32 %v3376, %v3536
        %v3538 = vpop.f32.mrb[0].mxu0
        %v3539 = vpop.f32.mrb[0].mxu0
        %v3540 = vadd.f32 %v3379, %v3539
        %v3541 = vpop.f32.mrb[0].mxu0
        %3542 = vmatprep.mubr.bf16.mxu0 %v2643
        %3543 = vmatmul.mubr.bf16.gmra.mrb[0].mxu0 %v2642
        %v3544 = vpop.f32.mrb[0].mxu0
        %v3545 = vadd.f32 %v3384, %v3544
        %v3546 = vpop.f32.mrb[0].mxu0
        %v3547 = vpop.f32.mrb[0].mxu0
        %v3548 = vadd.f32 %v3387, %v3547
        %v3549 = vpop.f32.mrb[0].mxu0
        %3550 = vmatprep.mubr.bf16.mxu0 %v2652
        %3551 = vmatmul.mubr.bf16.gmra.mrb[0].mxu0 %v2651
        %v3552 = vpop.f32.mrb[0].mxu0
        %v3553 = vadd.f32 %v3392, %v3552
        %v3554 = vpop.f32.mrb[0].mxu0
        %v3555 = vpop.f32.mrb[0].mxu0
        %v3556 = vadd.f32 %v3395, %v3555
        %v3557 = vpop.f32.mrb[0].mxu0
        %3558 = vmatprep.mubr.bf16.mxu0 %v2661
        %3559 = vmatmul.mubr.bf16.gmra.mrb[0].mxu0 %v2660
        %v3560 = vpop.f32.mrb[0].mxu0
        %v3561 = vadd.f32 %v3400, %v3560
        %v3562 = vpop.f32.mrb[0].mxu0
        %v3563 = vpop.f32.mrb[0].mxu0
        %v3564 = vadd.f32 %v3403, %v3563
        %v3565 = vpop.f32.mrb[0].mxu0
        %3566 = vmatprep.mubr.bf16.mxu0 %v2670
        %3567 = vmatmul.mubr.bf16.gmra.mrb[0].mxu0 %v2669
        %v3568 = vpop.f32.mrb[0].mxu0
        %v3569 = vadd.f32 %v3408, %v3568
        %v3570 = vpop.f32.mrb[0].mxu0
        %v3571 = vpop.f32.mrb[0].mxu0
        %v3572 = vadd.f32 %v3411, %v3571
        %v3573 = vpop.f32.mrb[0].mxu0
        %3574 = vmatprep.mubr.bf16.mxu0 %v2679
        %3575 = vmatmul.mubr.bf16.gmra.mrb[0].mxu0 %v2678
        %v3576 = vpop.f32.mrb[0].mxu0
        %v3577 = vadd.f32 %v3416, %v3576
        %v3578 = vpop.f32.mrb[0].mxu0
        %v3579 = vpop.f32.mrb[0].mxu0
        %v3580 = vadd.f32 %v3419, %v3579
        %v3581 = vpop.f32.mrb[0].mxu0
        %3582 = vdwg.mxu0
        %3583 = vmatprep.subr.bf16.mxu0 0
        %3584 = vmatpush1.bf16.msra.mxu0 %v3149
        %3585 = vmatprep.subr.bf16.mxu0 0
        %3586 = vmatpush1.bf16.msra.mxu0 %v3150
        %3587 = vmatprep.subr.bf16.mxu0 0
        %3588 = vmatpush1.bf16.msra.mxu0 %v3151
        %3589 = vmatprep.subr.bf16.mxu0 0
        %3590 = vmatpush1.bf16.msra.mxu0 %v3152
        %3591 = vmatprep.subr.bf16.mxu0 0
        %3592 = vmatpush1.bf16.msra.mxu0 %v3153
        %3593 = vmatprep.subr.bf16.mxu0 0
        %3594 = vmatpush1.bf16.msra.mxu0 %v3154
        %3595 = vmatprep.subr.bf16.mxu0 0
        %3596 = vmatpush1.bf16.msra.mxu0 %v3155
        %3597 = vmatprep.subr.bf16.mxu0 0
        %3598 = vmatpush1.bf16.msra.mxu0 %v3156
        %3599 = vmatprep.subr.bf16.mxu0 0
        %3600 = vmatpush1.bf16.msra.mxu0 %v3157
        %3601 = vmatprep.subr.bf16.mxu0 0
        %3602 = vmatpush1.bf16.msra.mxu0 %v3158
        %3603 = vmatprep.subr.bf16.mxu0 0
        %3604 = vmatpush1.bf16.msra.mxu0 %v3159
        %3605 = vmatprep.subr.bf16.mxu0 0
        %3606 = vmatpush1.bf16.msra.mxu0 %v3160
        %3607 = vmatprep.subr.bf16.mxu0 0
        %3608 = vmatpush1.bf16.msra.mxu0 %v3161
        %3609 = vmatprep.subr.bf16.mxu0 0
        %3610 = vmatpush1.bf16.msra.mxu0 %v3162
        %3611 = vmatprep.subr.bf16.mxu0 0
        %3612 = vmatpush1.bf16.msra.mxu0 %v3163
        %3613 = vmatprep.subr.bf16.mxu0 0
        %3614 = vmatpush1.bf16.msra.mxu0 %v3164
        %3615 = vmatprep.mubr.bf16.mxu0 %v2546
        %3616 = vmatmul.mubr.bf16.gmra.mrb[0].mxu0 %v2545
        %v3617 = vpop.f32.mrb[0].mxu0
        %v3618 = vadd.f32 %v3457, %v3617
        %v3619 = vpop.f32.mrb[0].mxu0
        %v3620 = vpop.f32.mrb[0].mxu0
        %v3621 = vadd.f32 %v3460, %v3620
        %v3622 = vpop.f32.mrb[0].mxu0
        %3623 = vmatprep.mubr.bf16.mxu0 %v2555
        %3624 = vmatmul.mubr.bf16.gmra.mrb[0].mxu0 %v2554
        %v3625 = vpop.f32.mrb[0].mxu0
        %v3626 = vadd.f32 %v3465, %v3625
        %v3627 = vpop.f32.mrb[0].mxu0
        %v3628 = vpop.f32.mrb[0].mxu0
        %v3629 = vadd.f32 %v3468, %v3628
        %v3630 = vpop.f32.mrb[0].mxu0
        %3631 = vmatprep.mubr.bf16.mxu0 %v2564
        %3632 = vmatmul.mubr.bf16.gmra.mrb[0].mxu0 %v2563
        %v3633 = vpop.f32.mrb[0].mxu0
        %v3634 = vadd.f32 %v3473, %v3633
        %v3635 = vpop.f32.mrb[0].mxu0
        %v3636 = vpop.f32.mrb[0].mxu0
        %v3637 = vadd.f32 %v3476, %v3636
        %v3638 = vpop.f32.mrb[0].mxu0
        %3639 = vmatprep.mubr.bf16.mxu0 %v2573
        %3640 = vmatmul.mubr.bf16.gmra.mrb[0].mxu0 %v2572
        %v3641 = vpop.f32.mrb[0].mxu0
        %v3642 = vadd.f32 %v3481, %v3641
        %v3643 = vpop.f32.mrb[0].mxu0
        %v3644 = vpop.f32.mrb[0].mxu0
        %v3645 = vadd.f32 %v3484, %v3644
        %v3646 = vpop.f32.mrb[0].mxu0
        %3647 = vmatprep.mubr.bf16.mxu0 %v2582
        %3648 = vmatmul.mubr.bf16.gmra.mrb[0].mxu0 %v2581
        %v3649 = vpop.f32.mrb[0].mxu0
        %v3650 = vadd.f32 %v3489, %v3649
        %v3651 = vpop.f32.mrb[0].mxu0
        %v3652 = vpop.f32.mrb[0].mxu0
        %v3653 = vadd.f32 %v3492, %v3652
        %v3654 = vpop.f32.mrb[0].mxu0
        %3655 = vmatprep.mubr.bf16.mxu0 %v2591
        %3656 = vmatmul.mubr.bf16.gmra.mrb[0].mxu0 %v2590
        %v3657 = vpop.f32.mrb[0].mxu0
        %v3658 = vadd.f32 %v3497, %v3657
        %v3659 = vpop.f32.mrb[0].mxu0
        %v3660 = vpop.f32.mrb[0].mxu0
        %v3661 = vadd.f32 %v3500, %v3660
        %v3662 = vpop.f32.mrb[0].mxu0
        %3663 = vmatprep.mubr.bf16.mxu0 %v2600
        %3664 = vmatmul.mubr.bf16.gmra.mrb[0].mxu0 %v2599
        %v3665 = vpop.f32.mrb[0].mxu0
        %v3666 = vadd.f32 %v3505, %v3665
        %v3667 = vpop.f32.mrb[0].mxu0
        %v3668 = vpop.f32.mrb[0].mxu0
        %v3669 = vadd.f32 %v3508, %v3668
        %v3670 = vpop.f32.mrb[0].mxu0
        %3671 = vmatprep.mubr.bf16.mxu0 %v2609
        %3672 = vmatmul.mubr.bf16.gmra.mrb[0].mxu0 %v2608
        %v3673 = vpop.f32.mrb[0].mxu0
        %v3674 = vadd.f32 %v3513, %v3673
        %v3675 = vpop.f32.mrb[0].mxu0
        %v3676 = vpop.f32.mrb[0].mxu0
        %v3677 = vadd.f32 %v3516, %v3676
        %v3678 = vpop.f32.mrb[0].mxu0
        %3679 = vmatprep.mubr.bf16.mxu0 %v2618
        %3680 = vmatmul.mubr.bf16.gmra.mrb[0].mxu0 %v2617
        %v3681 = vpop.f32.mrb[0].mxu0
        %v3682 = vadd.f32 %v3521, %v3681
        %v3683 = vpop.f32.mrb[0].mxu0
        %v3684 = vpop.f32.mrb[0].mxu0
        %v3685 = vadd.f32 %v3524, %v3684
        %v3686 = vpop.f32.mrb[0].mxu0
        %3687 = vmatprep.mubr.bf16.mxu0 %v2627
        %3688 = vmatmul.mubr.bf16.gmra.mrb[0].mxu0 %v2626
        %v3689 = vpop.f32.mrb[0].mxu0
        %v3690 = vadd.f32 %v3529, %v3689
        %v3691 = vpop.f32.mrb[0].mxu0
        %v3692 = vpop.f32.mrb[0].mxu0
        %v3693 = vadd.f32 %v3532, %v3692
        %v3694 = vpop.f32.mrb[0].mxu0
        %3695 = vmatprep.mubr.bf16.mxu0 %v2636
        %3696 = vmatmul.mubr.bf16.gmra.mrb[0].mxu0 %v2635
        %v3697 = vpop.f32.mrb[0].mxu0
        %v3698 = vadd.f32 %v3537, %v3697
        %v3699 = vpop.f32.mrb[0].mxu0
        %v3700 = vpop.f32.mrb[0].mxu0
        %v3701 = vadd.f32 %v3540, %v3700
        %v3702 = vpop.f32.mrb[0].mxu0
        %3703 = vmatprep.mubr.bf16.mxu0 %v2645
        %3704 = vmatmul.mubr.bf16.gmra.mrb[0].mxu0 %v2644
        %v3705 = vpop.f32.mrb[0].mxu0
        %v3706 = vadd.f32 %v3545, %v3705
        %v3707 = vpop.f32.mrb[0].mxu0
        %v3708 = vpop.f32.mrb[0].mxu0
        %v3709 = vadd.f32 %v3548, %v3708
        %v3710 = vpop.f32.mrb[0].mxu0
        %3711 = vmatprep.mubr.bf16.mxu0 %v2654
        %3712 = vmatmul.mubr.bf16.gmra.mrb[0].mxu0 %v2653
        %v3713 = vpop.f32.mrb[0].mxu0
        %v3714 = vadd.f32 %v3553, %v3713
        %v3715 = vpop.f32.mrb[0].mxu0
        %v3716 = vpop.f32.mrb[0].mxu0
        %v3717 = vadd.f32 %v3556, %v3716
        %v3718 = vpop.f32.mrb[0].mxu0
        %3719 = vmatprep.mubr.bf16.mxu0 %v2663
        %3720 = vmatmul.mubr.bf16.gmra.mrb[0].mxu0 %v2662
        %v3721 = vpop.f32.mrb[0].mxu0
        %v3722 = vadd.f32 %v3561, %v3721
        %v3723 = vpop.f32.mrb[0].mxu0
        %v3724 = vpop.f32.mrb[0].mxu0
        %v3725 = vadd.f32 %v3564, %v3724
        %v3726 = vpop.f32.mrb[0].mxu0
        %3727 = vmatprep.mubr.bf16.mxu0 %v2672
        %3728 = vmatmul.mubr.bf16.gmra.mrb[0].mxu0 %v2671
        %v3729 = vpop.f32.mrb[0].mxu0
        %v3730 = vadd.f32 %v3569, %v3729
        %v3731 = vpop.f32.mrb[0].mxu0
        %v3732 = vpop.f32.mrb[0].mxu0
        %v3733 = vadd.f32 %v3572, %v3732
        %v3734 = vpop.f32.mrb[0].mxu0
        %3735 = vmatprep.mubr.bf16.mxu0 %v2681
        %3736 = vmatmul.mubr.bf16.gmra.mrb[0].mxu0 %v2680
        %v3737 = vpop.f32.mrb[0].mxu0
        %v3738 = vadd.f32 %v3577, %v3737
        %v3739 = vpop.f32.mrb[0].mxu0
        %v3740 = vpop.f32.mrb[0].mxu0
        %v3741 = vadd.f32 %v3580, %v3740
        %v3742 = vpop.f32.mrb[0].mxu0
        %3743 = vdwg.mxu0
        %3744 = vmatprep.subr.bf16.mxu0 0
        %3745 = vmatpush1.bf16.msra.mxu0 %v3165
        %3746 = vmatprep.subr.bf16.mxu0 0
        %3747 = vmatpush1.bf16.msra.mxu0 %v3166
        %3748 = vmatprep.subr.bf16.mxu0 0
        %3749 = vmatpush1.bf16.msra.mxu0 %v3167
        %3750 = vmatprep.subr.bf16.mxu0 0
        %3751 = vmatpush1.bf16.msra.mxu0 %v3168
        %3752 = vmatprep.subr.bf16.mxu0 0
        %3753 = vmatpush1.bf16.msra.mxu0 %v3169
        %3754 = vmatprep.subr.bf16.mxu0 0
        %3755 = vmatpush1.bf16.msra.mxu0 %v3170
        %3756 = vmatprep.subr.bf16.mxu0 0
        %3757 = vmatpush1.bf16.msra.mxu0 %v3171
        %3758 = vmatprep.subr.bf16.mxu0 0
        %3759 = vmatpush1.bf16.msra.mxu0 %v3172
        %3760 = vmatprep.subr.bf16.mxu0 0
        %3761 = vmatpush1.bf16.msra.mxu0 %v3173
        %3762 = vmatprep.subr.bf16.mxu0 0
        %3763 = vmatpush1.bf16.msra.mxu0 %v3174
        %3764 = vmatprep.subr.bf16.mxu0 0
        %3765 = vmatpush1.bf16.msra.mxu0 %v3175
        %3766 = vmatprep.subr.bf16.mxu0 0
        %3767 = vmatpush1.bf16.msra.mxu0 %v3176
        %3768 = vmatprep.subr.bf16.mxu0 0
        %3769 = vmatpush1.bf16.msra.mxu0 %v3177
        %3770 = vmatprep.subr.bf16.mxu0 0
        %3771 = vmatpush1.bf16.msra.mxu0 %v3178
        %3772 = vmatprep.subr.bf16.mxu0 0
        %3773 = vmatpush1.bf16.msra.mxu0 %v3179
        %3774 = vmatprep.subr.bf16.mxu0 0
        %3775 = vmatpush1.bf16.msra.mxu0 %v3180
        %3776 = vmatprep.mubr.bf16.mxu0 %v2548
        %3777 = vmatmul.mubr.bf16.gmra.mrb[0].mxu0 %v2547
        %v3778 = vpop.f32.mrb[0].mxu0
        %v3779 = vadd.f32 %v3618, %v3778
        %v3780 = vpop.f32.mrb[0].mxu0
        %v3781 = vpop.f32.mrb[0].mxu0
        %v3782 = vadd.f32 %v3621, %v3781
        %v3783 = vpop.f32.mrb[0].mxu0
        %3784 = vmatprep.mubr.bf16.mxu0 %v2557
        %3785 = vmatmul.mubr.bf16.gmra.mrb[0].mxu0 %v2556
        %v3786 = vpop.f32.mrb[0].mxu0
        %v3787 = vadd.f32 %v3626, %v3786
        %v3788 = vpop.f32.mrb[0].mxu0
        %v3789 = vpop.f32.mrb[0].mxu0
        %v3790 = vadd.f32 %v3629, %v3789
        %v3791 = vpop.f32.mrb[0].mxu0
        %3792 = vmatprep.mubr.bf16.mxu0 %v2566
        %3793 = vmatmul.mubr.bf16.gmra.mrb[0].mxu0 %v2565
        %v3794 = vpop.f32.mrb[0].mxu0
        %v3795 = vadd.f32 %v3634, %v3794
        %v3796 = vpop.f32.mrb[0].mxu0
        %v3797 = vpop.f32.mrb[0].mxu0
        %v3798 = vadd.f32 %v3637, %v3797
        %v3799 = vpop.f32.mrb[0].mxu0
        %3800 = vmatprep.mubr.bf16.mxu0 %v2575
        %3801 = vmatmul.mubr.bf16.gmra.mrb[0].mxu0 %v2574
        %v3802 = vpop.f32.mrb[0].mxu0
        %v3803 = vadd.f32 %v3642, %v3802
        %v3804 = vpop.f32.mrb[0].mxu0
        %v3805 = vpop.f32.mrb[0].mxu0
        %v3806 = vadd.f32 %v3645, %v3805
        %v3807 = vpop.f32.mrb[0].mxu0
        %3808 = vmatprep.mubr.bf16.mxu0 %v2584
        %3809 = vmatmul.mubr.bf16.gmra.mrb[0].mxu0 %v2583
        %v3810 = vpop.f32.mrb[0].mxu0
        %v3811 = vadd.f32 %v3650, %v3810
        %v3812 = vpop.f32.mrb[0].mxu0
        %v3813 = vpop.f32.mrb[0].mxu0
        %v3814 = vadd.f32 %v3653, %v3813
        %v3815 = vpop.f32.mrb[0].mxu0
        %3816 = vmatprep.mubr.bf16.mxu0 %v2593
        %3817 = vmatmul.mubr.bf16.gmra.mrb[0].mxu0 %v2592
        %v3818 = vpop.f32.mrb[0].mxu0
        %v3819 = vadd.f32 %v3658, %v3818
        %v3820 = vpop.f32.mrb[0].mxu0
        %v3821 = vpop.f32.mrb[0].mxu0
        %v3822 = vadd.f32 %v3661, %v3821
        %v3823 = vpop.f32.mrb[0].mxu0
        %3824 = vmatprep.mubr.bf16.mxu0 %v2602
        %3825 = vmatmul.mubr.bf16.gmra.mrb[0].mxu0 %v2601
        %v3826 = vpop.f32.mrb[0].mxu0
        %v3827 = vadd.f32 %v3666, %v3826
        %v3828 = vpop.f32.mrb[0].mxu0
        %v3829 = vpop.f32.mrb[0].mxu0
        %v3830 = vadd.f32 %v3669, %v3829
        %v3831 = vpop.f32.mrb[0].mxu0
        %3832 = vmatprep.mubr.bf16.mxu0 %v2611
        %3833 = vmatmul.mubr.bf16.gmra.mrb[0].mxu0 %v2610
        %v3834 = vpop.f32.mrb[0].mxu0
        %v3835 = vadd.f32 %v3674, %v3834
        %v3836 = vpop.f32.mrb[0].mxu0
        %v3837 = vpop.f32.mrb[0].mxu0
        %v3838 = vadd.f32 %v3677, %v3837
        %v3839 = vpop.f32.mrb[0].mxu0
        %3840 = vmatprep.mubr.bf16.mxu0 %v2620
        %3841 = vmatmul.mubr.bf16.gmra.mrb[0].mxu0 %v2619
        %v3842 = vpop.f32.mrb[0].mxu0
        %v3843 = vadd.f32 %v3682, %v3842
        %v3844 = vpop.f32.mrb[0].mxu0
        %v3845 = vpop.f32.mrb[0].mxu0
        %v3846 = vadd.f32 %v3685, %v3845
        %v3847 = vpop.f32.mrb[0].mxu0
        %3848 = vmatprep.mubr.bf16.mxu0 %v2629
        %3849 = vmatmul.mubr.bf16.gmra.mrb[0].mxu0 %v2628
        %v3850 = vpop.f32.mrb[0].mxu0
        %v3851 = vadd.f32 %v3690, %v3850
        %v3852 = vpop.f32.mrb[0].mxu0
        %v3853 = vpop.f32.mrb[0].mxu0
        %v3854 = vadd.f32 %v3693, %v3853
        %v3855 = vpop.f32.mrb[0].mxu0
        %3856 = vmatprep.mubr.bf16.mxu0 %v2638
        %3857 = vmatmul.mubr.bf16.gmra.mrb[0].mxu0 %v2637
        %v3858 = vpop.f32.mrb[0].mxu0
        %v3859 = vadd.f32 %v3698, %v3858
        %v3860 = vpop.f32.mrb[0].mxu0
        %v3861 = vpop.f32.mrb[0].mxu0
        %v3862 = vadd.f32 %v3701, %v3861
        %v3863 = vpop.f32.mrb[0].mxu0
        %3864 = vmatprep.mubr.bf16.mxu0 %v2647
        %3865 = vmatmul.mubr.bf16.gmra.mrb[0].mxu0 %v2646
        %v3866 = vpop.f32.mrb[0].mxu0
        %v3867 = vadd.f32 %v3706, %v3866
        %v3868 = vpop.f32.mrb[0].mxu0
        %v3869 = vpop.f32.mrb[0].mxu0
        %v3870 = vadd.f32 %v3709, %v3869
        %v3871 = vpop.f32.mrb[0].mxu0
        %3872 = vmatprep.mubr.bf16.mxu0 %v2656
        %3873 = vmatmul.mubr.bf16.gmra.mrb[0].mxu0 %v2655
        %v3874 = vpop.f32.mrb[0].mxu0
        %v3875 = vadd.f32 %v3714, %v3874
        %v3876 = vpop.f32.mrb[0].mxu0
        %v3877 = vpop.f32.mrb[0].mxu0
        %v3878 = vadd.f32 %v3717, %v3877
        %v3879 = vpop.f32.mrb[0].mxu0
        %3880 = vmatprep.mubr.bf16.mxu0 %v2665
        %3881 = vmatmul.mubr.bf16.gmra.mrb[0].mxu0 %v2664
        %v3882 = vpop.f32.mrb[0].mxu0
        %v3883 = vadd.f32 %v3722, %v3882
        %v3884 = vpop.f32.mrb[0].mxu0
        %v3885 = vpop.f32.mrb[0].mxu0
        %v3886 = vadd.f32 %v3725, %v3885
        %v3887 = vpop.f32.mrb[0].mxu0
        %3888 = vmatprep.mubr.bf16.mxu0 %v2674
        %3889 = vmatmul.mubr.bf16.gmra.mrb[0].mxu0 %v2673
        %v3890 = vpop.f32.mrb[0].mxu0
        %v3891 = vadd.f32 %v3730, %v3890
        %v3892 = vpop.f32.mrb[0].mxu0
        %v3893 = vpop.f32.mrb[0].mxu0
        %v3894 = vadd.f32 %v3733, %v3893
        %v3895 = vpop.f32.mrb[0].mxu0
        %3896 = vmatprep.mubr.bf16.mxu0 %v2683
        %3897 = vmatmul.mubr.bf16.gmra.mrb[0].mxu0 %v2682
        %v3898 = vpop.f32.mrb[0].mxu0
        %v3899 = vadd.f32 %v3738, %v3898
        %v3900 = vpop.f32.mrb[0].mxu0
        %v3901 = vpop.f32.mrb[0].mxu0
        %v3902 = vadd.f32 %v3741, %v3901
        %v3903 = vpop.f32.mrb[0].mxu0
        %3904 = vdwg.mxu0
        %3905 = vmatprep.subr.bf16.mxu0 0
        %3906 = vmatpush1.bf16.msra.mxu0 %v3181
        %3907 = vmatprep.subr.bf16.mxu0 0
        %3908 = vmatpush1.bf16.msra.mxu0 %v3182
        %3909 = vmatprep.subr.bf16.mxu0 0
        %3910 = vmatpush1.bf16.msra.mxu0 %v3183
        %3911 = vmatprep.subr.bf16.mxu0 0
        %3912 = vmatpush1.bf16.msra.mxu0 %v3184
        %3913 = vmatprep.subr.bf16.mxu0 0
        %3914 = vmatpush1.bf16.msra.mxu0 %v3185
        %3915 = vmatprep.subr.bf16.mxu0 0
        %3916 = vmatpush1.bf16.msra.mxu0 %v3186
        %3917 = vmatprep.subr.bf16.mxu0 0
        %3918 = vmatpush1.bf16.msra.mxu0 %v3187
        %3919 = vmatprep.subr.bf16.mxu0 0
        %3920 = vmatpush1.bf16.msra.mxu0 %v3188
        %3921 = vmatprep.subr.bf16.mxu0 0
        %3922 = vmatpush1.bf16.msra.mxu0 0
        %3923 = vmatprep.subr.bf16.mxu0 0
        %3924 = vmatpush1.bf16.msra.mxu0 0
        %3925 = vmatprep.subr.bf16.mxu0 0
        %3926 = vmatpush1.bf16.msra.mxu0 0
        %3927 = vmatprep.subr.bf16.mxu0 0
        %3928 = vmatpush1.bf16.msra.mxu0 0
        %3929 = vmatprep.subr.bf16.mxu0 0
        %3930 = vmatpush1.bf16.msra.mxu0 0
        %3931 = vmatprep.subr.bf16.mxu0 0
        %3932 = vmatpush1.bf16.msra.mxu0 0
        %3933 = vmatprep.subr.bf16.mxu0 0
        %3934 = vmatpush1.bf16.msra.mxu0 0
        %3935 = vmatprep.subr.bf16.mxu0 0
        %3936 = vmatpush1.bf16.msra.mxu0 0
        %3937 = vmatprep.mubr.bf16.mxu0 0
        %3938 = vmatmul.mubr.bf16.gmra.mrb[0].mxu0 %v2549
        %v3939 = vpop.f32.mrb[0].mxu0
        %v3940 = vadd.f32 %v3779, %v3939
        %v3941 = vpop.f32.mrb[0].mxu0
        %v3942 = vpop.f32.mrb[0].mxu0
        %v3943 = vadd.f32 %v3782, %v3942
        %v3944 = vpop.f32.mrb[0].mxu0
        %3945 = vmatprep.mubr.bf16.mxu0 0
        %3946 = vmatmul.mubr.bf16.gmra.mrb[0].mxu0 %v2558
        %v3947 = vpop.f32.mrb[0].mxu0
        %v3948 = vadd.f32 %v3787, %v3947
        %v3949 = vpop.f32.mrb[0].mxu0
        %v3950 = vpop.f32.mrb[0].mxu0
        %v3951 = vadd.f32 %v3790, %v3950
        %v3952 = vpop.f32.mrb[0].mxu0
        %3953 = vmatprep.mubr.bf16.mxu0 0
        %3954 = vmatmul.mubr.bf16.gmra.mrb[0].mxu0 %v2567
        %v3955 = vpop.f32.mrb[0].mxu0
        %v3956 = vadd.f32 %v3795, %v3955
        %v3957 = vpop.f32.mrb[0].mxu0
        %v3958 = vpop.f32.mrb[0].mxu0
        %v3959 = vadd.f32 %v3798, %v3958
        %v3960 = vpop.f32.mrb[0].mxu0
        %3961 = vmatprep.mubr.bf16.mxu0 0
        %3962 = vmatmul.mubr.bf16.gmra.mrb[0].mxu0 %v2576
        %v3963 = vpop.f32.mrb[0].mxu0
        %v3964 = vadd.f32 %v3803, %v3963
        %v3965 = vpop.f32.mrb[0].mxu0
        %v3966 = vpop.f32.mrb[0].mxu0
        %v3967 = vadd.f32 %v3806, %v3966
        %v3968 = vpop.f32.mrb[0].mxu0
        %3969 = vmatprep.mubr.bf16.mxu0 0
        %3970 = vmatmul.mubr.bf16.gmra.mrb[0].mxu0 %v2585
        %v3971 = vpop.f32.mrb[0].mxu0
        %v3972 = vadd.f32 %v3811, %v3971
        %v3973 = vpop.f32.mrb[0].mxu0
        %v3974 = vpop.f32.mrb[0].mxu0
        %v3975 = vadd.f32 %v3814, %v3974
        %v3976 = vpop.f32.mrb[0].mxu0
        %3977 = vmatprep.mubr.bf16.mxu0 0
        %3978 = vmatmul.mubr.bf16.gmra.mrb[0].mxu0 %v2594
        %v3979 = vpop.f32.mrb[0].mxu0
        %v3980 = vadd.f32 %v3819, %v3979
        %v3981 = vpop.f32.mrb[0].mxu0
        %v3982 = vpop.f32.mrb[0].mxu0
        %v3983 = vadd.f32 %v3822, %v3982
        %v3984 = vpop.f32.mrb[0].mxu0
        %3985 = vmatprep.mubr.bf16.mxu0 0
        %3986 = vmatmul.mubr.bf16.gmra.mrb[0].mxu0 %v2603
        %v3987 = vpop.f32.mrb[0].mxu0
        %v3988 = vadd.f32 %v3827, %v3987
        %v3989 = vpop.f32.mrb[0].mxu0
        %v3990 = vpop.f32.mrb[0].mxu0
        %v3991 = vadd.f32 %v3830, %v3990
        %v3992 = vpop.f32.mrb[0].mxu0
        %3993 = vmatprep.mubr.bf16.mxu0 0
        %3994 = vmatmul.mubr.bf16.gmra.mrb[0].mxu0 %v2612
        %v3995 = vpop.f32.mrb[0].mxu0
        %v3996 = vadd.f32 %v3835, %v3995
        %v3997 = vpop.f32.mrb[0].mxu0
        %v3998 = vpop.f32.mrb[0].mxu0
        %v3999 = vadd.f32 %v3838, %v3998
        %v4000 = vpop.f32.mrb[0].mxu0
        %4001 = vmatprep.mubr.bf16.mxu0 0
        %4002 = vmatmul.mubr.bf16.gmra.mrb[0].mxu0 %v2621
        %v4003 = vpop.f32.mrb[0].mxu0
        %v4004 = vadd.f32 %v3843, %v4003
        %v4005 = vpop.f32.mrb[0].mxu0
        %v4006 = vpop.f32.mrb[0].mxu0
        %v4007 = vadd.f32 %v3846, %v4006
        %v4008 = vpop.f32.mrb[0].mxu0
        %4009 = vmatprep.mubr.bf16.mxu0 0
        %4010 = vmatmul.mubr.bf16.gmra.mrb[0].mxu0 %v2630
        %v4011 = vpop.f32.mrb[0].mxu0
        %v4012 = vadd.f32 %v3851, %v4011
        %v4013 = vpop.f32.mrb[0].mxu0
        %v4014 = vpop.f32.mrb[0].mxu0
        %v4015 = vadd.f32 %v3854, %v4014
        %v4016 = vpop.f32.mrb[0].mxu0
        %4017 = vmatprep.mubr.bf16.mxu0 0
        %4018 = vmatmul.mubr.bf16.gmra.mrb[0].mxu0 %v2639
        %v4019 = vpop.f32.mrb[0].mxu0
        %v4020 = vadd.f32 %v3859, %v4019
        %v4021 = vpop.f32.mrb[0].mxu0
        %v4022 = vpop.f32.mrb[0].mxu0
        %v4023 = vadd.f32 %v3862, %v4022
        %v4024 = vpop.f32.mrb[0].mxu0
        %4025 = vmatprep.mubr.bf16.mxu0 0
        %4026 = vmatmul.mubr.bf16.gmra.mrb[0].mxu0 %v2648
        %v4027 = vpop.f32.mrb[0].mxu0
        %v4028 = vadd.f32 %v3867, %v4027
        %v4029 = vpop.f32.mrb[0].mxu0
        %v4030 = vpop.f32.mrb[0].mxu0
        %v4031 = vadd.f32 %v3870, %v4030
        %v4032 = vpop.f32.mrb[0].mxu0
        %4033 = vmatprep.mubr.bf16.mxu0 0
        %4034 = vmatmul.mubr.bf16.gmra.mrb[0].mxu0 %v2657
        %v4035 = vpop.f32.mrb[0].mxu0
        %v4036 = vadd.f32 %v3875, %v4035
        %v4037 = vpop.f32.mrb[0].mxu0
        %v4038 = vpop.f32.mrb[0].mxu0
        %v4039 = vadd.f32 %v3878, %v4038
        %v4040 = vpop.f32.mrb[0].mxu0
        %4041 = vmatprep.mubr.bf16.mxu0 0
        %4042 = vmatmul.mubr.bf16.gmra.mrb[0].mxu0 %v2666
        %v4043 = vpop.f32.mrb[0].mxu0
        %v4044 = vadd.f32 %v3883, %v4043
        %v4045 = vpop.f32.mrb[0].mxu0
        %v4046 = vpop.f32.mrb[0].mxu0
        %v4047 = vadd.f32 %v3886, %v4046
        %v4048 = vpop.f32.mrb[0].mxu0
        %4049 = vmatprep.mubr.bf16.mxu0 0
        %4050 = vmatmul.mubr.bf16.gmra.mrb[0].mxu0 %v2675
        %v4051 = vpop.f32.mrb[0].mxu0
        %v4052 = vadd.f32 %v3891, %v4051
        %v4053 = vpop.f32.mrb[0].mxu0
        %v4054 = vpop.f32.mrb[0].mxu0
        %v4055 = vadd.f32 %v3894, %v4054
        %v4056 = vpop.f32.mrb[0].mxu0
        %4057 = vmatprep.mubr.bf16.mxu0 0
        %4058 = vmatmul.mubr.bf16.gmra.mrb[0].mxu0 %v2684
        %v4059 = vpop.f32.mrb[0].mxu0
        %v4060 = vadd.f32 %v3899, %v4059
        %v4061 = vpop.f32.mrb[0].mxu0
        %v4062 = vpop.f32.mrb[0].mxu0
        %v4063 = vadd.f32 %v3902, %v4062
        %v4064 = vpop.f32.mrb[0].mxu0
        %4065 = vdwg.mxu0
        %v4066 = vld [vmem:[%s4] sm:$0x1]
        %v4067 = vlaneseq
        %v4068 = vshrl.u32 %v4067, 7
        %v4069 = vsub.s32 0, %v4068
        %v4070 = vrot.slane %v4066, %v4069
        %v4071 = vmul.f32 %v3940, %v4070
        %v4072 = vmul.f32 %v3943, %v4070
        %v4073 = vmul.f32 %v3948, %v4070
        %v4074 = vmul.f32 %v3951, %v4070
        %v4075 = vmul.f32 %v3956, %v4070
        %v4076 = vmul.f32 %v3959, %v4070
        %v4077 = vmul.f32 %v3964, %v4070
        %v4078 = vmul.f32 %v3967, %v4070
        %v4079 = vmul.f32 %v3972, %v4070
        %v4080 = vmul.f32 %v3975, %v4070
        %v4081 = vmul.f32 %v3980, %v4070
        %v4082 = vmul.f32 %v3983, %v4070
        %v4083 = vmul.f32 %v3988, %v4070
        %v4084 = vmul.f32 %v3991, %v4070
        %v4085 = vmul.f32 %v3996, %v4070
        %v4086 = vmul.f32 %v3999, %v4070
        %v4087 = vmul.f32 %v4004, %v4070
        %v4088 = vmul.f32 %v4007, %v4070
        %v4089 = vmul.f32 %v4012, %v4070
        %v4090 = vmul.f32 %v4015, %v4070
        %v4091 = vmul.f32 %v4020, %v4070
        %v4092 = vmul.f32 %v4023, %v4070
        %v4093 = vmul.f32 %v4028, %v4070
        %v4094 = vmul.f32 %v4031, %v4070
        %v4095 = vmul.f32 %v4036, %v4070
        %v4096 = vmul.f32 %v4039, %v4070
        %v4097 = vmul.f32 %v4044, %v4070
        %v4098 = vmul.f32 %v4047, %v4070
        %v4099 = vmul.f32 %v4052, %v4070
        %v4100 = vmul.f32 %v4055, %v4070
        %v4101 = vmul.f32 %v4060, %v4070
        %v4102 = vmul.f32 %v4063, %v4070
        %v4103 = vld [vmem:[%s4 + $0x1] sm:$0x1]
        %v4104 = vlaneseq
        %v4105 = vshrl.u32 %v4104, 7
        %v4106 = vsub.s32 0, %v4105
        %v4107 = vrot.slane %v4103, %v4106
        %v4108 = vadd.f32 %v4071, %v4107
        %v4109 = vadd.f32 %v4072, %v4107
        %v4110 = vadd.f32 %v4073, %v4107
        %v4111 = vadd.f32 %v4074, %v4107
        %v4112 = vadd.f32 %v4075, %v4107
        %v4113 = vadd.f32 %v4076, %v4107
        %v4114 = vadd.f32 %v4077, %v4107
        %v4115 = vadd.f32 %v4078, %v4107
        %v4116 = vadd.f32 %v4079, %v4107
        %v4117 = vadd.f32 %v4080, %v4107
        %v4118 = vadd.f32 %v4081, %v4107
        %v4119 = vadd.f32 %v4082, %v4107
        %v4120 = vadd.f32 %v4083, %v4107
        %v4121 = vadd.f32 %v4084, %v4107
        %v4122 = vadd.f32 %v4085, %v4107
        %v4123 = vadd.f32 %v4086, %v4107
        %v4124 = vadd.f32 %v4087, %v4107
        %v4125 = vadd.f32 %v4088, %v4107
        %v4126 = vadd.f32 %v4089, %v4107
        %v4127 = vadd.f32 %v4090, %v4107
        %v4128 = vadd.f32 %v4091, %v4107
        %v4129 = vadd.f32 %v4092, %v4107
        %v4130 = vadd.f32 %v4093, %v4107
        %v4131 = vadd.f32 %v4094, %v4107
        %v4132 = vadd.f32 %v4095, %v4107
        %v4133 = vadd.f32 %v4096, %v4107
        %v4134 = vadd.f32 %v4097, %v4107
        %v4135 = vadd.f32 %v4098, %v4107
        %v4136 = vadd.f32 %v4099, %v4107
        %v4137 = vadd.f32 %v4100, %v4107
        %v4138 = vadd.f32 %v4101, %v4107
        %v4139 = vadd.f32 %v4102, %v4107
        %v4140 = vmax.f32 %v4108, 0.0
        %v4141 = vmax.f32 %v4109, 0.0
        %v4142 = vmax.f32 %v4110, 0.0
        %v4143 = vmax.f32 %v4111, 0.0
        %v4144 = vmax.f32 %v4112, 0.0
        %v4145 = vmax.f32 %v4113, 0.0
        %v4146 = vmax.f32 %v4114, 0.0
        %v4147 = vmax.f32 %v4115, 0.0
        %v4148 = vmax.f32 %v4116, 0.0
        %v4149 = vmax.f32 %v4117, 0.0
        %v4150 = vmax.f32 %v4118, 0.0
        %v4151 = vmax.f32 %v4119, 0.0
        %v4152 = vmax.f32 %v4120, 0.0
        %v4153 = vmax.f32 %v4121, 0.0
        %v4154 = vmax.f32 %v4122, 0.0
        %v4155 = vmax.f32 %v4123, 0.0
        %v4156 = vmax.f32 %v4124, 0.0
        %v4157 = vmax.f32 %v4125, 0.0
        %v4158 = vmax.f32 %v4126, 0.0
        %v4159 = vmax.f32 %v4127, 0.0
        %v4160 = vmax.f32 %v4128, 0.0
        %v4161 = vmax.f32 %v4129, 0.0
        %v4162 = vmax.f32 %v4130, 0.0
        %v4163 = vmax.f32 %v4131, 0.0
        %v4164 = vmax.f32 %v4132, 0.0
        %v4165 = vmax.f32 %v4133, 0.0
        %v4166 = vmax.f32 %v4134, 0.0
        %v4167 = vmax.f32 %v4135, 0.0
        %v4168 = vmax.f32 %v4136, 0.0
        %v4169 = vmax.f32 %v4137, 0.0
        %v4170 = vmax.f32 %v4138, 0.0
        %v4171 = vmax.f32 %v4139, 0.0
        %v4172 = vpack.c.bf16 %v4141, %v4140
        %v4173 = vpack.c.bf16 %v4143, %v4142
        %v4174 = vpack.c.bf16 %v4145, %v4144
        %v4175 = vpack.c.bf16 %v4147, %v4146
        %v4176 = vpack.c.bf16 %v4149, %v4148
        %v4177 = vpack.c.bf16 %v4151, %v4150
        %v4178 = vpack.c.bf16 %v4153, %v4152
        %v4179 = vpack.c.bf16 %v4155, %v4154
        %v4180 = vpack.c.bf16 %v4157, %v4156
        %v4181 = vpack.c.bf16 %v4159, %v4158
        %v4182 = vpack.c.bf16 %v4161, %v4160
        %v4183 = vpack.c.bf16 %v4163, %v4162
        %v4184 = vpack.c.bf16 %v4165, %v4164
        %v4185 = vpack.c.bf16 %v4167, %v4166
        %v4186 = vpack.c.bf16 %v4169, %v4168
        %v4187 = vpack.c.bf16 %v4171, %v4170
        %v4188 = vld [vmem:[%s5] sm:$0xff]
        %v4189 = vld [vmem:[%s5 + $0x8] sm:$0xff]
        %v4190 = vld [vmem:[%s5 + $0x10] sm:$0xff]
        %v4191 = vld [vmem:[%s5 + $0x18] sm:$0xff]
        %v4192 = vld [vmem:[%s5 + $0x20] sm:$0xff]
        %v4193 = vld [vmem:[%s5 + $0x28] sm:$0xff]
        %v4194 = vld [vmem:[%s5 + $0x30] sm:$0xff]
        %v4195 = vld [vmem:[%s5 + $0x38] sm:$0xff]
        %v4196 = vld [vmem:[%s5 + $0x40] sm:$0xff]
        %v4197 = vld [vmem:[%s5 + $0x48] sm:$0xff]
        %v4198 = vld [vmem:[%s5 + $0x50] sm:$0xff]
        %v4199 = vld [vmem:[%s5 + $0x58] sm:$0xff]
        %v4200 = vld [vmem:[%s5 + $0x60] sm:$0xff]
        %v4201 = vld [vmem:[%s5 + $0x68] sm:$0xff]
        %v4202 = vld [vmem:[%s5 + $0x70] sm:$0xff]
        %v4203 = vld [vmem:[%s5 + $0x78] sm:$0xff]
        %v4220 = vunpack.c.l.b16 %v4188
        %v4221 = vunpack.c.h.b16 %v4188
        %v4222 = vunpack.c.l.b16 %v4189
        %v4223 = vunpack.c.h.b16 %v4189
        %v4224 = vunpack.c.l.b16 %v4190
        %v4225 = vunpack.c.h.b16 %v4190
        %v4226 = vunpack.c.l.b16 %v4191
        %v4227 = vunpack.c.h.b16 %v4191
        %v4228 = vunpack.c.l.b16 %v4192
        %v4229 = vunpack.c.h.b16 %v4192
        %v4230 = vunpack.c.l.b16 %v4193
        %v4231 = vunpack.c.h.b16 %v4193
        %v4232 = vunpack.c.l.b16 %v4194
        %v4233 = vunpack.c.h.b16 %v4194
        %v4234 = vunpack.c.l.b16 %v4195
        %v4235 = vunpack.c.h.b16 %v4195
        %v4236 = vunpack.c.l.b16 %v4196
        %v4237 = vunpack.c.h.b16 %v4196
        %v4238 = vunpack.c.l.b16 %v4197
        %v4239 = vunpack.c.h.b16 %v4197
        %v4240 = vunpack.c.l.b16 %v4198
        %v4241 = vunpack.c.h.b16 %v4198
        %v4242 = vunpack.c.l.b16 %v4199
        %v4243 = vunpack.c.h.b16 %v4199
        %v4244 = vunpack.c.l.b16 %v4200
        %v4245 = vunpack.c.h.b16 %v4200
        %v4246 = vunpack.c.l.b16 %v4201
        %v4247 = vunpack.c.h.b16 %v4201
        %v4248 = vunpack.c.l.b16 %v4202
        %v4249 = vunpack.c.h.b16 %v4202
        %v4250 = vunpack.c.l.b16 %v4203
        %v4251 = vunpack.c.h.b16 %v4203
        %v4252 = vpack.c.b16 %v4222, %v4220
        %v4253 = vpack.c.b16 %v4223, %v4221
        %v4254 = vpack.c.b16 %v4226, %v4224
        %v4255 = vpack.c.b16 %v4227, %v4225
        %v4256 = vpack.c.b16 %v4230, %v4228
        %v4257 = vpack.c.b16 %v4231, %v4229
        %v4258 = vpack.c.b16 %v4234, %v4232
        %v4259 = vpack.c.b16 %v4235, %v4233
        %v4260 = vpack.c.b16 %v4238, %v4236
        %v4261 = vpack.c.b16 %v4239, %v4237
        %v4262 = vpack.c.b16 %v4242, %v4240
        %v4263 = vpack.c.b16 %v4243, %v4241
        %v4264 = vpack.c.b16 %v4246, %v4244
        %v4265 = vpack.c.b16 %v4247, %v4245
        %v4266 = vpack.c.b16 %v4250, %v4248
        %v4267 = vpack.c.b16 %v4251, %v4249
        %4284 = vmatprep.subr.bf16.mxu0 %v4253
        %4285 = vmatpush1.bf16.msra.mxu0 %v4252
        %4286 = vmatprep.subr.bf16.mxu0 %v4255
        %4287 = vmatpush1.bf16.msra.mxu0 %v4254
        %4288 = vmatprep.subr.bf16.mxu0 %v4257
        %4289 = vmatpush1.bf16.msra.mxu0 %v4256
        %4290 = vmatprep.subr.bf16.mxu0 %v4259
        %4291 = vmatpush1.bf16.msra.mxu0 %v4258
        %4292 = vmatprep.subr.bf16.mxu0 %v4261
        %4293 = vmatpush1.bf16.msra.mxu0 %v4260
        %4294 = vmatprep.subr.bf16.mxu0 %v4263
        %4295 = vmatpush1.bf16.msra.mxu0 %v4262
        %4296 = vmatprep.subr.bf16.mxu0 %v4265
        %4297 = vmatpush1.bf16.msra.mxu0 %v4264
        %4298 = vmatprep.subr.bf16.mxu0 %v4267
        %4299 = vmatpush1.bf16.msra.mxu0 %v4266
        %4300 = vmatprep.subr.bf16.mxu0 0
        %4301 = vmatpush1.bf16.msra.mxu0 0
        %4302 = vmatprep.subr.bf16.mxu0 0
        %4303 = vmatpush1.bf16.msra.mxu0 0
        %4304 = vmatprep.subr.bf16.mxu0 0
        %4305 = vmatpush1.bf16.msra.mxu0 0
        %4306 = vmatprep.subr.bf16.mxu0 0
        %4307 = vmatpush1.bf16.msra.mxu0 0
        %4308 = vmatprep.subr.bf16.mxu0 0
        %4309 = vmatpush1.bf16.msra.mxu0 0
        %4310 = vmatprep.subr.bf16.mxu0 0
        %4311 = vmatpush1.bf16.msra.mxu0 0
        %4312 = vmatprep.subr.bf16.mxu0 0
        %4313 = vmatpush1.bf16.msra.mxu0 0
        %4314 = vmatprep.subr.bf16.mxu0 0
        %4315 = vmatpush1.bf16.msra.mxu0 0
        %4316 = vmatprep.mubr.bf16.mxu0 0
        %4317 = vmatmul.mubr.bf16.gmra.mrb[0].mxu0 %v4172
        %v4318 = vpop.f32.mrb[0].mxu0
        %v4319 = vadd.f32 0.0, %v4318
        %v4320 = vpop.f32.mrb[0].mxu0
        %v4321 = vadd.f32 0.0, %v4320
        %v4322 = vpop.f32.mrb[0].mxu0
        %v4323 = vadd.f32 0.0, %v4322
        %v4324 = vpop.f32.mrb[0].mxu0
        %v4325 = vadd.f32 0.0, %v4324
        %4326 = vmatprep.mubr.bf16.mxu0 0
        %4327 = vmatmul.mubr.bf16.gmra.mrb[0].mxu0 %v4173
        %v4328 = vpop.f32.mrb[0].mxu0
        %v4329 = vadd.f32 0.0, %v4328
        %v4330 = vpop.f32.mrb[0].mxu0
        %v4331 = vadd.f32 0.0, %v4330
        %v4332 = vpop.f32.mrb[0].mxu0
        %v4333 = vadd.f32 0.0, %v4332
        %v4334 = vpop.f32.mrb[0].mxu0
        %v4335 = vadd.f32 0.0, %v4334
        %4336 = vmatprep.mubr.bf16.mxu0 0
        %4337 = vmatmul.mubr.bf16.gmra.mrb[0].mxu0 %v4174
        %v4338 = vpop.f32.mrb[0].mxu0
        %v4339 = vadd.f32 0.0, %v4338
        %v4340 = vpop.f32.mrb[0].mxu0
        %v4341 = vadd.f32 0.0, %v4340
        %v4342 = vpop.f32.mrb[0].mxu0
        %v4343 = vadd.f32 0.0, %v4342
        %v4344 = vpop.f32.mrb[0].mxu0
        %v4345 = vadd.f32 0.0, %v4344
        %4346 = vmatprep.mubr.bf16.mxu0 0
        %4347 = vmatmul.mubr.bf16.gmra.mrb[0].mxu0 %v4175
        %v4348 = vpop.f32.mrb[0].mxu0
        %v4349 = vadd.f32 0.0, %v4348
        %v4350 = vpop.f32.mrb[0].mxu0
        %v4351 = vadd.f32 0.0, %v4350
        %v4352 = vpop.f32.mrb[0].mxu0
        %v4353 = vadd.f32 0.0, %v4352
        %v4354 = vpop.f32.mrb[0].mxu0
        %v4355 = vadd.f32 0.0, %v4354
        %4356 = vmatprep.mubr.bf16.mxu0 0
        %4357 = vmatmul.mubr.bf16.gmra.mrb[0].mxu0 %v4176
        %v4358 = vpop.f32.mrb[0].mxu0
        %v4359 = vadd.f32 0.0, %v4358
        %v4360 = vpop.f32.mrb[0].mxu0
        %v4361 = vadd.f32 0.0, %v4360
        %v4362 = vpop.f32.mrb[0].mxu0
        %v4363 = vadd.f32 0.0, %v4362
        %v4364 = vpop.f32.mrb[0].mxu0
        %v4365 = vadd.f32 0.0, %v4364
        %4366 = vmatprep.mubr.bf16.mxu0 0
        %4367 = vmatmul.mubr.bf16.gmra.mrb[0].mxu0 %v4177
        %v4368 = vpop.f32.mrb[0].mxu0
        %v4369 = vadd.f32 0.0, %v4368
        %v4370 = vpop.f32.mrb[0].mxu0
        %v4371 = vadd.f32 0.0, %v4370
        %v4372 = vpop.f32.mrb[0].mxu0
        %v4373 = vadd.f32 0.0, %v4372
        %v4374 = vpop.f32.mrb[0].mxu0
        %v4375 = vadd.f32 0.0, %v4374
        %4376 = vmatprep.mubr.bf16.mxu0 0
        %4377 = vmatmul.mubr.bf16.gmra.mrb[0].mxu0 %v4178
        %v4378 = vpop.f32.mrb[0].mxu0
        %v4379 = vadd.f32 0.0, %v4378
        %v4380 = vpop.f32.mrb[0].mxu0
        %v4381 = vadd.f32 0.0, %v4380
        %v4382 = vpop.f32.mrb[0].mxu0
        %v4383 = vadd.f32 0.0, %v4382
        %v4384 = vpop.f32.mrb[0].mxu0
        %v4385 = vadd.f32 0.0, %v4384
        %4386 = vmatprep.mubr.bf16.mxu0 0
        %4387 = vmatmul.mubr.bf16.gmra.mrb[0].mxu0 %v4179
        %v4388 = vpop.f32.mrb[0].mxu0
        %v4389 = vadd.f32 0.0, %v4388
        %v4390 = vpop.f32.mrb[0].mxu0
        %v4391 = vadd.f32 0.0, %v4390
        %v4392 = vpop.f32.mrb[0].mxu0
        %v4393 = vadd.f32 0.0, %v4392
        %v4394 = vpop.f32.mrb[0].mxu0
        %v4395 = vadd.f32 0.0, %v4394
        %4396 = vmatprep.mubr.bf16.mxu0 0
        %4397 = vmatmul.mubr.bf16.gmra.mrb[0].mxu0 %v4180
        %v4398 = vpop.f32.mrb[0].mxu0
        %v4399 = vadd.f32 0.0, %v4398
        %v4400 = vpop.f32.mrb[0].mxu0
        %v4401 = vadd.f32 0.0, %v4400
        %v4402 = vpop.f32.mrb[0].mxu0
        %v4403 = vadd.f32 0.0, %v4402
        %v4404 = vpop.f32.mrb[0].mxu0
        %v4405 = vadd.f32 0.0, %v4404
        %4406 = vmatprep.mubr.bf16.mxu0 0
        %4407 = vmatmul.mubr.bf16.gmra.mrb[0].mxu0 %v4181
        %v4408 = vpop.f32.mrb[0].mxu0
        %v4409 = vadd.f32 0.0, %v4408
        %v4410 = vpop.f32.mrb[0].mxu0
        %v4411 = vadd.f32 0.0, %v4410
        %v4412 = vpop.f32.mrb[0].mxu0
        %v4413 = vadd.f32 0.0, %v4412
        %v4414 = vpop.f32.mrb[0].mxu0
        %v4415 = vadd.f32 0.0, %v4414
        %4416 = vmatprep.mubr.bf16.mxu0 0
        %4417 = vmatmul.mubr.bf16.gmra.mrb[0].mxu0 %v4182
        %v4418 = vpop.f32.mrb[0].mxu0
        %v4419 = vadd.f32 0.0, %v4418
        %v4420 = vpop.f32.mrb[0].mxu0
        %v4421 = vadd.f32 0.0, %v4420
        %v4422 = vpop.f32.mrb[0].mxu0
        %v4423 = vadd.f32 0.0, %v4422
        %v4424 = vpop.f32.mrb[0].mxu0
        %v4425 = vadd.f32 0.0, %v4424
        %4426 = vmatprep.mubr.bf16.mxu0 0
        %4427 = vmatmul.mubr.bf16.gmra.mrb[0].mxu0 %v4183
        %v4428 = vpop.f32.mrb[0].mxu0
        %v4429 = vadd.f32 0.0, %v4428
        %v4430 = vpop.f32.mrb[0].mxu0
        %v4431 = vadd.f32 0.0, %v4430
        %v4432 = vpop.f32.mrb[0].mxu0
        %v4433 = vadd.f32 0.0, %v4432
        %v4434 = vpop.f32.mrb[0].mxu0
        %v4435 = vadd.f32 0.0, %v4434
        %4436 = vmatprep.mubr.bf16.mxu0 0
        %4437 = vmatmul.mubr.bf16.gmra.mrb[0].mxu0 %v4184
        %v4438 = vpop.f32.mrb[0].mxu0
        %v4439 = vadd.f32 0.0, %v4438
        %v4440 = vpop.f32.mrb[0].mxu0
        %v4441 = vadd.f32 0.0, %v4440
        %v4442 = vpop.f32.mrb[0].mxu0
        %v4443 = vadd.f32 0.0, %v4442
        %v4444 = vpop.f32.mrb[0].mxu0
        %v4445 = vadd.f32 0.0, %v4444
        %4446 = vmatprep.mubr.bf16.mxu0 0
        %4447 = vmatmul.mubr.bf16.gmra.mrb[0].mxu0 %v4185
        %v4448 = vpop.f32.mrb[0].mxu0
        %v4449 = vadd.f32 0.0, %v4448
        %v4450 = vpop.f32.mrb[0].mxu0
        %v4451 = vadd.f32 0.0, %v4450
        %v4452 = vpop.f32.mrb[0].mxu0
        %v4453 = vadd.f32 0.0, %v4452
        %v4454 = vpop.f32.mrb[0].mxu0
        %v4455 = vadd.f32 0.0, %v4454
        %4456 = vmatprep.mubr.bf16.mxu0 0
        %4457 = vmatmul.mubr.bf16.gmra.mrb[0].mxu0 %v4186
        %v4458 = vpop.f32.mrb[0].mxu0
        %v4459 = vadd.f32 0.0, %v4458
        %v4460 = vpop.f32.mrb[0].mxu0
        %v4461 = vadd.f32 0.0, %v4460
        %v4462 = vpop.f32.mrb[0].mxu0
        %v4463 = vadd.f32 0.0, %v4462
        %v4464 = vpop.f32.mrb[0].mxu0
        %v4465 = vadd.f32 0.0, %v4464
        %4466 = vmatprep.mubr.bf16.mxu0 0
        %4467 = vmatmul.mubr.bf16.gmra.mrb[0].mxu0 %v4187
        %v4468 = vpop.f32.mrb[0].mxu0
        %v4469 = vadd.f32 0.0, %v4468
        %v4470 = vpop.f32.mrb[0].mxu0
        %v4471 = vadd.f32 0.0, %v4470
        %v4472 = vpop.f32.mrb[0].mxu0
        %v4473 = vadd.f32 0.0, %v4472
        %v4474 = vpop.f32.mrb[0].mxu0
        %v4475 = vadd.f32 0.0, %v4474
        %4476 = vdwg.mxu0
        %v4477 = vld [vmem:[%s6] ss:$2 sm:$0x3]
        %v4479 = vlaneseq
        %v4480 = vshrl.u32 %v4479, 7
        %v4481 = vsub.s32 0, %v4480
        %v4482 = vrot.slane %v4477, %v4481
        %v4483 = vlaneseq
        %v4484 = vshrl.u32 %v4483, 7
        %v4485 = vsub.s32 1, %v4484
        %v4486 = vrot.slane %v4477, %v4485
        %v4489 = vmul.f32 %v4319, %v4482
        %v4490 = vmul.f32 %v4321, %v4486
        %v4491 = vmul.f32 %v4323, %v4482
        %v4492 = vmul.f32 %v4325, %v4486
        %v4493 = vmul.f32 %v4329, %v4482
        %v4494 = vmul.f32 %v4331, %v4486
        %v4495 = vmul.f32 %v4333, %v4482
        %v4496 = vmul.f32 %v4335, %v4486
        %v4497 = vmul.f32 %v4339, %v4482
        %v4498 = vmul.f32 %v4341, %v4486
        %v4499 = vmul.f32 %v4343, %v4482
        %v4500 = vmul.f32 %v4345, %v4486
        %v4501 = vmul.f32 %v4349, %v4482
        %v4502 = vmul.f32 %v4351, %v4486
        %v4503 = vmul.f32 %v4353, %v4482
        %v4504 = vmul.f32 %v4355, %v4486
        %v4505 = vmul.f32 %v4359, %v4482
        %v4506 = vmul.f32 %v4361, %v4486
        %v4507 = vmul.f32 %v4363, %v4482
        %v4508 = vmul.f32 %v4365, %v4486
        %v4509 = vmul.f32 %v4369, %v4482
        %v4510 = vmul.f32 %v4371, %v4486
        %v4511 = vmul.f32 %v4373, %v4482
        %v4512 = vmul.f32 %v4375, %v4486
        %v4513 = vmul.f32 %v4379, %v4482
        %v4514 = vmul.f32 %v4381, %v4486
        %v4515 = vmul.f32 %v4383, %v4482
        %v4516 = vmul.f32 %v4385, %v4486
        %v4517 = vmul.f32 %v4389, %v4482
        %v4518 = vmul.f32 %v4391, %v4486
        %v4519 = vmul.f32 %v4393, %v4482
        %v4520 = vmul.f32 %v4395, %v4486
        %v4521 = vmul.f32 %v4399, %v4482
        %v4522 = vmul.f32 %v4401, %v4486
        %v4523 = vmul.f32 %v4403, %v4482
        %v4524 = vmul.f32 %v4405, %v4486
        %v4525 = vmul.f32 %v4409, %v4482
        %v4526 = vmul.f32 %v4411, %v4486
        %v4527 = vmul.f32 %v4413, %v4482
        %v4528 = vmul.f32 %v4415, %v4486
        %v4529 = vmul.f32 %v4419, %v4482
        %v4530 = vmul.f32 %v4421, %v4486
        %v4531 = vmul.f32 %v4423, %v4482
        %v4532 = vmul.f32 %v4425, %v4486
        %v4533 = vmul.f32 %v4429, %v4482
        %v4534 = vmul.f32 %v4431, %v4486
        %v4535 = vmul.f32 %v4433, %v4482
        %v4536 = vmul.f32 %v4435, %v4486
        %v4537 = vmul.f32 %v4439, %v4482
        %v4538 = vmul.f32 %v4441, %v4486
        %v4539 = vmul.f32 %v4443, %v4482
        %v4540 = vmul.f32 %v4445, %v4486
        %v4541 = vmul.f32 %v4449, %v4482
        %v4542 = vmul.f32 %v4451, %v4486
        %v4543 = vmul.f32 %v4453, %v4482
        %v4544 = vmul.f32 %v4455, %v4486
        %v4545 = vmul.f32 %v4459, %v4482
        %v4546 = vmul.f32 %v4461, %v4486
        %v4547 = vmul.f32 %v4463, %v4482
        %v4548 = vmul.f32 %v4465, %v4486
        %v4549 = vmul.f32 %v4469, %v4482
        %v4550 = vmul.f32 %v4471, %v4486
        %v4551 = vmul.f32 %v4473, %v4482
        %v4552 = vmul.f32 %v4475, %v4486
        %s4553 = scalar_lea.vmem %s6, 1
        %v4554 = vld [vmem:[%s4553] ss:$2 sm:$0x3]
        %v4556 = vlaneseq
        %v4557 = vshrl.u32 %v4556, 7
        %v4558 = vsub.s32 0, %v4557
        %v4559 = vrot.slane %v4554, %v4558
        %v4560 = vlaneseq
        %v4561 = vshrl.u32 %v4560, 7
        %v4562 = vsub.s32 1, %v4561
        %v4563 = vrot.slane %v4554, %v4562
        %v4566 = vadd.f32 %v4489, %v4559
        %v4567 = vadd.f32 %v4490, %v4563
        %v4568 = vadd.f32 %v4491, %v4559
        %v4569 = vadd.f32 %v4492, %v4563
        %v4570 = vadd.f32 %v4493, %v4559
        %v4571 = vadd.f32 %v4494, %v4563
        %v4572 = vadd.f32 %v4495, %v4559
        %v4573 = vadd.f32 %v4496, %v4563
        %v4574 = vadd.f32 %v4497, %v4559
        %v4575 = vadd.f32 %v4498, %v4563
        %v4576 = vadd.f32 %v4499, %v4559
        %v4577 = vadd.f32 %v4500, %v4563
        %v4578 = vadd.f32 %v4501, %v4559
        %v4579 = vadd.f32 %v4502, %v4563
        %v4580 = vadd.f32 %v4503, %v4559
        %v4581 = vadd.f32 %v4504, %v4563
        %v4582 = vadd.f32 %v4505, %v4559
        %v4583 = vadd.f32 %v4506, %v4563
        %v4584 = vadd.f32 %v4507, %v4559
        %v4585 = vadd.f32 %v4508, %v4563
        %v4586 = vadd.f32 %v4509, %v4559
        %v4587 = vadd.f32 %v4510, %v4563
        %v4588 = vadd.f32 %v4511, %v4559
        %v4589 = vadd.f32 %v4512, %v4563
        %v4590 = vadd.f32 %v4513, %v4559
        %v4591 = vadd.f32 %v4514, %v4563
        %v4592 = vadd.f32 %v4515, %v4559
        %v4593 = vadd.f32 %v4516, %v4563
        %v4594 = vadd.f32 %v4517, %v4559
        %v4595 = vadd.f32 %v4518, %v4563
        %v4596 = vadd.f32 %v4519, %v4559
        %v4597 = vadd.f32 %v4520, %v4563
        %v4598 = vadd.f32 %v4521, %v4559
        %v4599 = vadd.f32 %v4522, %v4563
        %v4600 = vadd.f32 %v4523, %v4559
        %v4601 = vadd.f32 %v4524, %v4563
        %v4602 = vadd.f32 %v4525, %v4559
        %v4603 = vadd.f32 %v4526, %v4563
        %v4604 = vadd.f32 %v4527, %v4559
        %v4605 = vadd.f32 %v4528, %v4563
        %v4606 = vadd.f32 %v4529, %v4559
        %v4607 = vadd.f32 %v4530, %v4563
        %v4608 = vadd.f32 %v4531, %v4559
        %v4609 = vadd.f32 %v4532, %v4563
        %v4610 = vadd.f32 %v4533, %v4559
        %v4611 = vadd.f32 %v4534, %v4563
        %v4612 = vadd.f32 %v4535, %v4559
        %v4613 = vadd.f32 %v4536, %v4563
        %v4614 = vadd.f32 %v4537, %v4559
        %v4615 = vadd.f32 %v4538, %v4563
        %v4616 = vadd.f32 %v4539, %v4559
        %v4617 = vadd.f32 %v4540, %v4563
        %v4618 = vadd.f32 %v4541, %v4559
        %v4619 = vadd.f32 %v4542, %v4563
        %v4620 = vadd.f32 %v4543, %v4559
        %v4621 = vadd.f32 %v4544, %v4563
        %v4622 = vadd.f32 %v4545, %v4559
        %v4623 = vadd.f32 %v4546, %v4563
        %v4624 = vadd.f32 %v4547, %v4559
        %v4625 = vadd.f32 %v4548, %v4563
        %v4626 = vadd.f32 %v4549, %v4559
        %v4627 = vadd.f32 %v4550, %v4563
        %v4628 = vadd.f32 %v4551, %v4559
        %v4629 = vadd.f32 %v4552, %v4563
        %v4630 = vld [vmem:[%s276] sm:$0xff]
        %v4631 = vld [vmem:[%s276 + $0x8] sm:$0xff]
        %v4632 = vld [vmem:[%s276 + $0x10] sm:$0xff]
        %v4633 = vld [vmem:[%s276 + $0x18] sm:$0xff]
        %v4634 = vld [vmem:[%s276 + $0x20] sm:$0xff]
        %v4635 = vld [vmem:[%s276 + $0x28] sm:$0xff]
        %v4636 = vld [vmem:[%s276 + $0x30] sm:$0xff]
        %v4637 = vld [vmem:[%s276 + $0x38] sm:$0xff]
        %v4638 = vld [vmem:[%s276 + $0x40] sm:$0xff]
        %v4639 = vld [vmem:[%s276 + $0x48] sm:$0xff]
        %v4640 = vld [vmem:[%s276 + $0x50] sm:$0xff]
        %v4641 = vld [vmem:[%s276 + $0x58] sm:$0xff]
        %v4642 = vld [vmem:[%s276 + $0x60] sm:$0xff]
        %v4643 = vld [vmem:[%s276 + $0x68] sm:$0xff]
        %v4644 = vld [vmem:[%s276 + $0x70] sm:$0xff]
        %v4645 = vld [vmem:[%s276 + $0x78] sm:$0xff]
        %v4646 = vld [vmem:[%s276 + $0x80] sm:$0xff]
        %v4647 = vld [vmem:[%s276 + $0x88] sm:$0xff]
        %v4648 = vld [vmem:[%s276 + $0x90] sm:$0xff]
        %v4649 = vld [vmem:[%s276 + $0x98] sm:$0xff]
        %v4650 = vld [vmem:[%s276 + $0xa0] sm:$0xff]
        %v4651 = vld [vmem:[%s276 + $0xa8] sm:$0xff]
        %v4652 = vld [vmem:[%s276 + $0xb0] sm:$0xff]
        %v4653 = vld [vmem:[%s276 + $0xb8] sm:$0xff]
        %v4654 = vld [vmem:[%s276 + $0xc0] sm:$0xff]
        %v4655 = vld [vmem:[%s276 + $0xc8] sm:$0xff]
        %v4656 = vld [vmem:[%s276 + $0xd0] sm:$0xff]
        %v4657 = vld [vmem:[%s276 + $0xd8] sm:$0xff]
        %v4658 = vld [vmem:[%s276 + $0xe0] sm:$0xff]
        %v4659 = vld [vmem:[%s276 + $0xe8] sm:$0xff]
        %v4660 = vld [vmem:[%s276 + $0xf0] sm:$0xff]
        %v4661 = vld [vmem:[%s276 + $0xf8] sm:$0xff]
        %v4662 = vunpack.c.l.bf16 %v4630
        %v4663 = vunpack.c.h.bf16 %v4630
        %v4664 = vunpack.c.l.bf16 %v4631
        %v4665 = vunpack.c.h.bf16 %v4631
        %v4666 = vunpack.c.l.bf16 %v4632
        %v4667 = vunpack.c.h.bf16 %v4632
        %v4668 = vunpack.c.l.bf16 %v4633
        %v4669 = vunpack.c.h.bf16 %v4633
        %v4670 = vunpack.c.l.bf16 %v4634
        %v4671 = vunpack.c.h.bf16 %v4634
        %v4672 = vunpack.c.l.bf16 %v4635
        %v4673 = vunpack.c.h.bf16 %v4635
        %v4674 = vunpack.c.l.bf16 %v4636
        %v4675 = vunpack.c.h.bf16 %v4636
        %v4676 = vunpack.c.l.bf16 %v4637
        %v4677 = vunpack.c.h.bf16 %v4637
        %v4678 = vunpack.c.l.bf16 %v4638
        %v4679 = vunpack.c.h.bf16 %v4638
        %v4680 = vunpack.c.l.bf16 %v4639
        %v4681 = vunpack.c.h.bf16 %v4639
        %v4682 = vunpack.c.l.bf16 %v4640
        %v4683 = vunpack.c.h.bf16 %v4640
        %v4684 = vunpack.c.l.bf16 %v4641
        %v4685 = vunpack.c.h.bf16 %v4641
        %v4686 = vunpack.c.l.bf16 %v4642
        %v4687 = vunpack.c.h.bf16 %v4642
        %v4688 = vunpack.c.l.bf16 %v4643
        %v4689 = vunpack.c.h.bf16 %v4643
        %v4690 = vunpack.c.l.bf16 %v4644
        %v4691 = vunpack.c.h.bf16 %v4644
        %v4692 = vunpack.c.l.bf16 %v4645
        %v4693 = vunpack.c.h.bf16 %v4645
        %v4694 = vunpack.c.l.bf16 %v4646
        %v4695 = vunpack.c.h.bf16 %v4646
        %v4696 = vunpack.c.l.bf16 %v4647
        %v4697 = vunpack.c.h.bf16 %v4647
        %v4698 = vunpack.c.l.bf16 %v4648
        %v4699 = vunpack.c.h.bf16 %v4648
        %v4700 = vunpack.c.l.bf16 %v4649
        %v4701 = vunpack.c.h.bf16 %v4649
        %v4702 = vunpack.c.l.bf16 %v4650
        %v4703 = vunpack.c.h.bf16 %v4650
        %v4704 = vunpack.c.l.bf16 %v4651
        %v4705 = vunpack.c.h.bf16 %v4651
        %v4706 = vunpack.c.l.bf16 %v4652
        %v4707 = vunpack.c.h.bf16 %v4652
        %v4708 = vunpack.c.l.bf16 %v4653
        %v4709 = vunpack.c.h.bf16 %v4653
        %v4710 = vunpack.c.l.bf16 %v4654
        %v4711 = vunpack.c.h.bf16 %v4654
        %v4712 = vunpack.c.l.bf16 %v4655
        %v4713 = vunpack.c.h.bf16 %v4655
        %v4714 = vunpack.c.l.bf16 %v4656
        %v4715 = vunpack.c.h.bf16 %v4656
        %v4716 = vunpack.c.l.bf16 %v4657
        %v4717 = vunpack.c.h.bf16 %v4657
        %v4718 = vunpack.c.l.bf16 %v4658
        %v4719 = vunpack.c.h.bf16 %v4658
        %v4720 = vunpack.c.l.bf16 %v4659
        %v4721 = vunpack.c.h.bf16 %v4659
        %v4722 = vunpack.c.l.bf16 %v4660
        %v4723 = vunpack.c.h.bf16 %v4660
        %v4724 = vunpack.c.l.bf16 %v4661
        %v4725 = vunpack.c.h.bf16 %v4661
        %v4726 = vadd.f32 %v4566, %v4662
        %v4727 = vadd.f32 %v4567, %v4663
        %v4728 = vadd.f32 %v4568, %v4664
        %v4729 = vadd.f32 %v4569, %v4665
        %v4730 = vadd.f32 %v4570, %v4666
        %v4731 = vadd.f32 %v4571, %v4667
        %v4732 = vadd.f32 %v4572, %v4668
        %v4733 = vadd.f32 %v4573, %v4669
        %v4734 = vadd.f32 %v4574, %v4670
        %v4735 = vadd.f32 %v4575, %v4671
        %v4736 = vadd.f32 %v4576, %v4672
        %v4737 = vadd.f32 %v4577, %v4673
        %v4738 = vadd.f32 %v4578, %v4674
        %v4739 = vadd.f32 %v4579, %v4675
        %v4740 = vadd.f32 %v4580, %v4676
        %v4741 = vadd.f32 %v4581, %v4677
        %v4742 = vadd.f32 %v4582, %v4678
        %v4743 = vadd.f32 %v4583, %v4679
        %v4744 = vadd.f32 %v4584, %v4680
        %v4745 = vadd.f32 %v4585, %v4681
        %v4746 = vadd.f32 %v4586, %v4682
        %v4747 = vadd.f32 %v4587, %v4683
        %v4748 = vadd.f32 %v4588, %v4684
        %v4749 = vadd.f32 %v4589, %v4685
        %v4750 = vadd.f32 %v4590, %v4686
        %v4751 = vadd.f32 %v4591, %v4687
        %v4752 = vadd.f32 %v4592, %v4688
        %v4753 = vadd.f32 %v4593, %v4689
        %v4754 = vadd.f32 %v4594, %v4690
        %v4755 = vadd.f32 %v4595, %v4691
        %v4756 = vadd.f32 %v4596, %v4692
        %v4757 = vadd.f32 %v4597, %v4693
        %v4758 = vadd.f32 %v4598, %v4694
        %v4759 = vadd.f32 %v4599, %v4695
        %v4760 = vadd.f32 %v4600, %v4696
        %v4761 = vadd.f32 %v4601, %v4697
        %v4762 = vadd.f32 %v4602, %v4698
        %v4763 = vadd.f32 %v4603, %v4699
        %v4764 = vadd.f32 %v4604, %v4700
        %v4765 = vadd.f32 %v4605, %v4701
        %v4766 = vadd.f32 %v4606, %v4702
        %v4767 = vadd.f32 %v4607, %v4703
        %v4768 = vadd.f32 %v4608, %v4704
        %v4769 = vadd.f32 %v4609, %v4705
        %v4770 = vadd.f32 %v4610, %v4706
        %v4771 = vadd.f32 %v4611, %v4707
        %v4772 = vadd.f32 %v4612, %v4708
        %v4773 = vadd.f32 %v4613, %v4709
        %v4774 = vadd.f32 %v4614, %v4710
        %v4775 = vadd.f32 %v4615, %v4711
        %v4776 = vadd.f32 %v4616, %v4712
        %v4777 = vadd.f32 %v4617, %v4713
        %v4778 = vadd.f32 %v4618, %v4714
        %v4779 = vadd.f32 %v4619, %v4715
        %v4780 = vadd.f32 %v4620, %v4716
        %v4781 = vadd.f32 %v4621, %v4717
        %v4782 = vadd.f32 %v4622, %v4718
        %v4783 = vadd.f32 %v4623, %v4719
        %v4784 = vadd.f32 %v4624, %v4720
        %v4785 = vadd.f32 %v4625, %v4721
        %v4786 = vadd.f32 %v4626, %v4722
        %v4787 = vadd.f32 %v4627, %v4723
        %v4788 = vadd.f32 %v4628, %v4724
        %v4789 = vadd.f32 %v4629, %v4725
        %v4790 = vmax.f32 %v4726, 0.0
        %v4791 = vmax.f32 %v4727, 0.0
        %v4792 = vmax.f32 %v4728, 0.0
        %v4793 = vmax.f32 %v4729, 0.0
        %v4794 = vmax.f32 %v4730, 0.0
        %v4795 = vmax.f32 %v4731, 0.0
        %v4796 = vmax.f32 %v4732, 0.0
        %v4797 = vmax.f32 %v4733, 0.0
        %v4798 = vmax.f32 %v4734, 0.0
        %v4799 = vmax.f32 %v4735, 0.0
        %v4800 = vmax.f32 %v4736, 0.0
        %v4801 = vmax.f32 %v4737, 0.0
        %v4802 = vmax.f32 %v4738, 0.0
        %v4803 = vmax.f32 %v4739, 0.0
        %v4804 = vmax.f32 %v4740, 0.0
        %v4805 = vmax.f32 %v4741, 0.0
        %v4806 = vmax.f32 %v4742, 0.0
        %v4807 = vmax.f32 %v4743, 0.0
        %v4808 = vmax.f32 %v4744, 0.0
        %v4809 = vmax.f32 %v4745, 0.0
        %v4810 = vmax.f32 %v4746, 0.0
        %v4811 = vmax.f32 %v4747, 0.0
        %v4812 = vmax.f32 %v4748, 0.0
        %v4813 = vmax.f32 %v4749, 0.0
        %v4814 = vmax.f32 %v4750, 0.0
        %v4815 = vmax.f32 %v4751, 0.0
        %v4816 = vmax.f32 %v4752, 0.0
        %v4817 = vmax.f32 %v4753, 0.0
        %v4818 = vmax.f32 %v4754, 0.0
        %v4819 = vmax.f32 %v4755, 0.0
        %v4820 = vmax.f32 %v4756, 0.0
        %v4821 = vmax.f32 %v4757, 0.0
        %v4822 = vmax.f32 %v4758, 0.0
        %v4823 = vmax.f32 %v4759, 0.0
        %v4824 = vmax.f32 %v4760, 0.0
        %v4825 = vmax.f32 %v4761, 0.0
        %v4826 = vmax.f32 %v4762, 0.0
        %v4827 = vmax.f32 %v4763, 0.0
        %v4828 = vmax.f32 %v4764, 0.0
        %v4829 = vmax.f32 %v4765, 0.0
        %v4830 = vmax.f32 %v4766, 0.0
        %v4831 = vmax.f32 %v4767, 0.0
        %v4832 = vmax.f32 %v4768, 0.0
        %v4833 = vmax.f32 %v4769, 0.0
        %v4834 = vmax.f32 %v4770, 0.0
        %v4835 = vmax.f32 %v4771, 0.0
        %v4836 = vmax.f32 %v4772, 0.0
        %v4837 = vmax.f32 %v4773, 0.0
        %v4838 = vmax.f32 %v4774, 0.0
        %v4839 = vmax.f32 %v4775, 0.0
        %v4840 = vmax.f32 %v4776, 0.0
        %v4841 = vmax.f32 %v4777, 0.0
        %v4842 = vmax.f32 %v4778, 0.0
        %v4843 = vmax.f32 %v4779, 0.0
        %v4844 = vmax.f32 %v4780, 0.0
        %v4845 = vmax.f32 %v4781, 0.0
        %v4846 = vmax.f32 %v4782, 0.0
        %v4847 = vmax.f32 %v4783, 0.0
        %v4848 = vmax.f32 %v4784, 0.0
        %v4849 = vmax.f32 %v4785, 0.0
        %v4850 = vmax.f32 %v4786, 0.0
        %v4851 = vmax.f32 %v4787, 0.0
        %v4852 = vmax.f32 %v4788, 0.0
        %v4853 = vmax.f32 %v4789, 0.0
        %v4854 = vpack.c.bf16 %v4792, %v4790
        %v4855 = vpack.c.bf16 %v4793, %v4791
        %v4856 = vpack.c.bf16 %v4796, %v4794
        %v4857 = vpack.c.bf16 %v4797, %v4795
        %v4858 = vpack.c.bf16 %v4800, %v4798
        %v4859 = vpack.c.bf16 %v4801, %v4799
        %v4860 = vpack.c.bf16 %v4804, %v4802
        %v4861 = vpack.c.bf16 %v4805, %v4803
        %v4862 = vpack.c.bf16 %v4808, %v4806
        %v4863 = vpack.c.bf16 %v4809, %v4807
        %v4864 = vpack.c.bf16 %v4812, %v4810
        %v4865 = vpack.c.bf16 %v4813, %v4811
        %v4866 = vpack.c.bf16 %v4816, %v4814
        %v4867 = vpack.c.bf16 %v4817, %v4815
        %v4868 = vpack.c.bf16 %v4820, %v4818
        %v4869 = vpack.c.bf16 %v4821, %v4819
        %v4870 = vpack.c.bf16 %v4824, %v4822
        %v4871 = vpack.c.bf16 %v4825, %v4823
        %v4872 = vpack.c.bf16 %v4828, %v4826
        %v4873 = vpack.c.bf16 %v4829, %v4827
        %v4874 = vpack.c.bf16 %v4832, %v4830
        %v4875 = vpack.c.bf16 %v4833, %v4831
        %v4876 = vpack.c.bf16 %v4836, %v4834
        %v4877 = vpack.c.bf16 %v4837, %v4835
        %v4878 = vpack.c.bf16 %v4840, %v4838
        %v4879 = vpack.c.bf16 %v4841, %v4839
        %v4880 = vpack.c.bf16 %v4844, %v4842
        %v4881 = vpack.c.bf16 %v4845, %v4843
        %v4882 = vpack.c.bf16 %v4848, %v4846
        %v4883 = vpack.c.bf16 %v4849, %v4847
        %v4884 = vpack.c.bf16 %v4852, %v4850
        %v4885 = vpack.c.bf16 %v4853, %v4851
        %v4918 = vunpack.c.l.b16 %v4854
        %v4919 = vunpack.c.l.b16 %v4855
        %v4920 = vunpack.c.h.b16 %v4854
        %v4921 = vunpack.c.h.b16 %v4855
        %v4922 = vunpack.c.l.b16 %v4856
        %v4923 = vunpack.c.l.b16 %v4857
        %v4924 = vunpack.c.h.b16 %v4856
        %v4925 = vunpack.c.h.b16 %v4857
        %v4926 = vunpack.c.l.b16 %v4858
        %v4927 = vunpack.c.l.b16 %v4859
        %v4928 = vunpack.c.h.b16 %v4858
        %v4929 = vunpack.c.h.b16 %v4859
        %v4930 = vunpack.c.l.b16 %v4860
        %v4931 = vunpack.c.l.b16 %v4861
        %v4932 = vunpack.c.h.b16 %v4860
        %v4933 = vunpack.c.h.b16 %v4861
        %v4934 = vunpack.c.l.b16 %v4862
        %v4935 = vunpack.c.l.b16 %v4863
        %v4936 = vunpack.c.h.b16 %v4862
        %v4937 = vunpack.c.h.b16 %v4863
        %v4938 = vunpack.c.l.b16 %v4864
        %v4939 = vunpack.c.l.b16 %v4865
        %v4940 = vunpack.c.h.b16 %v4864
        %v4941 = vunpack.c.h.b16 %v4865
        %v4942 = vunpack.c.l.b16 %v4866
        %v4943 = vunpack.c.l.b16 %v4867
        %v4944 = vunpack.c.h.b16 %v4866
        %v4945 = vunpack.c.h.b16 %v4867
        %v4946 = vunpack.c.l.b16 %v4868
        %v4947 = vunpack.c.l.b16 %v4869
        %v4948 = vunpack.c.h.b16 %v4868
        %v4949 = vunpack.c.h.b16 %v4869
        %v4950 = vunpack.c.l.b16 %v4870
        %v4951 = vunpack.c.l.b16 %v4871
        %v4952 = vunpack.c.h.b16 %v4870
        %v4953 = vunpack.c.h.b16 %v4871
        %v4954 = vunpack.c.l.b16 %v4872
        %v4955 = vunpack.c.l.b16 %v4873
        %v4956 = vunpack.c.h.b16 %v4872
        %v4957 = vunpack.c.h.b16 %v4873
        %v4958 = vunpack.c.l.b16 %v4874
        %v4959 = vunpack.c.l.b16 %v4875
        %v4960 = vunpack.c.h.b16 %v4874
        %v4961 = vunpack.c.h.b16 %v4875
        %v4962 = vunpack.c.l.b16 %v4876
        %v4963 = vunpack.c.l.b16 %v4877
        %v4964 = vunpack.c.h.b16 %v4876
        %v4965 = vunpack.c.h.b16 %v4877
        %v4966 = vunpack.c.l.b16 %v4878
        %v4967 = vunpack.c.l.b16 %v4879
        %v4968 = vunpack.c.h.b16 %v4878
        %v4969 = vunpack.c.h.b16 %v4879
        %v4970 = vunpack.c.l.b16 %v4880
        %v4971 = vunpack.c.l.b16 %v4881
        %v4972 = vunpack.c.h.b16 %v4880
        %v4973 = vunpack.c.h.b16 %v4881
        %v4974 = vunpack.c.l.b16 %v4882
        %v4975 = vunpack.c.l.b16 %v4883
        %v4976 = vunpack.c.h.b16 %v4882
        %v4977 = vunpack.c.h.b16 %v4883
        %v4978 = vunpack.c.l.b16 %v4884
        %v4979 = vunpack.c.l.b16 %v4885
        %v4980 = vunpack.c.h.b16 %v4884
        %v4981 = vunpack.c.h.b16 %v4885
        %v4982 = vpack.c.b16 %v4919, %v4918
        %v4983 = vpack.c.b16 %v4921, %v4920
        %v4984 = vpack.c.b16 %v4923, %v4922
        %v4985 = vpack.c.b16 %v4925, %v4924
        %v4986 = vpack.c.b16 %v4927, %v4926
        %v4987 = vpack.c.b16 %v4929, %v4928
        %v4988 = vpack.c.b16 %v4931, %v4930
        %v4989 = vpack.c.b16 %v4933, %v4932
        %v4990 = vpack.c.b16 %v4935, %v4934
        %v4991 = vpack.c.b16 %v4937, %v4936
        %v4992 = vpack.c.b16 %v4939, %v4938
        %v4993 = vpack.c.b16 %v4941, %v4940
        %v4994 = vpack.c.b16 %v4943, %v4942
        %v4995 = vpack.c.b16 %v4945, %v4944
        %v4996 = vpack.c.b16 %v4947, %v4946
        %v4997 = vpack.c.b16 %v4949, %v4948
        %v4998 = vpack.c.b16 %v4951, %v4950
        %v4999 = vpack.c.b16 %v4953, %v4952
        %v5000 = vpack.c.b16 %v4955, %v4954
        %v5001 = vpack.c.b16 %v4957, %v4956
        %v5002 = vpack.c.b16 %v4959, %v4958
        %v5003 = vpack.c.b16 %v4961, %v4960
        %v5004 = vpack.c.b16 %v4963, %v4962
        %v5005 = vpack.c.b16 %v4965, %v4964
        %v5006 = vpack.c.b16 %v4967, %v4966
        %v5007 = vpack.c.b16 %v4969, %v4968
        %v5008 = vpack.c.b16 %v4971, %v4970
        %v5009 = vpack.c.b16 %v4973, %v4972
        %v5010 = vpack.c.b16 %v4975, %v4974
        %v5011 = vpack.c.b16 %v4977, %v4976
        %v5012 = vpack.c.b16 %v4979, %v4978
        %v5013 = vpack.c.b16 %v4981, %v4980
        %5046 = vst [vmem:[%s271] sm:$0xff] %v4982
        %5047 = vst [vmem:[%s271 + $0x8] sm:$0xff] %v4983
        %5048 = vst [vmem:[%s271 + $0x10] sm:$0xff] %v4984
        %5049 = vst [vmem:[%s271 + $0x18] sm:$0xff] %v4985
        %5050 = vst [vmem:[%s271 + $0x20] sm:$0xff] %v4986
        %5051 = vst [vmem:[%s271 + $0x28] sm:$0xff] %v4987
        %5052 = vst [vmem:[%s271 + $0x30] sm:$0xff] %v4988
        %5053 = vst [vmem:[%s271 + $0x38] sm:$0xff] %v4989
        %5054 = vst [vmem:[%s271 + $0x40] sm:$0xff] %v4990
        %5055 = vst [vmem:[%s271 + $0x48] sm:$0xff] %v4991
        %5056 = vst [vmem:[%s271 + $0x50] sm:$0xff] %v4992
        %5057 = vst [vmem:[%s271 + $0x58] sm:$0xff] %v4993
        %5058 = vst [vmem:[%s271 + $0x60] sm:$0xff] %v4994
        %5059 = vst [vmem:[%s271 + $0x68] sm:$0xff] %v4995
        %5060 = vst [vmem:[%s271 + $0x70] sm:$0xff] %v4996
        %5061 = vst [vmem:[%s271 + $0x78] sm:$0xff] %v4997
        %5062 = vst [vmem:[%s271 + $0x80] sm:$0xff] %v4998
        %5063 = vst [vmem:[%s271 + $0x88] sm:$0xff] %v4999
        %5064 = vst [vmem:[%s271 + $0x90] sm:$0xff] %v5000
        %5065 = vst [vmem:[%s271 + $0x98] sm:$0xff] %v5001
        %5066 = vst [vmem:[%s271 + $0xa0] sm:$0xff] %v5002
        %5067 = vst [vmem:[%s271 + $0xa8] sm:$0xff] %v5003
        %5068 = vst [vmem:[%s271 + $0xb0] sm:$0xff] %v5004
        %5069 = vst [vmem:[%s271 + $0xb8] sm:$0xff] %v5005
        %5070 = vst [vmem:[%s271 + $0xc0] sm:$0xff] %v5006
        %5071 = vst [vmem:[%s271 + $0xc8] sm:$0xff] %v5007
        %5072 = vst [vmem:[%s271 + $0xd0] sm:$0xff] %v5008
        %5073 = vst [vmem:[%s271 + $0xd8] sm:$0xff] %v5009
        %5074 = vst [vmem:[%s271 + $0xe0] sm:$0xff] %v5010
        %5075 = vst [vmem:[%s271 + $0xe8] sm:$0xff] %v5011
        %5076 = vst [vmem:[%s271 + $0xf0] sm:$0xff] %v5012
        %5077 = vst [vmem:[%s271 + $0xf8] sm:$0xff] %v5013
        %s5078 = sand.u32 %s181, 1
        %s5079 = scalar_lea.sflag [#allocation5], %s5078
        %s5080 = sand.u32 %s181, 1
        %s5081 = smul.addr %s5080, 256
        %s5082 = scalar_lea.vmem [#allocation4], %s5081
        // Predicated region
        $region49: #{bottleneck_forward_nchw.1} parent=47 // pred_check
          %p5083 = pneg %p191
        $region50: #{bottleneck_forward_nchw.1} parent=47 // pred_check_branch
          %5085 = sbr.rel (%p5083) target = $region52
        $region51: #{bottleneck_forward_nchw.1} parent=47 // pred_region
          %s5087 = ssub.s32 4096, 4096
          %5088 = vsyncadd %s5079, %s5087
          %s5089 = smul.addr %s21, 64
          %s5090 = smul.addr %s5089, 64
          %s5091 = scalar_lea.hbm %s7, %s5090
          %s5092 = sshll.u32 %s5082, 4
          %s5093 = int_to_ptr.vmem [resolvable:$true] %s5092
          %5098 = dma.vmem_to_hbm [thread:$0]  %s5093, 4096, %s5091, %s5079, 128, 128, 8
        $region52: #{bottleneck_forward_nchw.1} parent=47 // pred_fallthru
          _
      $region48: #{bottleneck_forward_nchw.1} parent=5 // pred_fallthru
        _
      %p5099 = scmp.le.s32.totalorder 2, %s16
      // Predicated region
      $region53: #{bottleneck_forward_nchw.1} parent=5 // pred_check
        %p5100 = pneg %p5099
      $region54: #{bottleneck_forward_nchw.1} parent=5 // pred_check_branch
        %5102 = sbr.rel (%p5100) target = $region56
      $region55: #{bottleneck_forward_nchw.1} parent=5 // pred_region
        %s5103 = ssub.s32 %s16, 2
        // Predicated region
        $region57: #{bottleneck_forward_nchw.1} parent=55 // pred_check
          %p5104 = pneg %p197
        $region58: #{bottleneck_forward_nchw.1} parent=55 // pred_check_branch
          %5106 = sbr.rel (%p5104) target = $region60
        $region59: #{bottleneck_forward_nchw.1} parent=55 // pred_region
          %s5107 = sand.u32 %s182, 1
          %s5108 = scalar_lea.sflag [#allocation5], %s5107
          %s5109 = sand.u32 %s182, 1
          %s5110 = smul.addr %s5109, 256
          %s5111 = scalar_lea.vmem [#allocation4], %s5110
          %5112 = dma.done %s5108, 4096
        $region60: #{bottleneck_forward_nchw.1} parent=55 // pred_fallthru
          _
      $region56: #{bottleneck_forward_nchw.1} parent=5 // pred_fallthru
        _
    $region6: #{bottleneck_forward_nchw.1} parent=1 // loop_footer
      %s20 = sadd.s32 1, %s16
    $region7: #{bottleneck_forward_nchw.1} parent=1 // loop_footer_branch
      %15 = sbr.rel target = $region3
    $region8: #{bottleneck_forward_nchw.1} parent=1 // loop_exit
      _
    %5113 = vsyncpa [#allocation5], 1
    %s5114 = scalar_lea.sflag [#allocation5], 1
    %5115 = vsyncpa %s5114, 1

</llo_original>
